<compile_context>
chip_gen: v6e
topology: v6e:2x2x1
jax: 0.10.0
libtpu: 0.0.40
codegen_flags: <defaults>
</compile_context>

<pallas_src>
import functools

import jax
import jax.numpy as jnp
import numpy as np
from jax import lax
from jax.experimental import pallas as pl
from jax.experimental.pallas import tpu as pltpu


# ---------------------------------------------------------------------------
# Parameter initialization (mirrors glorot_orthogonal shapes)
# ---------------------------------------------------------------------------
def _orthogonal(key, shape):
    n_rows, n_cols = shape
    big, small = max(n_rows, n_cols), min(n_rows, n_cols)
    a = jax.random.normal(key, (big, small), dtype=jnp.float32)
    q, r = jnp.linalg.qr(a)
    q = q * jnp.sign(jnp.diagonal(r))[None, :]
    if n_rows < n_cols:
        q = q.T
    return q[:n_rows, :n_cols]


def glorot_orthogonal(key, shape, scale=2.0):
    """shape is (out_features, in_features), torch Linear weight convention."""
    w = _orthogonal(key, shape)
    s = scale / ((shape[-2] + shape[-1]) * jnp.var(w))
    return w * jnp.sqrt(s)


# ---------------------------------------------------------------------------
# Pallas kernel
# ---------------------------------------------------------------------------
def _gt_kernel(num_edges, inv_sqrt_d, edge_tile,
               # scalar-prefetch (SMEM)
               row_ref, col_ref,
               # inputs
               node_ref, edge_ref, bn_ref, hsum_ref,
               wq_ref, wk_ref, wv_ref, we_ref,
               won_ref, bon_ref, woe_ref, boe_ref,
               w1n_ref, w2n_ref, w1e_ref, w2e_ref,
               # outputs
               node_out_ref, edge_out_ref,
               # scratch
               q_s, k_s, v_s, wv_acc, z_acc,
               kr_b, qc_b, vr_b, ct_b, ax_b):
    f32 = jnp.float32
    bf16 = jnp.bfloat16
    step = pl.program_id(0)
    nsteps = pl.num_programs(0)
    bn = bn_ref[...]                                     # (8, C)

    # ---- step 0: BatchNorm1(nodes) + Q/K/V projections, init accumulators ----
    @pl.when(step == 0)
    def _():
        x = node_ref[...]                                # (N, C) f32
        xn = (x * bn[0:1, :] + bn[1:2, :]).astype(bf16)
        q_s[...] = jnp.dot(xn, wq_ref[...], preferred_element_type=f32)
        k_s[...] = jnp.dot(xn, wk_ref[...], preferred_element_type=f32)
        v_s[...] = jnp.dot(xn, wv_ref[...], preferred_element_type=f32)
        wv_acc[...] = jnp.zeros_like(wv_acc)
        z_acc[...] = jnp.zeros_like(z_acc)

    base = step * edge_tile

    # ---- index-based gather: K[row], Q[col], V[row] for this edge tile ----
    def gather(i, carry):
        r = row_ref[base + i]
        c = col_ref[base + i]
        kr_b[pl.ds(i, 1), :] = k_s[pl.ds(r, 1), :]
        qc_b[pl.ds(i, 1), :] = q_s[pl.ds(c, 1), :]
        vr_b[pl.ds(i, 1), :] = v_s[pl.ds(r, 1), :]
        return carry

    lax.fori_loop(0, edge_tile, gather, 0)

    # ---- per-edge attention math (f32 elementwise, bf16 MXU) ----
    e = edge_ref[...]                                    # (TE, C) f32
    en = (e * bn[2:3, :] + bn[3:4, :]).astype(bf16)
    ep = jnp.dot(en, we_ref[...], preferred_element_type=f32)
    alpha = jnp.clip(kr_b[...] * qc_b[...] * inv_sqrt_d, -5.0, 5.0) * ep  # == e_out

    # edge branch is purely per-edge: O_edge + residual + BN2 + MLP + residual
    edge1 = e + jnp.dot(alpha.astype(bf16), woe_ref[...],
                        preferred_element_type=f32) + boe_ref[...]
    e2 = (edge1 * bn[6:7, :] + bn[7:8, :]).astype(bf16)
    eh = jax.nn.silu(jnp.dot(e2, w1e_ref[...], preferred_element_type=f32))
    edge_out_ref[...] = edge1 + jnp.dot(eh.astype(bf16), w2e_ref[...],
                                        preferred_element_type=f32)

    # per-head sum broadcast back over head channels via block-diag ones (f32)
    asum = jnp.clip(jnp.dot(alpha, hsum_ref[...], preferred_element_type=f32),
                    -5.0, 5.0)
    ax = jnp.exp(asum)                                   # (TE, C)
    eid = base + lax.broadcasted_iota(jnp.int32, (edge_tile, 1), 0)
    ax = ax * (eid < num_edges).astype(f32)              # zero out padded edges
    ct_b[...] = vr_b[...] * ax                           # scatter sources
    ax_b[...] = ax

    # ---- index-based scatter-add into node accumulators ----
    def scatter(i, carry):
        c = col_ref[base + i]
        wv_acc[pl.ds(c, 1), :] = wv_acc[pl.ds(c, 1), :] + ct_b[pl.ds(i, 1), :]
        z_acc[pl.ds(c, 1), :] = z_acc[pl.ds(c, 1), :] + ax_b[pl.ds(i, 1), :]
        return carry

    lax.fori_loop(0, edge_tile, scatter, 0)

    # ---- last step: finalize node branch ----
    @pl.when(step == nsteps - 1)
    def _():
        x = node_ref[...]
        h_out = wv_acc[...] * pl.reciprocal(z_acc[...] + 1e-6, approx=True)
        node1 = x + jnp.dot(h_out.astype(bf16), won_ref[...],
                            preferred_element_type=f32) + bon_ref[...]
        n2 = (node1 * bn[4:5, :] + bn[5:6, :]).astype(bf16)
        nh = jax.nn.silu(jnp.dot(n2, w1n_ref[...], preferred_element_type=f32))
        node_out_ref[...] = node1 + jnp.dot(nh.astype(bf16), w2n_ref[...],
                                            preferred_element_type=f32)


# ---------------------------------------------------------------------------
# Wrapper
# ---------------------------------------------------------------------------
def graph_transformer_module(node_feats, edge_feats, edge_index, params,
                             num_heads=4, edge_tile=128):
    N, C = node_feats.shape
    E = edge_feats.shape[0]
    d_head = C // num_heads

    n_pad = ((N + 7) // 8) * 8
    e_pad = ((E + edge_tile - 1) // edge_tile) * edge_tile
    n_blocks = e_pad // edge_tile

    node_p = jnp.zeros((n_pad, C), jnp.float32).at[:N].set(node_feats)
    edge_p = jnp.zeros((e_pad, C), jnp.float32).at[:E].set(edge_feats)
    row_p = jnp.zeros((e_pad,), jnp.int32).at[:E].set(edge_index[0].astype(jnp.int32))
    col_p = jnp.zeros((e_pad,), jnp.int32).at[:E].set(edge_index[1].astype(jnp.int32))

    # block-diagonal "same head" matrix (C, C): one f32 matmul produces the
    # per-head sum already broadcast over that head's channels.
    hid = jnp.arange(C) // d_head
    hsum = (hid[:, None] == hid[None, :]).astype(jnp.float32)

    bf16 = jnp.bfloat16
    inputs = (
        node_p, edge_p, params["bn"], hsum,
        params["wq"].astype(bf16), params["wk"].astype(bf16),
        params["wv"].astype(bf16), params["we"].astype(bf16),
        params["won"].astype(bf16), params["bon"],
        params["woe"].astype(bf16), params["boe"],
        params["w1n"].astype(bf16), params["w2n"].astype(bf16),
        params["w1e"].astype(bf16), params["w2e"].astype(bf16),
    )

    def resident(a):
        return pl.BlockSpec(a.shape, lambda i, row, col: (0,) * a.ndim)

    in_specs = [
        resident(node_p),
        pl.BlockSpec((edge_tile, C), lambda i, row, col: (i, 0)),
    ] + [resident(a) for a in inputs[2:]]

    out_specs = [
        pl.BlockSpec((n_pad, C), lambda i, row, col: (0, 0)),      # node (resident)
        pl.BlockSpec((edge_tile, C), lambda i, row, col: (i, 0)),  # edge tile
    ]
    out_shape = (jax.ShapeDtypeStruct((n_pad, C), jnp.float32),
                 jax.ShapeDtypeStruct((e_pad, C), jnp.float32))

    scratch = [
        pltpu.VMEM((n_pad, C), jnp.float32),      # Q
        pltpu.VMEM((n_pad, C), jnp.float32),      # K
        pltpu.VMEM((n_pad, C), jnp.float32),      # V
        pltpu.VMEM((n_pad, C), jnp.float32),      # wV accumulator
        pltpu.VMEM((n_pad, C), jnp.float32),      # z accumulator
        pltpu.VMEM((edge_tile, C), jnp.float32),  # K[row]
        pltpu.VMEM((edge_tile, C), jnp.float32),  # Q[col]
        pltpu.VMEM((edge_tile, C), jnp.float32),  # V[row]
        pltpu.VMEM((edge_tile, C), jnp.float32),  # V[row] * alphax
        pltpu.VMEM((edge_tile, C), jnp.float32),  # alphax
    ]

    flops = (2 * C * C * (4 * n_pad + 3 * e_pad)      # QKV/E/O projections + head sum
             + 8 * C * C * (n_pad + e_pad))           # the two MLPs
    cost = pl.CostEstimate(
        flops=int(flops),
        transcendentals=int(e_pad * C + 2 * C * (n_pad + e_pad) + n_pad * C),
        bytes_accessed=int(sum(int(np.prod(a.shape)) * a.dtype.itemsize
                               for a in inputs) + 4 * C * (n_pad + e_pad)),
    )

    kernel = functools.partial(_gt_kernel, int(E),
                               float(1.0 / np.sqrt(d_head)), int(edge_tile))

    node_out, edge_out = pl.pallas_call(
        kernel,
        out_shape=out_shape,
        grid_spec=pltpu.PrefetchScalarGridSpec(
            num_scalar_prefetch=2,
            grid=(n_blocks,),
            in_specs=in_specs,
            out_specs=out_specs,
            scratch_shapes=scratch,
        ),
        compiler_params=pltpu.CompilerParams(
            # edge axis is a scatter reduction into the node accumulators
            dimension_semantics=("arbitrary",),
            vmem_limit_bytes=32 * 1024 * 1024,
        ),
        cost_estimate=cost,
    )(row_p, col_p, *inputs)

    return node_out[:N], edge_out[:E]


# ---------------------------------------------------------------------------
# Pure-JAX reference (same mixed-precision matmuls) for a sanity check
# ---------------------------------------------------------------------------
def _bdot(a, b):
    return jnp.dot(a.astype(jnp.bfloat16), b.astype(jnp.bfloat16),
                   preferred_element_type=jnp.float32)


def reference(node_feats, edge_feats, edge_index, params, num_heads=4):
    N, C = node_feats.shape
    H = num_heads
    d = C // H
    bn = params["bn"]
    xn = node_feats * bn[0] + bn[1]
    en = edge_feats * bn[2] + bn[3]
    q = _bdot(xn, params["wq"]).reshape(-1, H, d)
    k = _bdot(xn, params["wk"]).reshape(-1, H, d)
    v = _bdot(xn, params["wv"]).reshape(-1, H, d)
    ep = _bdot(en, params["we"]).reshape(-1, H, d)
    row, col = edge_index[0], edge_index[1]
    alpha = jnp.clip(k[row] * q[col] / np.sqrt(d), -5.0, 5.0) * ep
    e_out = alpha.reshape(-1, C)
    alphax = jnp.exp(jnp.clip(alpha.sum(-1, keepdims=True), -5.0, 5.0))
    wV = jnp.zeros((N, H, d), jnp.float32).at[col].add(v[row] * alphax)
    z = jnp.zeros((N, H, 1), jnp.float32).at[col].add(alphax)
    h_out = (wV / (z + 1e-6)).reshape(N, C)
    node1 = node_feats + _bdot(h_out, params["won"]) + params["bon"][0]
    edge1 = edge_feats + _bdot(e_out, params["woe"]) + params["boe"][0]
    n2 = node1 * bn[4] + bn[5]
    e2 = edge1 * bn[6] + bn[7]
    node2 = node1 + _bdot(jax.nn.silu(_bdot(n2, params["w1n"])), params["w2n"])
    edge2 = edge1 + _bdot(jax.nn.silu(_bdot(e2, params["w1e"])), params["w2e"])
    return node2, edge2


# ---------------------------------------------------------------------------
if __name__ == "__main__":
    key = jax.random.PRNGKey(0)
    C = 32            # num_hidden_channels
    H = 4             # num_attention_heads
    N = 64            # nodes
    E = 200           # edges (pads to 256 -> 2 edge tiles of 128)

    keys = jax.random.split(key, 20)

    # weights stored pre-transposed: (in, out) so the kernel does x @ W
    def lin_w(k, out_f, in_f):
        return glorot_orthogonal(k, (out_f, in_f)).T.astype(jnp.float32)

    params = {
        "wq": lin_w(keys[0], C, C),
        "wk": lin_w(keys[1], C, C),
        "wv": lin_w(keys[2], C, C),
        "we": lin_w(keys[3], C, C),
        "won": lin_w(keys[4], C, C),
        "bon": jnp.zeros((1, C), jnp.float32),
        "woe": lin_w(keys[5], C, C),
        "boe": jnp.zeros((1, C), jnp.float32),
        "w1n": lin_w(keys[6], 2 * C, C),
        "w2n": lin_w(keys[7], C, 2 * C),
        "w1e": lin_w(keys[8], 2 * C, C),
        "w2e": lin_w(keys[9], C, 2 * C),
    }
    # BatchNorm (eval) scale/shift rows: [n1_s, n1_b, e1_s, e1_b, n2_s, n2_b, e2_s, e2_b]
    eps = 1e-5
    bn_scale = jnp.full((C,), 1.0 / np.sqrt(1.0 + eps), jnp.float32)
    bn_shift = jnp.zeros((C,), jnp.float32)
    params["bn"] = jnp.stack([bn_scale, bn_shift] * 4, axis=0)   # (8, C)

    node_feats = jax.random.normal(keys[10], (N, C), jnp.float32)
    edge_feats = jax.random.normal(keys[11], (E, C), jnp.float32)
    row = jax.random.randint(keys[12], (E,), 0, N, jnp.int32)
    col = jax.random.randint(keys[13], (E,), 0, N, jnp.int32)
    edge_index = jnp.stack([row, col], axis=0)

    node_out, edge_out = graph_transformer_module(
        node_feats, edge_feats, edge_index, params, num_heads=H)
    jax.block_until_ready((node_out, edge_out))

    ref_n, ref_e = reference(node_feats, edge_feats, edge_index, params,
                             num_heads=H)
    np.testing.assert_allclose(np.asarray(node_out), np.asarray(ref_n),
                               rtol=2e-2, atol=2e-2)
    np.testing.assert_allclose(np.asarray(edge_out), np.asarray(ref_e),
                               rtol=2e-2, atol=2e-2)
    print("KERNEL_OK")
</pallas_src>

<mosaic_0001>
module attributes {stable_mosaic.version = 11 : i64} {
  func.func @_gt_kernel(%arg0: i32, %arg1: memref<256xi32, #tpu.memory_space<smem>>, %arg2: memref<256xi32, #tpu.memory_space<smem>>, %arg3: memref<64x32xf32, #tpu.memory_space<vmem>>, %arg4: memref<128x32xf32, #tpu.memory_space<vmem>>, %arg5: memref<8x32xf32, #tpu.memory_space<vmem>>, %arg6: memref<32x32xf32, #tpu.memory_space<vmem>>, %arg7: memref<32x32xbf16, #tpu.memory_space<vmem>>, %arg8: memref<32x32xbf16, #tpu.memory_space<vmem>>, %arg9: memref<32x32xbf16, #tpu.memory_space<vmem>>, %arg10: memref<32x32xbf16, #tpu.memory_space<vmem>>, %arg11: memref<32x32xbf16, #tpu.memory_space<vmem>>, %arg12: memref<1x32xf32, #tpu.memory_space<vmem>>, %arg13: memref<32x32xbf16, #tpu.memory_space<vmem>>, %arg14: memref<1x32xf32, #tpu.memory_space<vmem>>, %arg15: memref<32x64xbf16, #tpu.memory_space<vmem>>, %arg16: memref<64x32xbf16, #tpu.memory_space<vmem>>, %arg17: memref<32x64xbf16, #tpu.memory_space<vmem>>, %arg18: memref<64x32xbf16, #tpu.memory_space<vmem>>, %arg19: memref<64x32xf32, #tpu.memory_space<vmem>>, %arg20: memref<128x32xf32, #tpu.memory_space<vmem>>, %arg21: memref<64x32xf32, #tpu.memory_space<vmem>>, %arg22: memref<64x32xf32, #tpu.memory_space<vmem>>, %arg23: memref<64x32xf32, #tpu.memory_space<vmem>>, %arg24: memref<64x32xf32, #tpu.memory_space<vmem>>, %arg25: memref<64x32xf32, #tpu.memory_space<vmem>>, %arg26: memref<128x32xf32, #tpu.memory_space<vmem>>, %arg27: memref<128x32xf32, #tpu.memory_space<vmem>>, %arg28: memref<128x32xf32, #tpu.memory_space<vmem>>, %arg29: memref<128x32xf32, #tpu.memory_space<vmem>>, %arg30: memref<128x32xf32, #tpu.memory_space<vmem>>) attributes {dimension_semantics = [#tpu.dimension_semantics<arbitrary>], iteration_bounds = array<i64: 2>, scalar_prefetch = 2 : i64, scratch_operands = 10 : i64, tpu.core_type = #tpu.core_type<tc>, window_params = [{pipeline_mode = #tpu.pipeline_mode<synchronous>, transform_indices = @transform_0, window_bounds = array<i64: 64, 32>}, {transform_indices = @transform_1, window_bounds = array<i64: 128, 32>}, {pipeline_mode = #tpu.pipeline_mode<synchronous>, transform_indices = @transform_2, window_bounds = array<i64: 8, 32>}, {pipeline_mode = #tpu.pipeline_mode<synchronous>, transform_indices = @transform_3, window_bounds = array<i64: 32, 32>}, {pipeline_mode = #tpu.pipeline_mode<synchronous>, transform_indices = @transform_4, window_bounds = array<i64: 32, 32>}, {pipeline_mode = #tpu.pipeline_mode<synchronous>, transform_indices = @transform_5, window_bounds = array<i64: 32, 32>}, {pipeline_mode = #tpu.pipeline_mode<synchronous>, transform_indices = @transform_6, window_bounds = array<i64: 32, 32>}, {pipeline_mode = #tpu.pipeline_mode<synchronous>, transform_indices = @transform_7, window_bounds = array<i64: 32, 32>}, {pipeline_mode = #tpu.pipeline_mode<synchronous>, transform_indices = @transform_8, window_bounds = array<i64: 32, 32>}, {pipeline_mode = #tpu.pipeline_mode<synchronous>, transform_indices = @transform_9, window_bounds = array<i64: 1, 32>}, {pipeline_mode = #tpu.pipeline_mode<synchronous>, transform_indices = @transform_10, window_bounds = array<i64: 32, 32>}, {pipeline_mode = #tpu.pipeline_mode<synchronous>, transform_indices = @transform_11, window_bounds = array<i64: 1, 32>}, {pipeline_mode = #tpu.pipeline_mode<synchronous>, transform_indices = @transform_12, window_bounds = array<i64: 32, 64>}, {pipeline_mode = #tpu.pipeline_mode<synchronous>, transform_indices = @transform_13, window_bounds = array<i64: 64, 32>}, {pipeline_mode = #tpu.pipeline_mode<synchronous>, transform_indices = @transform_14, window_bounds = array<i64: 32, 64>}, {pipeline_mode = #tpu.pipeline_mode<synchronous>, transform_indices = @transform_15, window_bounds = array<i64: 64, 32>}, {pipeline_mode = #tpu.pipeline_mode<synchronous>, transform_indices = @transform_16, window_bounds = array<i64: 64, 32>}, {transform_indices = @transform_17, window_bounds = array<i64: 128, 32>}]} {
    %c0 = arith.constant 0 : index
    %c0_0 = arith.constant 0 : index
    %0 = vector.load %arg5[%c0, %c0_0] : memref<8x32xf32, #tpu.memory_space<vmem>>, vector<8x32xf32>
    %c0_i32 = arith.constant 0 : i32
    %1 = arith.cmpi eq, %arg0, %c0_i32 : i32
    %2 = arith.extui %1 : i1 to i32
    %c0_i32_1 = arith.constant 0 : i32
    %3 = arith.cmpi ne, %2, %c0_i32_1 : i32
    scf.if %3 {
      %c0_47 = arith.constant 0 : index
      %c0_48 = arith.constant 0 : index
      %77 = vector.load %arg3[%c0_47, %c0_48] : memref<64x32xf32, #tpu.memory_space<vmem>>, vector<64x32xf32>
      %78 = vector.extract_strided_slice %0 {offsets = [0, 0], sizes = [1, 32], strides = [1, 1]} : vector<8x32xf32> to vector<1x32xf32>
      %79 = vector.broadcast %78 : vector<1x32xf32> to vector<64x32xf32>
      %80 = arith.mulf %77, %79 : vector<64x32xf32>
      %81 = vector.extract_strided_slice %0 {offsets = [1, 0], sizes = [1, 32], strides = [1, 1]} : vector<8x32xf32> to vector<1x32xf32>
      %82 = vector.broadcast %81 : vector<1x32xf32> to vector<64x32xf32>
      %83 = arith.addf %80, %82 : vector<64x32xf32>
      %84 = arith.truncf %83 : vector<64x32xf32> to vector<64x32xbf16>
      %c0_49 = arith.constant 0 : index
      %c0_50 = arith.constant 0 : index
      %85 = vector.load %arg7[%c0_49, %c0_50] : memref<32x32xbf16, #tpu.memory_space<vmem>>, vector<32x32xbf16>
      %cst_51 = arith.constant dense<0.000000e+00> : vector<64x32xf32>
      %86 = tpu.matmul %84, %85, %cst_51 {dimension_numbers = #tpu.dot_dimension_numbers<[1], [0], [0], [1], [0, 0, 1, 1], [], []>} : vector<64x32xbf16>, vector<32x32xbf16>, vector<64x32xf32> -> vector<64x32xf32>
      %c0_52 = arith.constant 0 : index
      %c0_53 = arith.constant 0 : index
      %87 = vector.load %arg21[%c0_52, %c0_53] : memref<64x32xf32, #tpu.memory_space<vmem>>, vector<64x32xf32>
      tpu.vector_store %arg21[%c0_52, %c0_53], %86 {strides = array<i32>} : memref<64x32xf32, #tpu.memory_space<vmem>>, vector<64x32xf32>,
      %c0_54 = arith.constant 0 : index
      %c0_55 = arith.constant 0 : index
      %88 = vector.load %arg8[%c0_54, %c0_55] : memref<32x32xbf16, #tpu.memory_space<vmem>>, vector<32x32xbf16>
      %cst_56 = arith.constant dense<0.000000e+00> : vector<64x32xf32>
      %89 = tpu.matmul %84, %88, %cst_56 {dimension_numbers = #tpu.dot_dimension_numbers<[1], [0], [0], [1], [0, 0, 1, 1], [], []>} : vector<64x32xbf16>, vector<32x32xbf16>, vector<64x32xf32> -> vector<64x32xf32>
      %c0_57 = arith.constant 0 : index
      %c0_58 = arith.constant 0 : index
      %90 = vector.load %arg22[%c0_57, %c0_58] : memref<64x32xf32, #tpu.memory_space<vmem>>, vector<64x32xf32>
      tpu.vector_store %arg22[%c0_57, %c0_58], %89 {strides = array<i32>} : memref<64x32xf32, #tpu.memory_space<vmem>>, vector<64x32xf32>,
      %c0_59 = arith.constant 0 : index
      %c0_60 = arith.constant 0 : index
      %91 = vector.load %arg9[%c0_59, %c0_60] : memref<32x32xbf16, #tpu.memory_space<vmem>>, vector<32x32xbf16>
      %cst_61 = arith.constant dense<0.000000e+00> : vector<64x32xf32>
      %92 = tpu.matmul %84, %91, %cst_61 {dimension_numbers = #tpu.dot_dimension_numbers<[1], [0], [0], [1], [0, 0, 1, 1], [], []>} : vector<64x32xbf16>, vector<32x32xbf16>, vector<64x32xf32> -> vector<64x32xf32>
      %c0_62 = arith.constant 0 : index
      %c0_63 = arith.constant 0 : index
      %93 = vector.load %arg23[%c0_62, %c0_63] : memref<64x32xf32, #tpu.memory_space<vmem>>, vector<64x32xf32>
      tpu.vector_store %arg23[%c0_62, %c0_63], %92 {strides = array<i32>} : memref<64x32xf32, #tpu.memory_space<vmem>>, vector<64x32xf32>,
      %cst_64 = arith.constant 0.000000e+00 : f32
      %94 = vector.broadcast %cst_64 : f32 to vector<64x32xf32>
      %c0_65 = arith.constant 0 : index
      %c0_66 = arith.constant 0 : index
      %95 = vector.load %arg24[%c0_65, %c0_66] : memref<64x32xf32, #tpu.memory_space<vmem>>, vector<64x32xf32>
      tpu.vector_store %arg24[%c0_65, %c0_66], %94 {strides = array<i32>} : memref<64x32xf32, #tpu.memory_space<vmem>>, vector<64x32xf32>,
      %cst_67 = arith.constant 0.000000e+00 : f32
      %96 = vector.broadcast %cst_67 : f32 to vector<64x32xf32>
      %c0_68 = arith.constant 0 : index
      %c0_69 = arith.constant 0 : index
      %97 = vector.load %arg25[%c0_68, %c0_69] : memref<64x32xf32, #tpu.memory_space<vmem>>, vector<64x32xf32>
      tpu.vector_store %arg25[%c0_68, %c0_69], %96 {strides = array<i32>} : memref<64x32xf32, #tpu.memory_space<vmem>>, vector<64x32xf32>,
    } else {
    }
    %c128_i32 = arith.constant 128 : i32
    %4 = arith.muli %arg0, %c128_i32 : i32
    %c0_i32_2 = arith.constant 0 : i32
    %c128_i32_3 = arith.constant 128 : i32
    %5 = arith.addi %c0_i32_2, %c128_i32_3 : i32
    %c1_i32 = arith.constant 1 : i32
    scf.for %arg31 = %c0_i32_2 to %5 step %c1_i32  : i32 {
      %77 = arith.addi %4, %arg31 : i32
      %78 = arith.index_cast %77 : i32 to index
      %79 = memref.load %arg1[%78] : memref<256xi32, #tpu.memory_space<smem>>
      %80 = arith.addi %4, %arg31 : i32
      %81 = arith.index_cast %80 : i32 to index
      %82 = memref.load %arg2[%81] : memref<256xi32, #tpu.memory_space<smem>>
      %83 = arith.index_cast %79 : i32 to index
      %c0_47 = arith.constant 0 : index
      %84 = vector.load %arg22[%83, %c0_47] : memref<64x32xf32, #tpu.memory_space<vmem>>, vector<1x32xf32>
      %85 = arith.index_cast %arg31 : i32 to index
      %c0_48 = arith.constant 0 : index
      %86 = vector.load %arg26[%85, %c0_48] : memref<128x32xf32, #tpu.memory_space<vmem>>, vector<1x32xf32>
      tpu.vector_store %arg26[%85, %c0_48], %84 {strides = array<i32>} : memref<128x32xf32, #tpu.memory_space<vmem>>, vector<1x32xf32>,
      %87 = arith.index_cast %82 : i32 to index
      %c0_49 = arith.constant 0 : index
      %88 = vector.load %arg21[%87, %c0_49] : memref<64x32xf32, #tpu.memory_space<vmem>>, vector<1x32xf32>
      %89 = arith.index_cast %arg31 : i32 to index
      %c0_50 = arith.constant 0 : index
      %90 = vector.load %arg27[%89, %c0_50] : memref<128x32xf32, #tpu.memory_space<vmem>>, vector<1x32xf32>
      tpu.vector_store %arg27[%89, %c0_50], %88 {strides = array<i32>} : memref<128x32xf32, #tpu.memory_space<vmem>>, vector<1x32xf32>,
      %91 = arith.index_cast %79 : i32 to index
      %c0_51 = arith.constant 0 : index
      %92 = vector.load %arg23[%91, %c0_51] : memref<64x32xf32, #tpu.memory_space<vmem>>, vector<1x32xf32>
      %93 = arith.index_cast %arg31 : i32 to index
      %c0_52 = arith.constant 0 : index
      %94 = vector.load %arg28[%93, %c0_52] : memref<128x32xf32, #tpu.memory_space<vmem>>, vector<1x32xf32>
      tpu.vector_store %arg28[%93, %c0_52], %92 {strides = array<i32>} : memref<128x32xf32, #tpu.memory_space<vmem>>, vector<1x32xf32>,
    }
    %c128_i32_4 = arith.constant 128 : i32
    %c0_5 = arith.constant 0 : index
    %c0_6 = arith.constant 0 : index
    %6 = vector.load %arg4[%c0_5, %c0_6] : memref<128x32xf32, #tpu.memory_space<vmem>>, vector<128x32xf32>
    %7 = vector.extract_strided_slice %0 {offsets = [2, 0], sizes = [1, 32], strides = [1, 1]} : vector<8x32xf32> to vector<1x32xf32>
    %8 = vector.broadcast %7 : vector<1x32xf32> to vector<128x32xf32>
    %9 = arith.mulf %6, %8 : vector<128x32xf32>
    %10 = vector.extract_strided_slice %0 {offsets = [3, 0], sizes = [1, 32], strides = [1, 1]} : vector<8x32xf32> to vector<1x32xf32>
    %11 = vector.broadcast %10 : vector<1x32xf32> to vector<128x32xf32>
    %12 = arith.addf %9, %11 : vector<128x32xf32>
    %13 = arith.truncf %12 : vector<128x32xf32> to vector<128x32xbf16>
    %c0_7 = arith.constant 0 : index
    %c0_8 = arith.constant 0 : index
    %14 = vector.load %arg10[%c0_7, %c0_8] : memref<32x32xbf16, #tpu.memory_space<vmem>>, vector<32x32xbf16>
    %cst = arith.constant dense<0.000000e+00> : vector<128x32xf32>
    %15 = tpu.matmul %13, %14, %cst {dimension_numbers = #tpu.dot_dimension_numbers<[1], [0], [0], [1], [0, 0, 1, 1], [], []>} : vector<128x32xbf16>, vector<32x32xbf16>, vector<128x32xf32> -> vector<128x32xf32>
    %c0_9 = arith.constant 0 : index
    %c0_10 = arith.constant 0 : index
    %16 = vector.load %arg26[%c0_9, %c0_10] : memref<128x32xf32, #tpu.memory_space<vmem>>, vector<128x32xf32>
    %c0_11 = arith.constant 0 : index
    %c0_12 = arith.constant 0 : index
    %17 = vector.load %arg27[%c0_11, %c0_12] : memref<128x32xf32, #tpu.memory_space<vmem>>, vector<128x32xf32>
    %18 = arith.mulf %16, %17 : vector<128x32xf32>
    %cst_13 = arith.constant 0.353553385 : f32
    %19 = vector.broadcast %cst_13 : f32 to vector<128x32xf32>
    %20 = arith.mulf %18, %19 : vector<128x32xf32>
    %cst_14 = arith.constant -5.000000e+00 : f32
    %cst_15 = arith.constant 5.000000e+00 : f32
    %21 = vector.broadcast %cst_14 : f32 to vector<128x32xf32>
    %22 = arith.maximumf %21, %20 : vector<128x32xf32>
    %23 = vector.broadcast %cst_15 : f32 to vector<128x32xf32>
    %24 = arith.minimumf %23, %22 : vector<128x32xf32>
    %25 = arith.mulf %24, %15 : vector<128x32xf32>
    %26 = arith.truncf %25 : vector<128x32xf32> to vector<128x32xbf16>
    %c0_16 = arith.constant 0 : index
    %c0_17 = arith.constant 0 : index
    %27 = vector.load %arg13[%c0_16, %c0_17] : memref<32x32xbf16, #tpu.memory_space<vmem>>, vector<32x32xbf16>
    %cst_18 = arith.constant dense<0.000000e+00> : vector<128x32xf32>
    %28 = tpu.matmul %26, %27, %cst_18 {dimension_numbers = #tpu.dot_dimension_numbers<[1], [0], [0], [1], [0, 0, 1, 1], [], []>} : vector<128x32xbf16>, vector<32x32xbf16>, vector<128x32xf32> -> vector<128x32xf32>
    %29 = arith.addf %6, %28 : vector<128x32xf32>
    %c0_19 = arith.constant 0 : index
    %c0_20 = arith.constant 0 : index
    %30 = vector.load %arg14[%c0_19, %c0_20] : memref<1x32xf32, #tpu.memory_space<vmem>>, vector<1x32xf32>
    %31 = vector.broadcast %30 : vector<1x32xf32> to vector<128x32xf32>
    %32 = arith.addf %29, %31 : vector<128x32xf32>
    %33 = vector.extract_strided_slice %0 {offsets = [6, 0], sizes = [1, 32], strides = [1, 1]} : vector<8x32xf32> to vector<1x32xf32>
    %34 = vector.broadcast %33 : vector<1x32xf32> to vector<128x32xf32>
    %35 = arith.mulf %32, %34 : vector<128x32xf32>
    %36 = vector.extract_strided_slice %0 {offsets = [7, 0], sizes = [1, 32], strides = [1, 1]} : vector<8x32xf32> to vector<1x32xf32>
    %37 = vector.broadcast %36 : vector<1x32xf32> to vector<128x32xf32>
    %38 = arith.addf %35, %37 : vector<128x32xf32>
    %39 = arith.truncf %38 : vector<128x32xf32> to vector<128x32xbf16>
    %c0_21 = arith.constant 0 : index
    %c0_22 = arith.constant 0 : index
    %40 = vector.load %arg17[%c0_21, %c0_22] : memref<32x64xbf16, #tpu.memory_space<vmem>>, vector<32x64xbf16>
    %cst_23 = arith.constant dense<0.000000e+00> : vector<128x64xf32>
    %41 = tpu.matmul %39, %40, %cst_23 {dimension_numbers = #tpu.dot_dimension_numbers<[1], [0], [0], [1], [0, 0, 1, 1], [], []>} : vector<128x32xbf16>, vector<32x64xbf16>, vector<128x64xf32> -> vector<128x64xf32>
    %42 = arith.negf %41 : vector<128x64xf32>
    %43 = math.exp %42 : vector<128x64xf32>
    %cst_24 = arith.constant 1.000000e+00 : f32
    %44 = vector.broadcast %cst_24 : f32 to vector<128x64xf32>
    %45 = arith.addf %44, %43 : vector<128x64xf32>
    %46 = arith.divf %44, %45 : vector<128x64xf32>
    %47 = arith.mulf %41, %46 : vector<128x64xf32>
    %48 = arith.truncf %47 : vector<128x64xf32> to vector<128x64xbf16>
    %c0_25 = arith.constant 0 : index
    %c0_26 = arith.constant 0 : index
    %49 = vector.load %arg18[%c0_25, %c0_26] : memref<64x32xbf16, #tpu.memory_space<vmem>>, vector<64x32xbf16>
    %cst_27 = arith.constant dense<0.000000e+00> : vector<128x32xf32>
    %50 = tpu.matmul %48, %49, %cst_27 {dimension_numbers = #tpu.dot_dimension_numbers<[1], [0], [0], [1], [0, 0, 1, 1], [], []>} : vector<128x64xbf16>, vector<64x32xbf16>, vector<128x32xf32> -> vector<128x32xf32>
    %51 = arith.addf %32, %50 : vector<128x32xf32>
    %c0_28 = arith.constant 0 : index
    %c0_29 = arith.constant 0 : index
    %52 = vector.load %arg20[%c0_28, %c0_29] : memref<128x32xf32, #tpu.memory_space<vmem>>, vector<128x32xf32>
    tpu.vector_store %arg20[%c0_28, %c0_29], %51 {strides = array<i32>} : memref<128x32xf32, #tpu.memory_space<vmem>>, vector<128x32xf32>,
    %c0_30 = arith.constant 0 : index
    %c0_31 = arith.constant 0 : index
    %53 = vector.load %arg6[%c0_30, %c0_31] : memref<32x32xf32, #tpu.memory_space<vmem>>, vector<32x32xf32>
    %cst_32 = arith.constant dense<0.000000e+00> : vector<128x32xf32>
    %54 = tpu.matmul %25, %53, %cst_32 {dimension_numbers = #tpu.dot_dimension_numbers<[1], [0], [0], [1], [0, 0, 1, 1], [], []>} : vector<128x32xf32>, vector<32x32xf32>, vector<128x32xf32> -> vector<128x32xf32>
    %cst_33 = arith.constant -5.000000e+00 : f32
    %cst_34 = arith.constant 5.000000e+00 : f32
    %55 = vector.broadcast %cst_33 : f32 to vector<128x32xf32>
    %56 = arith.maximumf %55, %54 : vector<128x32xf32>
    %57 = vector.broadcast %cst_34 : f32 to vector<128x32xf32>
    %58 = arith.minimumf %57, %56 : vector<128x32xf32>
    %59 = math.exp %58 : vector<128x32xf32>
    %60 = tpu.iota {dimensions = array<i32: 0>} : vector<128x1xi32>
    %61 = vector.broadcast %4 : i32 to vector<128x1xi32>
    %62 = arith.addi %61, %60 : vector<128x1xi32>
    %c200_i32 = arith.constant 200 : i32
    %63 = vector.broadcast %c200_i32 : i32 to vector<128x1xi32>
    %64 = arith.cmpi slt, %62, %63 : vector<128x1xi32>
    %65 = arith.extui %64 : vector<128x1xi1> to vector<128x1xi32>
    %66 = arith.sitofp %65 : vector<128x1xi32> to vector<128x1xf32>
    %67 = vector.broadcast %66 : vector<128x1xf32> to vector<128x32xf32>
    %68 = arith.mulf %59, %67 : vector<128x32xf32>
    %c0_35 = arith.constant 0 : index
    %c0_36 = arith.constant 0 : index
    %69 = vector.load %arg28[%c0_35, %c0_36] : memref<128x32xf32, #tpu.memory_space<vmem>>, vector<128x32xf32>
    %70 = arith.mulf %69, %68 : vector<128x32xf32>
    %c0_37 = arith.constant 0 : index
    %c0_38 = arith.constant 0 : index
    %71 = vector.load %arg29[%c0_37, %c0_38] : memref<128x32xf32, #tpu.memory_space<vmem>>, vector<128x32xf32>
    tpu.vector_store %arg29[%c0_37, %c0_38], %70 {strides = array<i32>} : memref<128x32xf32, #tpu.memory_space<vmem>>, vector<128x32xf32>,
    %c0_39 = arith.constant 0 : index
    %c0_40 = arith.constant 0 : index
    %72 = vector.load %arg30[%c0_39, %c0_40] : memref<128x32xf32, #tpu.memory_space<vmem>>, vector<128x32xf32>
    tpu.vector_store %arg30[%c0_39, %c0_40], %68 {strides = array<i32>} : memref<128x32xf32, #tpu.memory_space<vmem>>, vector<128x32xf32>,
    %c0_i32_41 = arith.constant 0 : i32
    %c128_i32_42 = arith.constant 128 : i32
    %73 = arith.addi %c0_i32_41, %c128_i32_42 : i32
    %c1_i32_43 = arith.constant 1 : i32
    scf.for %arg31 = %c0_i32_41 to %73 step %c1_i32_43  : i32 {
      %77 = arith.addi %4, %arg31 : i32
      %78 = arith.index_cast %77 : i32 to index
      %79 = memref.load %arg2[%78] : memref<256xi32, #tpu.memory_space<smem>>
      %80 = arith.index_cast %79 : i32 to index
      %c0_47 = arith.constant 0 : index
      %81 = vector.load %arg24[%80, %c0_47] : memref<64x32xf32, #tpu.memory_space<vmem>>, vector<1x32xf32>
      %82 = arith.index_cast %arg31 : i32 to index
      %c0_48 = arith.constant 0 : index
      %83 = vector.load %arg29[%82, %c0_48] : memref<128x32xf32, #tpu.memory_space<vmem>>, vector<1x32xf32>
      %84 = arith.addf %81, %83 : vector<1x32xf32>
      %85 = arith.index_cast %79 : i32 to index
      %c0_49 = arith.constant 0 : index
      %86 = vector.load %arg24[%85, %c0_49] : memref<64x32xf32, #tpu.memory_space<vmem>>, vector<1x32xf32>
      tpu.vector_store %arg24[%85, %c0_49], %84 {strides = array<i32>} : memref<64x32xf32, #tpu.memory_space<vmem>>, vector<1x32xf32>,
      %87 = arith.index_cast %79 : i32 to index
      %c0_50 = arith.constant 0 : index
      %88 = vector.load %arg25[%87, %c0_50] : memref<64x32xf32, #tpu.memory_space<vmem>>, vector<1x32xf32>
      %89 = arith.index_cast %arg31 : i32 to index
      %c0_51 = arith.constant 0 : index
      %90 = vector.load %arg30[%89, %c0_51] : memref<128x32xf32, #tpu.memory_space<vmem>>, vector<1x32xf32>
      %91 = arith.addf %88, %90 : vector<1x32xf32>
      %92 = arith.index_cast %79 : i32 to index
      %c0_52 = arith.constant 0 : index
      %93 = vector.load %arg25[%92, %c0_52] : memref<64x32xf32, #tpu.memory_space<vmem>>, vector<1x32xf32>
      tpu.vector_store %arg25[%92, %c0_52], %91 {strides = array<i32>} : memref<64x32xf32, #tpu.memory_space<vmem>>, vector<1x32xf32>,
    }
    %c128_i32_44 = arith.constant 128 : i32
    %c1_i32_45 = arith.constant 1 : i32
    %74 = arith.cmpi eq, %arg0, %c1_i32_45 : i32
    %75 = arith.extui %74 : i1 to i32
    %c0_i32_46 = arith.constant 0 : i32
    %76 = arith.cmpi ne, %75, %c0_i32_46 : i32
    scf.if %76 {
      %c0_47 = arith.constant 0 : index
      %c0_48 = arith.constant 0 : index
      %77 = vector.load %arg3[%c0_47, %c0_48] : memref<64x32xf32, #tpu.memory_space<vmem>>, vector<64x32xf32>
      %c0_49 = arith.constant 0 : index
      %c0_50 = arith.constant 0 : index
      %78 = vector.load %arg24[%c0_49, %c0_50] : memref<64x32xf32, #tpu.memory_space<vmem>>, vector<64x32xf32>
      %c0_51 = arith.constant 0 : index
      %c0_52 = arith.constant 0 : index
      %79 = vector.load %arg25[%c0_51, %c0_52] : memref<64x32xf32, #tpu.memory_space<vmem>>, vector<64x32xf32>
      %cst_53 = arith.constant 9.99999997E-7 : f32
      %80 = vector.broadcast %cst_53 : f32 to vector<64x32xf32>
      %81 = arith.addf %79, %80 : vector<64x32xf32>
      %82 = tpu.reciprocal %81 {approx = true} : vector<64x32xf32> -> vector<64x32xf32>
      %83 = arith.mulf %78, %82 : vector<64x32xf32>
      %84 = arith.truncf %83 : vector<64x32xf32> to vector<64x32xbf16>
      %c0_54 = arith.constant 0 : index
      %c0_55 = arith.constant 0 : index
      %85 = vector.load %arg11[%c0_54, %c0_55] : memref<32x32xbf16, #tpu.memory_space<vmem>>, vector<32x32xbf16>
      %cst_56 = arith.constant dense<0.000000e+00> : vector<64x32xf32>
      %86 = tpu.matmul %84, %85, %cst_56 {dimension_numbers = #tpu.dot_dimension_numbers<[1], [0], [0], [1], [0, 0, 1, 1], [], []>} : vector<64x32xbf16>, vector<32x32xbf16>, vector<64x32xf32> -> vector<64x32xf32>
      %87 = arith.addf %77, %86 : vector<64x32xf32>
      %c0_57 = arith.constant 0 : index
      %c0_58 = arith.constant 0 : index
      %88 = vector.load %arg12[%c0_57, %c0_58] : memref<1x32xf32, #tpu.memory_space<vmem>>, vector<1x32xf32>
      %89 = vector.broadcast %88 : vector<1x32xf32> to vector<64x32xf32>
      %90 = arith.addf %87, %89 : vector<64x32xf32>
      %91 = vector.extract_strided_slice %0 {offsets = [4, 0], sizes = [1, 32], strides = [1, 1]} : vector<8x32xf32> to vector<1x32xf32>
      %92 = vector.broadcast %91 : vector<1x32xf32> to vector<64x32xf32>
      %93 = arith.mulf %90, %92 : vector<64x32xf32>
      %94 = vector.extract_strided_slice %0 {offsets = [5, 0], sizes = [1, 32], strides = [1, 1]} : vector<8x32xf32> to vector<1x32xf32>
      %95 = vector.broadcast %94 : vector<1x32xf32> to vector<64x32xf32>
      %96 = arith.addf %93, %95 : vector<64x32xf32>
      %97 = arith.truncf %96 : vector<64x32xf32> to vector<64x32xbf16>
      %c0_59 = arith.constant 0 : index
      %c0_60 = arith.constant 0 : index
      %98 = vector.load %arg15[%c0_59, %c0_60] : memref<32x64xbf16, #tpu.memory_space<vmem>>, vector<32x64xbf16>
      %cst_61 = arith.constant dense<0.000000e+00> : vector<64x64xf32>
      %99 = tpu.matmul %97, %98, %cst_61 {dimension_numbers = #tpu.dot_dimension_numbers<[1], [0], [0], [1], [0, 0, 1, 1], [], []>} : vector<64x32xbf16>, vector<32x64xbf16>, vector<64x64xf32> -> vector<64x64xf32>
      %100 = arith.negf %99 : vector<64x64xf32>
      %101 = math.exp %100 : vector<64x64xf32>
      %cst_62 = arith.constant 1.000000e+00 : f32
      %102 = vector.broadcast %cst_62 : f32 to vector<64x64xf32>
      %103 = arith.addf %102, %101 : vector<64x64xf32>
      %104 = arith.divf %102, %103 : vector<64x64xf32>
      %105 = arith.mulf %99, %104 : vector<64x64xf32>
      %106 = arith.truncf %105 : vector<64x64xf32> to vector<64x64xbf16>
      %c0_63 = arith.constant 0 : index
      %c0_64 = arith.constant 0 : index
      %107 = vector.load %arg16[%c0_63, %c0_64] : memref<64x32xbf16, #tpu.memory_space<vmem>>, vector<64x32xbf16>
      %cst_65 = arith.constant dense<0.000000e+00> : vector<64x32xf32>
      %108 = tpu.matmul %106, %107, %cst_65 {dimension_numbers = #tpu.dot_dimension_numbers<[1], [0], [0], [1], [0, 0, 1, 1], [], []>} : vector<64x64xbf16>, vector<64x32xbf16>, vector<64x32xf32> -> vector<64x32xf32>
      %109 = arith.addf %90, %108 : vector<64x32xf32>
      %c0_66 = arith.constant 0 : index
      %c0_67 = arith.constant 0 : index
      %110 = vector.load %arg19[%c0_66, %c0_67] : memref<64x32xf32, #tpu.memory_space<vmem>>, vector<64x32xf32>
      tpu.vector_store %arg19[%c0_66, %c0_67], %109 {strides = array<i32>} : memref<64x32xf32, #tpu.memory_space<vmem>>, vector<64x32xf32>,
    } else {
    }
    return
  }
  func.func @transform_0(%arg0: i32, %arg1: memref<256xi32, #tpu.memory_space<smem>>, %arg2: memref<256xi32, #tpu.memory_space<smem>>) -> (i32, i32) {
    %c0_i32 = arith.constant 0 : i32
    %c0_i32_0 = arith.constant 0 : i32
    %c0_i32_1 = arith.constant 0 : i32
    return %c0_i32, %c0_i32_0 : i32, i32
  }
  func.func @transform_1(%arg0: i32, %arg1: memref<256xi32, #tpu.memory_space<smem>>, %arg2: memref<256xi32, #tpu.memory_space<smem>>) -> (i32, i32) {
    %c0_i32 = arith.constant 0 : i32
    %c0_i32_0 = arith.constant 0 : i32
    return %arg0, %c0_i32 : i32, i32
  }
  func.func @transform_2(%arg0: i32, %arg1: memref<256xi32, #tpu.memory_space<smem>>, %arg2: memref<256xi32, #tpu.memory_space<smem>>) -> (i32, i32) {
    %c0_i32 = arith.constant 0 : i32
    %c0_i32_0 = arith.constant 0 : i32
    %c0_i32_1 = arith.constant 0 : i32
    return %c0_i32, %c0_i32_0 : i32, i32
  }
  func.func @transform_3(%arg0: i32, %arg1: memref<256xi32, #tpu.memory_space<smem>>, %arg2: memref<256xi32, #tpu.memory_space<smem>>) -> (i32, i32) {
    %c0_i32 = arith.constant 0 : i32
    %c0_i32_0 = arith.constant 0 : i32
    %c0_i32_1 = arith.constant 0 : i32
    return %c0_i32, %c0_i32_0 : i32, i32
  }
  func.func @transform_4(%arg0: i32, %arg1: memref<256xi32, #tpu.memory_space<smem>>, %arg2: memref<256xi32, #tpu.memory_space<smem>>) -> (i32, i32) {
    %c0_i32 = arith.constant 0 : i32
    %c0_i32_0 = arith.constant 0 : i32
    %c0_i32_1 = arith.constant 0 : i32
    return %c0_i32, %c0_i32_0 : i32, i32
  }
  func.func @transform_5(%arg0: i32, %arg1: memref<256xi32, #tpu.memory_space<smem>>, %arg2: memref<256xi32, #tpu.memory_space<smem>>) -> (i32, i32) {
    %c0_i32 = arith.constant 0 : i32
    %c0_i32_0 = arith.constant 0 : i32
    %c0_i32_1 = arith.constant 0 : i32
    return %c0_i32, %c0_i32_0 : i32, i32
  }
  func.func @transform_6(%arg0: i32, %arg1: memref<256xi32, #tpu.memory_space<smem>>, %arg2: memref<256xi32, #tpu.memory_space<smem>>) -> (i32, i32) {
    %c0_i32 = arith.constant 0 : i32
    %c0_i32_0 = arith.constant 0 : i32
    %c0_i32_1 = arith.constant 0 : i32
    return %c0_i32, %c0_i32_0 : i32, i32
  }
  func.func @transform_7(%arg0: i32, %arg1: memref<256xi32, #tpu.memory_space<smem>>, %arg2: memref<256xi32, #tpu.memory_space<smem>>) -> (i32, i32) {
    %c0_i32 = arith.constant 0 : i32
    %c0_i32_0 = arith.constant 0 : i32
    %c0_i32_1 = arith.constant 0 : i32
    return %c0_i32, %c0_i32_0 : i32, i32
  }
  func.func @transform_8(%arg0: i32, %arg1: memref<256xi32, #tpu.memory_space<smem>>, %arg2: memref<256xi32, #tpu.memory_space<smem>>) -> (i32, i32) {
    %c0_i32 = arith.constant 0 : i32
    %c0_i32_0 = arith.constant 0 : i32
    %c0_i32_1 = arith.constant 0 : i32
    return %c0_i32, %c0_i32_0 : i32, i32
  }
  func.func @transform_9(%arg0: i32, %arg1: memref<256xi32, #tpu.memory_space<smem>>, %arg2: memref<256xi32, #tpu.memory_space<smem>>) -> (i32, i32) {
    %c0_i32 = arith.constant 0 : i32
    %c0_i32_0 = arith.constant 0 : i32
    %c0_i32_1 = arith.constant 0 : i32
    return %c0_i32, %c0_i32_0 : i32, i32
  }
  func.func @transform_10(%arg0: i32, %arg1: memref<256xi32, #tpu.memory_space<smem>>, %arg2: memref<256xi32, #tpu.memory_space<smem>>) -> (i32, i32) {
    %c0_i32 = arith.constant 0 : i32
    %c0_i32_0 = arith.constant 0 : i32
    %c0_i32_1 = arith.constant 0 : i32
    return %c0_i32, %c0_i32_0 : i32, i32
  }
  func.func @transform_11(%arg0: i32, %arg1: memref<256xi32, #tpu.memory_space<smem>>, %arg2: memref<256xi32, #tpu.memory_space<smem>>) -> (i32, i32) {
    %c0_i32 = arith.constant 0 : i32
    %c0_i32_0 = arith.constant 0 : i32
    %c0_i32_1 = arith.constant 0 : i32
    return %c0_i32, %c0_i32_0 : i32, i32
  }
  func.func @transform_12(%arg0: i32, %arg1: memref<256xi32, #tpu.memory_space<smem>>, %arg2: memref<256xi32, #tpu.memory_space<smem>>) -> (i32, i32) {
    %c0_i32 = arith.constant 0 : i32
    %c0_i32_0 = arith.constant 0 : i32
    %c0_i32_1 = arith.constant 0 : i32
    return %c0_i32, %c0_i32_0 : i32, i32
  }
  func.func @transform_13(%arg0: i32, %arg1: memref<256xi32, #tpu.memory_space<smem>>, %arg2: memref<256xi32, #tpu.memory_space<smem>>) -> (i32, i32) {
    %c0_i32 = arith.constant 0 : i32
    %c0_i32_0 = arith.constant 0 : i32
    %c0_i32_1 = arith.constant 0 : i32
    return %c0_i32, %c0_i32_0 : i32, i32
  }
  func.func @transform_14(%arg0: i32, %arg1: memref<256xi32, #tpu.memory_space<smem>>, %arg2: memref<256xi32, #tpu.memory_space<smem>>) -> (i32, i32) {
    %c0_i32 = arith.constant 0 : i32
    %c0_i32_0 = arith.constant 0 : i32
    %c0_i32_1 = arith.constant 0 : i32
    return %c0_i32, %c0_i32_0 : i32, i32
  }
  func.func @transform_15(%arg0: i32, %arg1: memref<256xi32, #tpu.memory_space<smem>>, %arg2: memref<256xi32, #tpu.memory_space<smem>>) -> (i32, i32) {
    %c0_i32 = arith.constant 0 : i32
    %c0_i32_0 = arith.constant 0 : i32
    %c0_i32_1 = arith.constant 0 : i32
    return %c0_i32, %c0_i32_0 : i32, i32
  }
  func.func @transform_16(%arg0: i32, %arg1: memref<256xi32, #tpu.memory_space<smem>>, %arg2: memref<256xi32, #tpu.memory_space<smem>>) -> (i32, i32) {
    %c0_i32 = arith.constant 0 : i32
    %c0_i32_0 = arith.constant 0 : i32
    %c0_i32_1 = arith.constant 0 : i32
    return %c0_i32, %c0_i32_0 : i32, i32
  }
  func.func @transform_17(%arg0: i32, %arg1: memref<256xi32, #tpu.memory_space<smem>>, %arg2: memref<256xi32, #tpu.memory_space<smem>>) -> (i32, i32) {
    %c0_i32 = arith.constant 0 : i32
    %c0_i32_0 = arith.constant 0 : i32
    return %arg0, %c0_i32 : i32, i32
  }
}

</mosaic_0001>

<llo_original>
// kernel: tpu_custom_call.1
$region0: #{tpu_custom_call.1}
  #allocation0 [shape = 'u32[]', space=smem, size = 0x4, offset = 0x4, fixed_abs, tag = 'smem constant byte address 0x4 - core index']
  #allocation1 [shape = 'u32[144,128]{1,0:T(1,128)}', space=vmem, size = 0x12000, scoped, tag = 'internal scratch']
  #allocation2 [shape = 'f32[64,32]{1,0:T(8,128)}', space=vmem, size = 0x8000, scoped, tag = 'scratch operand']
  #allocation3 [shape = 'f32[64,32]{1,0:T(8,128)}', space=vmem, size = 0x8000, scoped, tag = 'scratch operand']
  #allocation4 [shape = 'f32[64,32]{1,0:T(8,128)}', space=vmem, size = 0x8000, scoped, tag = 'scratch operand']
  #allocation5 [shape = 'f32[64,32]{1,0:T(8,128)}', space=vmem, size = 0x8000, scoped, tag = 'scratch operand']
  #allocation6 [shape = 'f32[64,32]{1,0:T(8,128)}', space=vmem, size = 0x8000, scoped, tag = 'scratch operand']
  #allocation7 [shape = 'f32[128,32]{1,0:T(8,128)}', space=vmem, size = 0x10000, scoped, tag = 'scratch operand']
  #allocation8 [shape = 'f32[128,32]{1,0:T(8,128)}', space=vmem, size = 0x10000, scoped, tag = 'scratch operand']
  #allocation9 [shape = 'f32[128,32]{1,0:T(8,128)}', space=vmem, size = 0x10000, scoped, tag = 'scratch operand']
  #allocation10 [shape = 'f32[128,32]{1,0:T(8,128)}', space=vmem, size = 0x10000, scoped, tag = 'scratch operand']
  #allocation11 [shape = 'f32[128,32]{1,0:T(8,128)}', space=vmem, size = 0x10000, scoped, tag = 'scratch operand']
  #allocation12 [shape = 's32[1]{0}', space=sflag, size = 0x4, scoped, tag = 'scoped memory for tpu_custom_call.1']
  #allocation13 [shape = 'u8[1024]{0}', space=smem, size = 0x400, scoped, tag = 'prefetched SMEM operand 0']
  #allocation14 [shape = 'u8[1024]{0}', space=smem, size = 0x400, scoped, tag = 'prefetched SMEM operand 1']
  %s0 = inlined_call_operand.vmem [shape: s32[256], index: 0, kind: input, shape index: {}]
  %s1 = inlined_call_operand.vmem [shape: s32[256], index: 1, kind: input, shape index: {}]
  %s2 = inlined_call_operand.vmem [shape: f32[64,32], index: 2, kind: input, shape index: {}]
  %s3 = inlined_call_operand.vmem [shape: f32[256,32], index: 3, kind: input, shape index: {}]
  %s4 = inlined_call_operand.vmem [shape: f32[8,32], index: 4, kind: input, shape index: {}]
  %s5 = inlined_call_operand.vmem [shape: f32[32,32], index: 5, kind: input, shape index: {}]
  %s6 = inlined_call_operand.vmem [shape: bf16[32,32], index: 6, kind: input, shape index: {}]
  %s7 = inlined_call_operand.vmem [shape: bf16[32,32], index: 7, kind: input, shape index: {}]
  %s8 = inlined_call_operand.vmem [shape: bf16[32,32], index: 8, kind: input, shape index: {}]
  %s9 = inlined_call_operand.vmem [shape: bf16[32,32], index: 9, kind: input, shape index: {}]
  %s10 = inlined_call_operand.vmem [shape: bf16[32,32], index: 10, kind: input, shape index: {}]
  %s11 = inlined_call_operand.vmem [shape: f32[1,32], index: 11, kind: input, shape index: {}]
  %s12 = inlined_call_operand.vmem [shape: bf16[32,32], index: 12, kind: input, shape index: {}]
  %s13 = inlined_call_operand.vmem [shape: f32[1,32], index: 13, kind: input, shape index: {}]
  %s14 = inlined_call_operand.vmem [shape: bf16[32,64], index: 14, kind: input, shape index: {}]
  %s15 = inlined_call_operand.vmem [shape: bf16[64,32], index: 15, kind: input, shape index: {}]
  %s16 = inlined_call_operand.vmem [shape: bf16[32,64], index: 16, kind: input, shape index: {}]
  %s17 = inlined_call_operand.vmem [shape: bf16[64,32], index: 17, kind: input, shape index: {}]
  %s18 = inlined_call_operand.vmem [shape: f32[64,32], index: 18, kind: output, shape index: {0}]
  %s19 = inlined_call_operand.vmem [shape: f32[256,32], index: 19, kind: output, shape index: {1}]
  %20 = xla_tuple %s18, %s19
  %s21 = sld [smem:[#allocation0]]
  $region127: #{tpu_custom_call.1} parent=0
    _
  %s23 = ssub.s32 1, %s21
  %s24 = scalar_select 0, %s23, %s21
  %s25 = sshll.u32 %s0, 4
  %s26 = int_to_ptr.vmem [resolvable:$true] %s25
  %28 = dma.vmem_to_smem %s26, 32, [#allocation13], [#allocation12]
  %s29 = sshll.u32 %s1, 4
  %s30 = int_to_ptr.vmem [resolvable:$true] %s29
  %32 = dma.vmem_to_smem %s30, 32, [#allocation14], [#allocation12]
  %33 = dma.done [#allocation12], 64
  %34 = sfence
  loop: start=0, step=1, limit=4
  $region2: #{tpu_custom_call.1} parent=0 // loop_pre_header
    _
  $region3: #{tpu_custom_call.1} parent=0 // loop_header
    %s36 = sphi 0, %s40
    %p37 = scmp.ge.s32.totalorder %s36, 4
    %s44 = sphi 0, %s44
    %s46 = sphi 0, %s44
    %s47 = sphi 0, %s46
    %s61 = sphi 0, %s47
    %s67 = sphi 0, %s69
    %s70 = sphi 0, %s67
    %s71 = sphi 0, %s70
    %s87 = sphi 0, %s71
    %s91 = sphi 0, %s91
    %s93 = sphi 0, %s91
    %s94 = sphi 0, %s93
    %s108 = sphi 0, %s94
    %s112 = sphi 0, %s112
    %s114 = sphi 0, %s112
    %s115 = sphi 0, %s114
    %s129 = sphi 0, %s115
    %s133 = sphi 0, %s133
    %s135 = sphi 0, %s133
    %s136 = sphi 0, %s135
    %s150 = sphi 0, %s136
    %s154 = sphi 0, %s154
    %s156 = sphi 0, %s154
    %s157 = sphi 0, %s156
    %s171 = sphi 0, %s157
    %s175 = sphi 0, %s175
    %s177 = sphi 0, %s175
    %s178 = sphi 0, %s177
    %s192 = sphi 0, %s178
    %s196 = sphi 0, %s196
    %s198 = sphi 0, %s196
    %s199 = sphi 0, %s198
    %s213 = sphi 0, %s199
    %s217 = sphi 0, %s217
    %s219 = sphi 0, %s217
    %s220 = sphi 0, %s219
    %s234 = sphi 0, %s220
    %s238 = sphi 0, %s238
    %s240 = sphi 0, %s238
    %s241 = sphi 0, %s240
    %s255 = sphi 0, %s241
    %s259 = sphi 0, %s259
    %s261 = sphi 0, %s259
    %s262 = sphi 0, %s261
    %s276 = sphi 0, %s262
    %s280 = sphi 0, %s280
    %s282 = sphi 0, %s280
    %s283 = sphi 0, %s282
    %s297 = sphi 0, %s283
    %s301 = sphi 0, %s301
    %s303 = sphi 0, %s301
    %s304 = sphi 0, %s303
    %s318 = sphi 0, %s304
    %s322 = sphi 0, %s322
    %s324 = sphi 0, %s322
    %s325 = sphi 0, %s324
    %s339 = sphi 0, %s325
    %s343 = sphi 0, %s343
    %s345 = sphi 0, %s343
    %s346 = sphi 0, %s345
    %s360 = sphi 0, %s346
    %s364 = sphi 0, %s364
    %s366 = sphi 0, %s364
    %s367 = sphi 0, %s366
    %s381 = sphi 0, %s367
    %s385 = sphi 0, %s385
    %s387 = sphi 0, %s385
    %s388 = sphi 0, %s387
    %s402 = sphi 0, %s388
    %s408 = sphi 0, %s410
    %s411 = sphi 0, %s408
    %s412 = sphi 0, %s411
    %s428 = sphi 0, %s412
  $region4: #{tpu_custom_call.1} parent=0 // loop_header_branch
    %39 = sbr.rel (%p37) target = $region8
  $region5: #{tpu_custom_call.1} parent=0 // loop_body
    %s41 = ssub.s32 %s36, 1
    %s42 = ssub.s32 %s36, 2
    %s43 = sadd.s32 %s36, 1
    %s45 = sadd.s32 %s44, 1
    %p48 = scmp.eq.s32.totalorder %s36, 1
    %p49 = scmp.ne.s32.totalorder %s44, %s46
    %p50 = scmp.eq.s32.totalorder %s36, 0
    %p51 = por %p49, %p50
    %p52 = scmp.ne.s32.totalorder %s44, %s46
    %p53 = scmp.eq.s32.totalorder %s41, 1
    %p54 = por %p52, %p53
    %p55 = scmp.ne.s32.totalorder %s46, %s47
    %p56 = scmp.eq.s32.totalorder %s41, 0
    %p57 = por %p55, %p56
    %p58 = scmp.ne.s32.totalorder %s46, %s47
    %p59 = scmp.eq.s32.totalorder %s42, 1
    %p60 = por %p58, %p59
    %p62 = scmp.ne.s32.totalorder %s47, %s61
    %p63 = scmp.eq.s32.totalorder %s42, 0
    %p64 = por %p62, %p63
    %s65 = ssub.s32 %s36, %s43
    %p66 = scmp.eq.s32.totalorder %s65, 0
    %s68 = sadd.s32 %s67, 1
    %s69 = scalar_select %p66, %s67, %s68
    %p72 = pneg %p66
    %p73 = scmp.eq.s32.totalorder %s36, 1
    %p74 = por %p72, %p73
    %p75 = scmp.ne.s32.totalorder %s67, %s70
    %p76 = scmp.eq.s32.totalorder %s36, 0
    %p77 = por %p75, %p76
    %p78 = scmp.ne.s32.totalorder %s67, %s70
    %p79 = scmp.eq.s32.totalorder %s41, 1
    %p80 = por %p78, %p79
    %p81 = scmp.ne.s32.totalorder %s70, %s71
    %p82 = scmp.eq.s32.totalorder %s41, 0
    %p83 = por %p81, %p82
    %p84 = scmp.ne.s32.totalorder %s70, %s71
    %p85 = scmp.eq.s32.totalorder %s42, 1
    %p86 = por %p84, %p85
    %p88 = scmp.ne.s32.totalorder %s71, %s87
    %p89 = scmp.eq.s32.totalorder %s42, 0
    %p90 = por %p88, %p89
    %s92 = sadd.s32 %s91, 1
    %p95 = scmp.eq.s32.totalorder %s36, 1
    %p96 = scmp.ne.s32.totalorder %s91, %s93
    %p97 = scmp.eq.s32.totalorder %s36, 0
    %p98 = por %p96, %p97
    %p99 = scmp.ne.s32.totalorder %s91, %s93
    %p100 = scmp.eq.s32.totalorder %s41, 1
    %p101 = por %p99, %p100
    %p102 = scmp.ne.s32.totalorder %s93, %s94
    %p103 = scmp.eq.s32.totalorder %s41, 0
    %p104 = por %p102, %p103
    %p105 = scmp.ne.s32.totalorder %s93, %s94
    %p106 = scmp.eq.s32.totalorder %s42, 1
    %p107 = por %p105, %p106
    %p109 = scmp.ne.s32.totalorder %s94, %s108
    %p110 = scmp.eq.s32.totalorder %s42, 0
    %p111 = por %p109, %p110
    %s113 = sadd.s32 %s112, 1
    %p116 = scmp.eq.s32.totalorder %s36, 1
    %p117 = scmp.ne.s32.totalorder %s112, %s114
    %p118 = scmp.eq.s32.totalorder %s36, 0
    %p119 = por %p117, %p118
    %p120 = scmp.ne.s32.totalorder %s112, %s114
    %p121 = scmp.eq.s32.totalorder %s41, 1
    %p122 = por %p120, %p121
    %p123 = scmp.ne.s32.totalorder %s114, %s115
    %p124 = scmp.eq.s32.totalorder %s41, 0
    %p125 = por %p123, %p124
    %p126 = scmp.ne.s32.totalorder %s114, %s115
    %p127 = scmp.eq.s32.totalorder %s42, 1
    %p128 = por %p126, %p127
    %p130 = scmp.ne.s32.totalorder %s115, %s129
    %p131 = scmp.eq.s32.totalorder %s42, 0
    %p132 = por %p130, %p131
    %s134 = sadd.s32 %s133, 1
    %p137 = scmp.eq.s32.totalorder %s36, 1
    %p138 = scmp.ne.s32.totalorder %s133, %s135
    %p139 = scmp.eq.s32.totalorder %s36, 0
    %p140 = por %p138, %p139
    %p141 = scmp.ne.s32.totalorder %s133, %s135
    %p142 = scmp.eq.s32.totalorder %s41, 1
    %p143 = por %p141, %p142
    %p144 = scmp.ne.s32.totalorder %s135, %s136
    %p145 = scmp.eq.s32.totalorder %s41, 0
    %p146 = por %p144, %p145
    %p147 = scmp.ne.s32.totalorder %s135, %s136
    %p148 = scmp.eq.s32.totalorder %s42, 1
    %p149 = por %p147, %p148
    %p151 = scmp.ne.s32.totalorder %s136, %s150
    %p152 = scmp.eq.s32.totalorder %s42, 0
    %p153 = por %p151, %p152
    %s155 = sadd.s32 %s154, 1
    %p158 = scmp.eq.s32.totalorder %s36, 1
    %p159 = scmp.ne.s32.totalorder %s154, %s156
    %p160 = scmp.eq.s32.totalorder %s36, 0
    %p161 = por %p159, %p160
    %p162 = scmp.ne.s32.totalorder %s154, %s156
    %p163 = scmp.eq.s32.totalorder %s41, 1
    %p164 = por %p162, %p163
    %p165 = scmp.ne.s32.totalorder %s156, %s157
    %p166 = scmp.eq.s32.totalorder %s41, 0
    %p167 = por %p165, %p166
    %p168 = scmp.ne.s32.totalorder %s156, %s157
    %p169 = scmp.eq.s32.totalorder %s42, 1
    %p170 = por %p168, %p169
    %p172 = scmp.ne.s32.totalorder %s157, %s171
    %p173 = scmp.eq.s32.totalorder %s42, 0
    %p174 = por %p172, %p173
    %s176 = sadd.s32 %s175, 1
    %p179 = scmp.eq.s32.totalorder %s36, 1
    %p180 = scmp.ne.s32.totalorder %s175, %s177
    %p181 = scmp.eq.s32.totalorder %s36, 0
    %p182 = por %p180, %p181
    %p183 = scmp.ne.s32.totalorder %s175, %s177
    %p184 = scmp.eq.s32.totalorder %s41, 1
    %p185 = por %p183, %p184
    %p186 = scmp.ne.s32.totalorder %s177, %s178
    %p187 = scmp.eq.s32.totalorder %s41, 0
    %p188 = por %p186, %p187
    %p189 = scmp.ne.s32.totalorder %s177, %s178
    %p190 = scmp.eq.s32.totalorder %s42, 1
    %p191 = por %p189, %p190
    %p193 = scmp.ne.s32.totalorder %s178, %s192
    %p194 = scmp.eq.s32.totalorder %s42, 0
    %p195 = por %p193, %p194
    %s197 = sadd.s32 %s196, 1
    %p200 = scmp.eq.s32.totalorder %s36, 1
    %p201 = scmp.ne.s32.totalorder %s196, %s198
    %p202 = scmp.eq.s32.totalorder %s36, 0
    %p203 = por %p201, %p202
    %p204 = scmp.ne.s32.totalorder %s196, %s198
    %p205 = scmp.eq.s32.totalorder %s41, 1
    %p206 = por %p204, %p205
    %p207 = scmp.ne.s32.totalorder %s198, %s199
    %p208 = scmp.eq.s32.totalorder %s41, 0
    %p209 = por %p207, %p208
    %p210 = scmp.ne.s32.totalorder %s198, %s199
    %p211 = scmp.eq.s32.totalorder %s42, 1
    %p212 = por %p210, %p211
    %p214 = scmp.ne.s32.totalorder %s199, %s213
    %p215 = scmp.eq.s32.totalorder %s42, 0
    %p216 = por %p214, %p215
    %s218 = sadd.s32 %s217, 1
    %p221 = scmp.eq.s32.totalorder %s36, 1
    %p222 = scmp.ne.s32.totalorder %s217, %s219
    %p223 = scmp.eq.s32.totalorder %s36, 0
    %p224 = por %p222, %p223
    %p225 = scmp.ne.s32.totalorder %s217, %s219
    %p226 = scmp.eq.s32.totalorder %s41, 1
    %p227 = por %p225, %p226
    %p228 = scmp.ne.s32.totalorder %s219, %s220
    %p229 = scmp.eq.s32.totalorder %s41, 0
    %p230 = por %p228, %p229
    %p231 = scmp.ne.s32.totalorder %s219, %s220
    %p232 = scmp.eq.s32.totalorder %s42, 1
    %p233 = por %p231, %p232
    %p235 = scmp.ne.s32.totalorder %s220, %s234
    %p236 = scmp.eq.s32.totalorder %s42, 0
    %p237 = por %p235, %p236
    %s239 = sadd.s32 %s238, 1
    %p242 = scmp.eq.s32.totalorder %s36, 1
    %p243 = scmp.ne.s32.totalorder %s238, %s240
    %p244 = scmp.eq.s32.totalorder %s36, 0
    %p245 = por %p243, %p244
    %p246 = scmp.ne.s32.totalorder %s238, %s240
    %p247 = scmp.eq.s32.totalorder %s41, 1
    %p248 = por %p246, %p247
    %p249 = scmp.ne.s32.totalorder %s240, %s241
    %p250 = scmp.eq.s32.totalorder %s41, 0
    %p251 = por %p249, %p250
    %p252 = scmp.ne.s32.totalorder %s240, %s241
    %p253 = scmp.eq.s32.totalorder %s42, 1
    %p254 = por %p252, %p253
    %p256 = scmp.ne.s32.totalorder %s241, %s255
    %p257 = scmp.eq.s32.totalorder %s42, 0
    %p258 = por %p256, %p257
    %s260 = sadd.s32 %s259, 1
    %p263 = scmp.eq.s32.totalorder %s36, 1
    %p264 = scmp.ne.s32.totalorder %s259, %s261
    %p265 = scmp.eq.s32.totalorder %s36, 0
    %p266 = por %p264, %p265
    %p267 = scmp.ne.s32.totalorder %s259, %s261
    %p268 = scmp.eq.s32.totalorder %s41, 1
    %p269 = por %p267, %p268
    %p270 = scmp.ne.s32.totalorder %s261, %s262
    %p271 = scmp.eq.s32.totalorder %s41, 0
    %p272 = por %p270, %p271
    %p273 = scmp.ne.s32.totalorder %s261, %s262
    %p274 = scmp.eq.s32.totalorder %s42, 1
    %p275 = por %p273, %p274
    %p277 = scmp.ne.s32.totalorder %s262, %s276
    %p278 = scmp.eq.s32.totalorder %s42, 0
    %p279 = por %p277, %p278
    %s281 = sadd.s32 %s280, 1
    %p284 = scmp.eq.s32.totalorder %s36, 1
    %p285 = scmp.ne.s32.totalorder %s280, %s282
    %p286 = scmp.eq.s32.totalorder %s36, 0
    %p287 = por %p285, %p286
    %p288 = scmp.ne.s32.totalorder %s280, %s282
    %p289 = scmp.eq.s32.totalorder %s41, 1
    %p290 = por %p288, %p289
    %p291 = scmp.ne.s32.totalorder %s282, %s283
    %p292 = scmp.eq.s32.totalorder %s41, 0
    %p293 = por %p291, %p292
    %p294 = scmp.ne.s32.totalorder %s282, %s283
    %p295 = scmp.eq.s32.totalorder %s42, 1
    %p296 = por %p294, %p295
    %p298 = scmp.ne.s32.totalorder %s283, %s297
    %p299 = scmp.eq.s32.totalorder %s42, 0
    %p300 = por %p298, %p299
    %s302 = sadd.s32 %s301, 1
    %p305 = scmp.eq.s32.totalorder %s36, 1
    %p306 = scmp.ne.s32.totalorder %s301, %s303
    %p307 = scmp.eq.s32.totalorder %s36, 0
    %p308 = por %p306, %p307
    %p309 = scmp.ne.s32.totalorder %s301, %s303
    %p310 = scmp.eq.s32.totalorder %s41, 1
    %p311 = por %p309, %p310
    %p312 = scmp.ne.s32.totalorder %s303, %s304
    %p313 = scmp.eq.s32.totalorder %s41, 0
    %p314 = por %p312, %p313
    %p315 = scmp.ne.s32.totalorder %s303, %s304
    %p316 = scmp.eq.s32.totalorder %s42, 1
    %p317 = por %p315, %p316
    %p319 = scmp.ne.s32.totalorder %s304, %s318
    %p320 = scmp.eq.s32.totalorder %s42, 0
    %p321 = por %p319, %p320
    %s323 = sadd.s32 %s322, 1
    %p326 = scmp.eq.s32.totalorder %s36, 1
    %p327 = scmp.ne.s32.totalorder %s322, %s324
    %p328 = scmp.eq.s32.totalorder %s36, 0
    %p329 = por %p327, %p328
    %p330 = scmp.ne.s32.totalorder %s322, %s324
    %p331 = scmp.eq.s32.totalorder %s41, 1
    %p332 = por %p330, %p331
    %p333 = scmp.ne.s32.totalorder %s324, %s325
    %p334 = scmp.eq.s32.totalorder %s41, 0
    %p335 = por %p333, %p334
    %p336 = scmp.ne.s32.totalorder %s324, %s325
    %p337 = scmp.eq.s32.totalorder %s42, 1
    %p338 = por %p336, %p337
    %p340 = scmp.ne.s32.totalorder %s325, %s339
    %p341 = scmp.eq.s32.totalorder %s42, 0
    %p342 = por %p340, %p341
    %s344 = sadd.s32 %s343, 1
    %p347 = scmp.eq.s32.totalorder %s36, 1
    %p348 = scmp.ne.s32.totalorder %s343, %s345
    %p349 = scmp.eq.s32.totalorder %s36, 0
    %p350 = por %p348, %p349
    %p351 = scmp.ne.s32.totalorder %s343, %s345
    %p352 = scmp.eq.s32.totalorder %s41, 1
    %p353 = por %p351, %p352
    %p354 = scmp.ne.s32.totalorder %s345, %s346
    %p355 = scmp.eq.s32.totalorder %s41, 0
    %p356 = por %p354, %p355
    %p357 = scmp.ne.s32.totalorder %s345, %s346
    %p358 = scmp.eq.s32.totalorder %s42, 1
    %p359 = por %p357, %p358
    %p361 = scmp.ne.s32.totalorder %s346, %s360
    %p362 = scmp.eq.s32.totalorder %s42, 0
    %p363 = por %p361, %p362
    %s365 = sadd.s32 %s364, 1
    %p368 = scmp.eq.s32.totalorder %s36, 1
    %p369 = scmp.ne.s32.totalorder %s364, %s366
    %p370 = scmp.eq.s32.totalorder %s36, 0
    %p371 = por %p369, %p370
    %p372 = scmp.ne.s32.totalorder %s364, %s366
    %p373 = scmp.eq.s32.totalorder %s41, 1
    %p374 = por %p372, %p373
    %p375 = scmp.ne.s32.totalorder %s366, %s367
    %p376 = scmp.eq.s32.totalorder %s41, 0
    %p377 = por %p375, %p376
    %p378 = scmp.ne.s32.totalorder %s366, %s367
    %p379 = scmp.eq.s32.totalorder %s42, 1
    %p380 = por %p378, %p379
    %p382 = scmp.ne.s32.totalorder %s367, %s381
    %p383 = scmp.eq.s32.totalorder %s42, 0
    %p384 = por %p382, %p383
    %s386 = sadd.s32 %s385, 1
    %p389 = scmp.eq.s32.totalorder %s36, 1
    %p390 = scmp.ne.s32.totalorder %s385, %s387
    %p391 = scmp.eq.s32.totalorder %s36, 0
    %p392 = por %p390, %p391
    %p393 = scmp.ne.s32.totalorder %s385, %s387
    %p394 = scmp.eq.s32.totalorder %s41, 1
    %p395 = por %p393, %p394
    %p396 = scmp.ne.s32.totalorder %s387, %s388
    %p397 = scmp.eq.s32.totalorder %s41, 0
    %p398 = por %p396, %p397
    %p399 = scmp.ne.s32.totalorder %s387, %s388
    %p400 = scmp.eq.s32.totalorder %s42, 1
    %p401 = por %p399, %p400
    %p403 = scmp.ne.s32.totalorder %s388, %s402
    %p404 = scmp.eq.s32.totalorder %s42, 0
    %p405 = por %p403, %p404
    %s406 = ssub.s32 %s36, %s43
    %p407 = scmp.eq.s32.totalorder %s406, 0
    %s409 = sadd.s32 %s408, 1
    %s410 = scalar_select %p407, %s408, %s409
    %p413 = pneg %p407
    %p414 = scmp.eq.s32.totalorder %s36, 1
    %p415 = por %p413, %p414
    %p416 = scmp.ne.s32.totalorder %s408, %s411
    %p417 = scmp.eq.s32.totalorder %s36, 0
    %p418 = por %p416, %p417
    %p419 = scmp.ne.s32.totalorder %s408, %s411
    %p420 = scmp.eq.s32.totalorder %s41, 1
    %p421 = por %p419, %p420
    %p422 = scmp.ne.s32.totalorder %s411, %s412
    %p423 = scmp.eq.s32.totalorder %s41, 0
    %p424 = por %p422, %p423
    %p425 = scmp.ne.s32.totalorder %s411, %s412
    %p426 = scmp.eq.s32.totalorder %s42, 1
    %p427 = por %p425, %p426
    %p429 = scmp.ne.s32.totalorder %s412, %s428
    %p430 = scmp.eq.s32.totalorder %s42, 0
    %p431 = por %p429, %p430
    %p432 = scmp.le.s32.totalorder 1, %s36
    %p433 = scmp.lt.s32.totalorder %s36, 3
    %p434 = pnand %p432, %p433
    %p435 = pneg %p434
    // Predicated region
    $region9: #{tpu_custom_call.1} parent=5 // pred_check
      _
    $region10: #{tpu_custom_call.1} parent=5 // pred_check_branch
      %437 = sbr.rel (%p434) target = $region12
    $region11: #{tpu_custom_call.1} parent=5 // pred_region
      %s438 = ssub.s32 %s36, 1
      // Predicated region
      $region13: #{tpu_custom_call.1} parent=11 // pred_check
        %p439 = pneg %p57
      $region14: #{tpu_custom_call.1} parent=11 // pred_check_branch
        %441 = sbr.rel (%p439) target = $region16
      $region15: #{tpu_custom_call.1} parent=11 // pred_region
        _
      $region16: #{tpu_custom_call.1} parent=11 // pred_fallthru
        _
      // Predicated region
      $region17: #{tpu_custom_call.1} parent=11 // pred_check
        %p442 = pneg %p104
      $region18: #{tpu_custom_call.1} parent=11 // pred_check_branch
        %444 = sbr.rel (%p442) target = $region20
      $region19: #{tpu_custom_call.1} parent=11 // pred_region
        _
      $region20: #{tpu_custom_call.1} parent=11 // pred_fallthru
        _
      // Predicated region
      $region21: #{tpu_custom_call.1} parent=11 // pred_check
        %p445 = pneg %p125
      $region22: #{tpu_custom_call.1} parent=11 // pred_check_branch
        %447 = sbr.rel (%p445) target = $region24
      $region23: #{tpu_custom_call.1} parent=11 // pred_region
        _
      $region24: #{tpu_custom_call.1} parent=11 // pred_fallthru
        _
      // Predicated region
      $region25: #{tpu_custom_call.1} parent=11 // pred_check
        %p448 = pneg %p146
      $region26: #{tpu_custom_call.1} parent=11 // pred_check_branch
        %450 = sbr.rel (%p448) target = $region28
      $region27: #{tpu_custom_call.1} parent=11 // pred_region
        _
      $region28: #{tpu_custom_call.1} parent=11 // pred_fallthru
        _
      // Predicated region
      $region29: #{tpu_custom_call.1} parent=11 // pred_check
        %p451 = pneg %p167
      $region30: #{tpu_custom_call.1} parent=11 // pred_check_branch
        %453 = sbr.rel (%p451) target = $region32
      $region31: #{tpu_custom_call.1} parent=11 // pred_region
        _
      $region32: #{tpu_custom_call.1} parent=11 // pred_fallthru
        _
      // Predicated region
      $region33: #{tpu_custom_call.1} parent=11 // pred_check
        %p454 = pneg %p188
      $region34: #{tpu_custom_call.1} parent=11 // pred_check_branch
        %456 = sbr.rel (%p454) target = $region36
      $region35: #{tpu_custom_call.1} parent=11 // pred_region
        _
      $region36: #{tpu_custom_call.1} parent=11 // pred_fallthru
        _
      // Predicated region
      $region37: #{tpu_custom_call.1} parent=11 // pred_check
        %p457 = pneg %p209
      $region38: #{tpu_custom_call.1} parent=11 // pred_check_branch
        %459 = sbr.rel (%p457) target = $region40
      $region39: #{tpu_custom_call.1} parent=11 // pred_region
        _
      $region40: #{tpu_custom_call.1} parent=11 // pred_fallthru
        _
      // Predicated region
      $region41: #{tpu_custom_call.1} parent=11 // pred_check
        %p460 = pneg %p230
      $region42: #{tpu_custom_call.1} parent=11 // pred_check_branch
        %462 = sbr.rel (%p460) target = $region44
      $region43: #{tpu_custom_call.1} parent=11 // pred_region
        _
      $region44: #{tpu_custom_call.1} parent=11 // pred_fallthru
        _
      // Predicated region
      $region45: #{tpu_custom_call.1} parent=11 // pred_check
        %p463 = pneg %p251
      $region46: #{tpu_custom_call.1} parent=11 // pred_check_branch
        %465 = sbr.rel (%p463) target = $region48
      $region47: #{tpu_custom_call.1} parent=11 // pred_region
        _
      $region48: #{tpu_custom_call.1} parent=11 // pred_fallthru
        _
      // Predicated region
      $region49: #{tpu_custom_call.1} parent=11 // pred_check
        %p466 = pneg %p272
      $region50: #{tpu_custom_call.1} parent=11 // pred_check_branch
        %468 = sbr.rel (%p466) target = $region52
      $region51: #{tpu_custom_call.1} parent=11 // pred_region
        _
      $region52: #{tpu_custom_call.1} parent=11 // pred_fallthru
        _
      // Predicated region
      $region53: #{tpu_custom_call.1} parent=11 // pred_check
        %p469 = pneg %p293
      $region54: #{tpu_custom_call.1} parent=11 // pred_check_branch
        %471 = sbr.rel (%p469) target = $region56
      $region55: #{tpu_custom_call.1} parent=11 // pred_region
        _
      $region56: #{tpu_custom_call.1} parent=11 // pred_fallthru
        _
      // Predicated region
      $region57: #{tpu_custom_call.1} parent=11 // pred_check
        %p472 = pneg %p314
      $region58: #{tpu_custom_call.1} parent=11 // pred_check_branch
        %474 = sbr.rel (%p472) target = $region60
      $region59: #{tpu_custom_call.1} parent=11 // pred_region
        _
      $region60: #{tpu_custom_call.1} parent=11 // pred_fallthru
        _
      // Predicated region
      $region61: #{tpu_custom_call.1} parent=11 // pred_check
        %p475 = pneg %p335
      $region62: #{tpu_custom_call.1} parent=11 // pred_check_branch
        %477 = sbr.rel (%p475) target = $region64
      $region63: #{tpu_custom_call.1} parent=11 // pred_region
        _
      $region64: #{tpu_custom_call.1} parent=11 // pred_fallthru
        _
      // Predicated region
      $region65: #{tpu_custom_call.1} parent=11 // pred_check
        %p478 = pneg %p356
      $region66: #{tpu_custom_call.1} parent=11 // pred_check_branch
        %480 = sbr.rel (%p478) target = $region68
      $region67: #{tpu_custom_call.1} parent=11 // pred_region
        _
      $region68: #{tpu_custom_call.1} parent=11 // pred_fallthru
        _
      // Predicated region
      $region69: #{tpu_custom_call.1} parent=11 // pred_check
        %p481 = pneg %p377
      $region70: #{tpu_custom_call.1} parent=11 // pred_check_branch
        %483 = sbr.rel (%p481) target = $region72
      $region71: #{tpu_custom_call.1} parent=11 // pred_region
        _
      $region72: #{tpu_custom_call.1} parent=11 // pred_fallthru
        _
    $region12: #{tpu_custom_call.1} parent=5 // pred_fallthru
      _
    %p484 = scmp.lt.s32.totalorder %s36, 2
    // Predicated region
    $region73: #{tpu_custom_call.1} parent=5 // pred_check
      %p485 = pneg %p484
    $region74: #{tpu_custom_call.1} parent=5 // pred_check_branch
      %487 = sbr.rel (%p485) target = $region76
    $region75: #{tpu_custom_call.1} parent=5 // pred_region
      // Predicated region
      $region77: #{tpu_custom_call.1} parent=75 // pred_check
        %p488 = pneg %p77
      $region78: #{tpu_custom_call.1} parent=75 // pred_check_branch
        %490 = sbr.rel (%p488) target = $region80
      $region79: #{tpu_custom_call.1} parent=75 // pred_region
        %s491 = smul.u32 16, %s36
        %p492 = scmp.lt.s32.totalorder %s491, 31
        %s493 = scalar_select %p492, %s491, 31
        %s494 = smul.addr %s493, 8
        %s495 = scalar_lea.vmem %s3, %s494
        %s496 = smul.u32 16, %s36
      $region80: #{tpu_custom_call.1} parent=75 // pred_fallthru
        _
    $region76: #{tpu_custom_call.1} parent=5 // pred_fallthru
      _
    %p497 = scmp.le.s32.totalorder 1, %s36
    %p498 = scmp.lt.s32.totalorder %s36, 3
    %p499 = pnand %p497, %p498
    %p500 = pneg %p499
    // Predicated region
    $region81: #{tpu_custom_call.1} parent=5 // pred_check
      _
    $region82: #{tpu_custom_call.1} parent=5 // pred_check_branch
      %502 = sbr.rel (%p499) target = $region84
    $region83: #{tpu_custom_call.1} parent=5 // pred_region
      %s503 = ssub.s32 %s36, 1
      %p504 = pneg %p57
      %p505 = pneg %p54
      %s506 = smul.u32 16, %s41
      %p507 = scmp.lt.s32.totalorder %s506, 31
      %s508 = scalar_select %p507, %s506, 31
      %s509 = smul.addr %s508, 8
      %s510 = scalar_lea.vmem %s3, %s509
      %p511 = pneg %p83
      %p512 = pneg %p80
      %p513 = pneg %p104
      %p514 = pneg %p101
      %p515 = pneg %p125
      %p516 = pneg %p122
      %p517 = pneg %p146
      %p518 = pneg %p143
      %p519 = pneg %p167
      %p520 = pneg %p164
      %p521 = pneg %p188
      %p522 = pneg %p185
      %p523 = pneg %p209
      %p524 = pneg %p206
      %p525 = pneg %p230
      %p526 = pneg %p227
      %p527 = pneg %p251
      %p528 = pneg %p248
      %p529 = pneg %p272
      %p530 = pneg %p269
      %p531 = pneg %p293
      %p532 = pneg %p290
      %p533 = pneg %p314
      %p534 = pneg %p311
      %p535 = pneg %p335
      %p536 = pneg %p332
      %p537 = pneg %p356
      %p538 = pneg %p353
      %p539 = pneg %p377
      %p540 = pneg %p374
      %p541 = pneg %p398
      %p542 = pneg %p395
      %p543 = pneg %p424
      %p544 = pneg %p421
      %s545 = smul.u32 16, %s41
      %p546 = scmp.lt.s32.totalorder %s545, 31
      %s547 = scalar_select %p546, %s545, 31
      %s548 = smul.addr %s547, 8
      %s549 = scalar_lea.vmem %s19, %s548
      %s550 = smul.u32 16, %s41
      %p551 = scmp.lt.s32.totalorder %s550, 31
      %s552 = scalar_select %p551, %s550, 31
      %s553 = smul.addr %s552, 8
      %s554 = scalar_lea.vmem %s3, %s553
      %s555 = smul.u32 16, %s41
      %s556 = smul.u32 16, %s41
      %p557 = scmp.lt.s32.totalorder %s556, 31
      %s558 = scalar_select %p557, %s556, 31
      %s559 = smul.addr %s558, 8
      %s560 = scalar_lea.vmem %s19, %s559
      %s561 = smul.u32 16, %s41
      %v563 = vld [vmem:[%s4] sm:$0xff]
      %p564 = scmp.eq.s32.totalorder %s41, 0
      // Predicated region
      $region85: #{tpu_custom_call.1} parent=83 // pred_check
        %p565 = pneg %p564
      $region86: #{tpu_custom_call.1} parent=83 // pred_check_branch
        %567 = sbr.rel (%p565) target = $region88
      $region87: #{tpu_custom_call.1} parent=83 // pred_region
        %v568 = vld [vmem:[%s2] sm:$0xff]
        %v569 = vld [vmem:[%s2 + $0x8] sm:$0xff]
        %v570 = vld [vmem:[%s2 + $0x10] sm:$0xff]
        %v571 = vld [vmem:[%s2 + $0x18] sm:$0xff]
        %v572 = vld [vmem:[%s2 + $0x20] sm:$0xff]
        %v573 = vld [vmem:[%s2 + $0x28] sm:$0xff]
        %v574 = vld [vmem:[%s2 + $0x30] sm:$0xff]
        %v575 = vld [vmem:[%s2 + $0x38] sm:$0xff]
        %v576 = vlaneseq
        %v577 = vshrl.u32 %v576, 7
        %v578 = vsub.s32 0, %v577
        %v579 = vrot.slane %v563, %v578
        %v580 = vmul.f32 %v568, %v579
        %v581 = vmul.f32 %v569, %v579
        %v582 = vmul.f32 %v570, %v579
        %v583 = vmul.f32 %v571, %v579
        %v584 = vmul.f32 %v572, %v579
        %v585 = vmul.f32 %v573, %v579
        %v586 = vmul.f32 %v574, %v579
        %v587 = vmul.f32 %v575, %v579
        %v588 = vlaneseq
        %v589 = vshrl.u32 %v588, 7
        %v590 = vsub.s32 1, %v589
        %v591 = vrot.slane %v563, %v590
        %v592 = vadd.f32 %v580, %v591
        %v593 = vadd.f32 %v581, %v591
        %v594 = vadd.f32 %v582, %v591
        %v595 = vadd.f32 %v583, %v591
        %v596 = vadd.f32 %v584, %v591
        %v597 = vadd.f32 %v585, %v591
        %v598 = vadd.f32 %v586, %v591
        %v599 = vadd.f32 %v587, %v591
        %v600 = vpack.c.bf16 %v593, %v592
        %v601 = vpack.c.bf16 %v595, %v594
        %v602 = vpack.c.bf16 %v597, %v596
        %v603 = vpack.c.bf16 %v599, %v598
        %v604 = vld [vmem:[%s6] sm:$0xf]
        %v605 = vld [vmem:[%s6 + $0x4] sm:$0xf]
        %v606 = vld [vmem:[%s6 + $0x8] sm:$0xf]
        %v607 = vld [vmem:[%s6 + $0xc] sm:$0xf]
        %v612 = vunpack.c.l.b16 %v604
        %v613 = vunpack.c.l.b16 %v605
        %v614 = vunpack.c.l.b16 %v606
        %v615 = vunpack.c.l.b16 %v607
        %v616 = vpack.c.b16 %v613, %v612
        %v617 = vpack.c.b16 %v615, %v614
        %vm620 = vcmask 261120
        %v622 = vsel %vm620, %v600, 0
        %v625 = vsel %vm620, %v601, 0
        %v628 = vsel %vm620, %v602, 0
        %v631 = vsel %vm620, %v603, 0
        %633 = vmatprep.subr.bf16.mxu0 0
        %634 = vmatpush1.bf16.msra.mxu0 0
        %635 = vmatprep.subr.bf16.mxu0 0
        %636 = vmatpush1.bf16.msra.mxu0 0
        %637 = vmatprep.subr.bf16.mxu0 0
        %638 = vmatpush1.bf16.msra.mxu0 0
        %639 = vmatprep.subr.bf16.mxu0 0
        %640 = vmatpush1.bf16.msra.mxu0 0
        %641 = vmatprep.subr.bf16.mxu0 0
        %642 = vmatpush1.bf16.msra.mxu0 0
        %643 = vmatprep.subr.bf16.mxu0 0
        %644 = vmatpush1.bf16.msra.mxu0 0
        %645 = vmatprep.subr.bf16.mxu0 0
        %646 = vmatpush1.bf16.msra.mxu0 %v617
        %647 = vmatprep.subr.bf16.mxu0 0
        %648 = vmatpush1.bf16.msra.mxu0 %v616
        %649 = vmatprep.subr.bf16.mxu0 0
        %650 = vmatpush2.bf16.msra.mxu0 0
        %651 = vmatprep.subr.bf16.mxu0 0
        %652 = vmatpush2.bf16.msra.mxu0 0
        %653 = vmatprep.subr.bf16.mxu0 0
        %654 = vmatpush2.bf16.msra.mxu0 0
        %655 = vmatprep.subr.bf16.mxu0 0
        %656 = vmatpush2.bf16.msra.mxu0 0
        %657 = vmatprep.subr.bf16.mxu0 0
        %658 = vmatpush2.bf16.msra.mxu0 0
        %659 = vmatprep.subr.bf16.mxu0 0
        %660 = vmatpush2.bf16.msra.mxu0 0
        %661 = vmatprep.subr.bf16.mxu0 0
        %662 = vmatpush2.bf16.msra.mxu0 0
        %663 = vmatprep.subr.bf16.mxu0 0
        %664 = vmatpush2.bf16.msra.mxu0 0
        %665 = vmatprep.mubr.bf16.mxu0 0
        %666 = vmatmul.mubr.bf16.gmra.mxu0 %v622
        %v667 = vpop.f32.mrf.mxu0
        %v668 = vadd.f32 0.0, %v667
        %v669 = vpop.f32.mrf.mxu0
        %v670 = vpop.f32.mrf.mxu0
        %v671 = vadd.f32 0.0, %v670
        %v672 = vpop.f32.mrf.mxu0
        %673 = vmatprep.mubr.bf16.mxu0 0
        %674 = vmatmul.mubr.bf16.gmra.mxu0 %v625
        %v675 = vpop.f32.mrf.mxu0
        %v676 = vadd.f32 0.0, %v675
        %v677 = vpop.f32.mrf.mxu0
        %v678 = vpop.f32.mrf.mxu0
        %v679 = vadd.f32 0.0, %v678
        %v680 = vpop.f32.mrf.mxu0
        %681 = vmatprep.mubr.bf16.mxu0 0
        %682 = vmatmul.mubr.bf16.gmra.mxu0 %v628
        %v683 = vpop.f32.mrf.mxu0
        %v684 = vadd.f32 0.0, %v683
        %v685 = vpop.f32.mrf.mxu0
        %v686 = vpop.f32.mrf.mxu0
        %v687 = vadd.f32 0.0, %v686
        %v688 = vpop.f32.mrf.mxu0
        %689 = vmatprep.mubr.bf16.mxu0 0
        %690 = vmatmul.mubr.bf16.gmra.mxu0 %v631
        %v691 = vpop.f32.mrf.mxu0
        %v692 = vadd.f32 0.0, %v691
        %v693 = vpop.f32.mrf.mxu0
        %v694 = vpop.f32.mrf.mxu0
        %v695 = vadd.f32 0.0, %v694
        %v696 = vpop.f32.mrf.mxu0
        %697 = vdwg.mxu0
        %698 = vst.msk [vmem:[#allocation2] sm:$0xff] %vm620, %v668
        %699 = vst.msk [vmem:[#allocation2 + $0x8] sm:$0xff] %vm620, %v671
        %700 = vst.msk [vmem:[#allocation2 + $0x10] sm:$0xff] %vm620, %v676
        %701 = vst.msk [vmem:[#allocation2 + $0x18] sm:$0xff] %vm620, %v679
        %702 = vst.msk [vmem:[#allocation2 + $0x20] sm:$0xff] %vm620, %v684
        %703 = vst.msk [vmem:[#allocation2 + $0x28] sm:$0xff] %vm620, %v687
        %704 = vst.msk [vmem:[#allocation2 + $0x30] sm:$0xff] %vm620, %v692
        %705 = vst.msk [vmem:[#allocation2 + $0x38] sm:$0xff] %vm620, %v695
        %v706 = vld [vmem:[%s7] sm:$0xf]
        %v707 = vld [vmem:[%s7 + $0x4] sm:$0xf]
        %v708 = vld [vmem:[%s7 + $0x8] sm:$0xf]
        %v709 = vld [vmem:[%s7 + $0xc] sm:$0xf]
        %v714 = vunpack.c.l.b16 %v706
        %v715 = vunpack.c.l.b16 %v707
        %v716 = vunpack.c.l.b16 %v708
        %v717 = vunpack.c.l.b16 %v709
        %v718 = vpack.c.b16 %v715, %v714
        %v719 = vpack.c.b16 %v717, %v716
        %722 = vmatprep.subr.bf16.mxu0 0
        %723 = vmatpush1.bf16.msra.mxu0 0
        %724 = vmatprep.subr.bf16.mxu0 0
        %725 = vmatpush1.bf16.msra.mxu0 0
        %726 = vmatprep.subr.bf16.mxu0 0
        %727 = vmatpush1.bf16.msra.mxu0 0
        %728 = vmatprep.subr.bf16.mxu0 0
        %729 = vmatpush1.bf16.msra.mxu0 0
        %730 = vmatprep.subr.bf16.mxu0 0
        %731 = vmatpush1.bf16.msra.mxu0 0
        %732 = vmatprep.subr.bf16.mxu0 0
        %733 = vmatpush1.bf16.msra.mxu0 0
        %734 = vmatprep.subr.bf16.mxu0 0
        %735 = vmatpush1.bf16.msra.mxu0 %v719
        %736 = vmatprep.subr.bf16.mxu0 0
        %737 = vmatpush1.bf16.msra.mxu0 %v718
        %738 = vmatprep.subr.bf16.mxu0 0
        %739 = vmatpush2.bf16.msra.mxu0 0
        %740 = vmatprep.subr.bf16.mxu0 0
        %741 = vmatpush2.bf16.msra.mxu0 0
        %742 = vmatprep.subr.bf16.mxu0 0
        %743 = vmatpush2.bf16.msra.mxu0 0
        %744 = vmatprep.subr.bf16.mxu0 0
        %745 = vmatpush2.bf16.msra.mxu0 0
        %746 = vmatprep.subr.bf16.mxu0 0
        %747 = vmatpush2.bf16.msra.mxu0 0
        %748 = vmatprep.subr.bf16.mxu0 0
        %749 = vmatpush2.bf16.msra.mxu0 0
        %750 = vmatprep.subr.bf16.mxu0 0
        %751 = vmatpush2.bf16.msra.mxu0 0
        %752 = vmatprep.subr.bf16.mxu0 0
        %753 = vmatpush2.bf16.msra.mxu0 0
        %754 = vmatprep.mubr.bf16.mxu0 0
        %755 = vmatmul.mubr.bf16.gmra.mxu0 %v622
        %v756 = vpop.f32.mrf.mxu0
        %v757 = vadd.f32 0.0, %v756
        %v758 = vpop.f32.mrf.mxu0
        %v759 = vpop.f32.mrf.mxu0
        %v760 = vadd.f32 0.0, %v759
        %v761 = vpop.f32.mrf.mxu0
        %762 = vmatprep.mubr.bf16.mxu0 0
        %763 = vmatmul.mubr.bf16.gmra.mxu0 %v625
        %v764 = vpop.f32.mrf.mxu0
        %v765 = vadd.f32 0.0, %v764
        %v766 = vpop.f32.mrf.mxu0
        %v767 = vpop.f32.mrf.mxu0
        %v768 = vadd.f32 0.0, %v767
        %v769 = vpop.f32.mrf.mxu0
        %770 = vmatprep.mubr.bf16.mxu0 0
        %771 = vmatmul.mubr.bf16.gmra.mxu0 %v628
        %v772 = vpop.f32.mrf.mxu0
        %v773 = vadd.f32 0.0, %v772
        %v774 = vpop.f32.mrf.mxu0
        %v775 = vpop.f32.mrf.mxu0
        %v776 = vadd.f32 0.0, %v775
        %v777 = vpop.f32.mrf.mxu0
        %778 = vmatprep.mubr.bf16.mxu0 0
        %779 = vmatmul.mubr.bf16.gmra.mxu0 %v631
        %v780 = vpop.f32.mrf.mxu0
        %v781 = vadd.f32 0.0, %v780
        %v782 = vpop.f32.mrf.mxu0
        %v783 = vpop.f32.mrf.mxu0
        %v784 = vadd.f32 0.0, %v783
        %v785 = vpop.f32.mrf.mxu0
        %786 = vdwg.mxu0
        %787 = vst.msk [vmem:[#allocation3] sm:$0xff] %vm620, %v757
        %788 = vst.msk [vmem:[#allocation3 + $0x8] sm:$0xff] %vm620, %v760
        %789 = vst.msk [vmem:[#allocation3 + $0x10] sm:$0xff] %vm620, %v765
        %790 = vst.msk [vmem:[#allocation3 + $0x18] sm:$0xff] %vm620, %v768
        %791 = vst.msk [vmem:[#allocation3 + $0x20] sm:$0xff] %vm620, %v773
        %792 = vst.msk [vmem:[#allocation3 + $0x28] sm:$0xff] %vm620, %v776
        %793 = vst.msk [vmem:[#allocation3 + $0x30] sm:$0xff] %vm620, %v781
        %794 = vst.msk [vmem:[#allocation3 + $0x38] sm:$0xff] %vm620, %v784
        %v795 = vld [vmem:[%s8] sm:$0xf]
        %v796 = vld [vmem:[%s8 + $0x4] sm:$0xf]
        %v797 = vld [vmem:[%s8 + $0x8] sm:$0xf]
        %v798 = vld [vmem:[%s8 + $0xc] sm:$0xf]
        %v803 = vunpack.c.l.b16 %v795
        %v804 = vunpack.c.l.b16 %v796
        %v805 = vunpack.c.l.b16 %v797
        %v806 = vunpack.c.l.b16 %v798
        %v807 = vpack.c.b16 %v804, %v803
        %v808 = vpack.c.b16 %v806, %v805
        %811 = vmatprep.subr.bf16.mxu0 0
        %812 = vmatpush1.bf16.msra.mxu0 0
        %813 = vmatprep.subr.bf16.mxu0 0
        %814 = vmatpush1.bf16.msra.mxu0 0
        %815 = vmatprep.subr.bf16.mxu0 0
        %816 = vmatpush1.bf16.msra.mxu0 0
        %817 = vmatprep.subr.bf16.mxu0 0
        %818 = vmatpush1.bf16.msra.mxu0 0
        %819 = vmatprep.subr.bf16.mxu0 0
        %820 = vmatpush1.bf16.msra.mxu0 0
        %821 = vmatprep.subr.bf16.mxu0 0
        %822 = vmatpush1.bf16.msra.mxu0 0
        %823 = vmatprep.subr.bf16.mxu0 0
        %824 = vmatpush1.bf16.msra.mxu0 %v808
        %825 = vmatprep.subr.bf16.mxu0 0
        %826 = vmatpush1.bf16.msra.mxu0 %v807
        %827 = vmatprep.subr.bf16.mxu0 0
        %828 = vmatpush2.bf16.msra.mxu0 0
        %829 = vmatprep.subr.bf16.mxu0 0
        %830 = vmatpush2.bf16.msra.mxu0 0
        %831 = vmatprep.subr.bf16.mxu0 0
        %832 = vmatpush2.bf16.msra.mxu0 0
        %833 = vmatprep.subr.bf16.mxu0 0
        %834 = vmatpush2.bf16.msra.mxu0 0
        %835 = vmatprep.subr.bf16.mxu0 0
        %836 = vmatpush2.bf16.msra.mxu0 0
        %837 = vmatprep.subr.bf16.mxu0 0
        %838 = vmatpush2.bf16.msra.mxu0 0
        %839 = vmatprep.subr.bf16.mxu0 0
        %840 = vmatpush2.bf16.msra.mxu0 0
        %841 = vmatprep.subr.bf16.mxu0 0
        %842 = vmatpush2.bf16.msra.mxu0 0
        %843 = vmatprep.mubr.bf16.mxu0 0
        %844 = vmatmul.mubr.bf16.gmra.mxu0 %v622
        %v845 = vpop.f32.mrf.mxu0
        %v846 = vadd.f32 0.0, %v845
        %v847 = vpop.f32.mrf.mxu0
        %v848 = vpop.f32.mrf.mxu0
        %v849 = vadd.f32 0.0, %v848
        %v850 = vpop.f32.mrf.mxu0
        %851 = vmatprep.mubr.bf16.mxu0 0
        %852 = vmatmul.mubr.bf16.gmra.mxu0 %v625
        %v853 = vpop.f32.mrf.mxu0
        %v854 = vadd.f32 0.0, %v853
        %v855 = vpop.f32.mrf.mxu0
        %v856 = vpop.f32.mrf.mxu0
        %v857 = vadd.f32 0.0, %v856
        %v858 = vpop.f32.mrf.mxu0
        %859 = vmatprep.mubr.bf16.mxu0 0
        %860 = vmatmul.mubr.bf16.gmra.mxu0 %v628
        %v861 = vpop.f32.mrf.mxu0
        %v862 = vadd.f32 0.0, %v861
        %v863 = vpop.f32.mrf.mxu0
        %v864 = vpop.f32.mrf.mxu0
        %v865 = vadd.f32 0.0, %v864
        %v866 = vpop.f32.mrf.mxu0
        %867 = vmatprep.mubr.bf16.mxu0 0
        %868 = vmatmul.mubr.bf16.gmra.mxu0 %v631
        %v869 = vpop.f32.mrf.mxu0
        %v870 = vadd.f32 0.0, %v869
        %v871 = vpop.f32.mrf.mxu0
        %v872 = vpop.f32.mrf.mxu0
        %v873 = vadd.f32 0.0, %v872
        %v874 = vpop.f32.mrf.mxu0
        %875 = vdwg.mxu0
        %876 = vst.msk [vmem:[#allocation4] sm:$0xff] %vm620, %v846
        %877 = vst.msk [vmem:[#allocation4 + $0x8] sm:$0xff] %vm620, %v849
        %878 = vst.msk [vmem:[#allocation4 + $0x10] sm:$0xff] %vm620, %v854
        %879 = vst.msk [vmem:[#allocation4 + $0x18] sm:$0xff] %vm620, %v857
        %880 = vst.msk [vmem:[#allocation4 + $0x20] sm:$0xff] %vm620, %v862
        %881 = vst.msk [vmem:[#allocation4 + $0x28] sm:$0xff] %vm620, %v865
        %882 = vst.msk [vmem:[#allocation4 + $0x30] sm:$0xff] %vm620, %v870
        %883 = vst.msk [vmem:[#allocation4 + $0x38] sm:$0xff] %vm620, %v873
        %884 = vst.msk [vmem:[#allocation5] sm:$0xff] %vm620, 0.0
        %885 = vst.msk [vmem:[#allocation5 + $0x8] sm:$0xff] %vm620, 0.0
        %886 = vst.msk [vmem:[#allocation5 + $0x10] sm:$0xff] %vm620, 0.0
        %887 = vst.msk [vmem:[#allocation5 + $0x18] sm:$0xff] %vm620, 0.0
        %888 = vst.msk [vmem:[#allocation5 + $0x20] sm:$0xff] %vm620, 0.0
        %889 = vst.msk [vmem:[#allocation5 + $0x28] sm:$0xff] %vm620, 0.0
        %890 = vst.msk [vmem:[#allocation5 + $0x30] sm:$0xff] %vm620, 0.0
        %891 = vst.msk [vmem:[#allocation5 + $0x38] sm:$0xff] %vm620, 0.0
        %892 = vst.msk [vmem:[#allocation6] sm:$0xff] %vm620, 0.0
        %893 = vst.msk [vmem:[#allocation6 + $0x8] sm:$0xff] %vm620, 0.0
        %894 = vst.msk [vmem:[#allocation6 + $0x10] sm:$0xff] %vm620, 0.0
        %895 = vst.msk [vmem:[#allocation6 + $0x18] sm:$0xff] %vm620, 0.0
        %896 = vst.msk [vmem:[#allocation6 + $0x20] sm:$0xff] %vm620, 0.0
        %897 = vst.msk [vmem:[#allocation6 + $0x28] sm:$0xff] %vm620, 0.0
        %898 = vst.msk [vmem:[#allocation6 + $0x30] sm:$0xff] %vm620, 0.0
        %899 = vst.msk [vmem:[#allocation6 + $0x38] sm:$0xff] %vm620, 0.0
      $region88: #{tpu_custom_call.1} parent=83 // pred_fallthru
        _
      %s900 = smul.u32 %s41, 128
      loop: start=0, step=1, limit=128
      $region89: #{tpu_custom_call.1} parent=83 // loop_pre_header
        _
      $region90: #{tpu_custom_call.1} parent=83 // loop_header
        %s902 = sphi 0, %s906
        %p903 = scmp.ge.s32.totalorder %s902, 128
      $region91: #{tpu_custom_call.1} parent=83 // loop_header_branch
        %905 = sbr.rel (%p903) target = $region95
      $region92: #{tpu_custom_call.1} parent=83 // loop_body
        %s907 = sadd.s32 %s900, %s902
        %s908 = sld [smem:[#allocation13 + %s907]]
        %s909 = sld [smem:[#allocation14 + %s907]]
        %s910 = scalar_lea.vmem [#allocation3], %s908
        %v911 = vld [vmem:[%s910] sm:$0x1]
        %s912 = scalar_lea.vmem [#allocation7], %s902
        %vm913 = vcmask 253952
        %914 = vst.msk [vmem:[%s912] sm:$0x1] %vm913, %v911
        %s915 = scalar_lea.vmem [#allocation2], %s909
        %v916 = vld [vmem:[%s915] sm:$0x1]
        %s917 = scalar_lea.vmem [#allocation8], %s902
        %918 = vst.msk [vmem:[%s917] sm:$0x1] %vm913, %v916
        %s919 = scalar_lea.vmem [#allocation4], %s908
        %v920 = vld [vmem:[%s919] sm:$0x1]
        %s921 = scalar_lea.vmem [#allocation9], %s902
        %922 = vst.msk [vmem:[%s921] sm:$0x1] %vm913, %v920
      $region93: #{tpu_custom_call.1} parent=83 // loop_footer
        %s906 = sadd.s32 1, %s902
      $region94: #{tpu_custom_call.1} parent=83 // loop_footer_branch
        %901 = sbr.rel target = $region90
      $region95: #{tpu_custom_call.1} parent=83 // loop_exit
        _
      %v923 = vld [vmem:[%s554] sm:$0xff]
      %v924 = vld [vmem:[%s554 + $0x8] sm:$0xff]
      %v925 = vld [vmem:[%s554 + $0x10] sm:$0xff]
      %v926 = vld [vmem:[%s554 + $0x18] sm:$0xff]
      %v927 = vld [vmem:[%s554 + $0x20] sm:$0xff]
      %v928 = vld [vmem:[%s554 + $0x28] sm:$0xff]
      %v929 = vld [vmem:[%s554 + $0x30] sm:$0xff]
      %v930 = vld [vmem:[%s554 + $0x38] sm:$0xff]
      %v931 = vld [vmem:[%s554 + $0x40] sm:$0xff]
      %v932 = vld [vmem:[%s554 + $0x48] sm:$0xff]
      %v933 = vld [vmem:[%s554 + $0x50] sm:$0xff]
      %v934 = vld [vmem:[%s554 + $0x58] sm:$0xff]
      %v935 = vld [vmem:[%s554 + $0x60] sm:$0xff]
      %v936 = vld [vmem:[%s554 + $0x68] sm:$0xff]
      %v937 = vld [vmem:[%s554 + $0x70] sm:$0xff]
      %v938 = vld [vmem:[%s554 + $0x78] sm:$0xff]
      %v939 = vlaneseq
      %v940 = vshrl.u32 %v939, 7
      %v941 = vsub.s32 2, %v940
      %v942 = vrot.slane %v563, %v941
      %v943 = vmul.f32 %v923, %v942
      %v944 = vmul.f32 %v924, %v942
      %v945 = vmul.f32 %v925, %v942
      %v946 = vmul.f32 %v926, %v942
      %v947 = vmul.f32 %v927, %v942
      %v948 = vmul.f32 %v928, %v942
      %v949 = vmul.f32 %v929, %v942
      %v950 = vmul.f32 %v930, %v942
      %v951 = vmul.f32 %v931, %v942
      %v952 = vmul.f32 %v932, %v942
      %v953 = vmul.f32 %v933, %v942
      %v954 = vmul.f32 %v934, %v942
      %v955 = vmul.f32 %v935, %v942
      %v956 = vmul.f32 %v936, %v942
      %v957 = vmul.f32 %v937, %v942
      %v958 = vmul.f32 %v938, %v942
      %v959 = vlaneseq
      %v960 = vshrl.u32 %v959, 7
      %v961 = vsub.s32 3, %v960
      %v962 = vrot.slane %v563, %v961
      %v963 = vadd.f32 %v943, %v962
      %v964 = vadd.f32 %v944, %v962
      %v965 = vadd.f32 %v945, %v962
      %v966 = vadd.f32 %v946, %v962
      %v967 = vadd.f32 %v947, %v962
      %v968 = vadd.f32 %v948, %v962
      %v969 = vadd.f32 %v949, %v962
      %v970 = vadd.f32 %v950, %v962
      %v971 = vadd.f32 %v951, %v962
      %v972 = vadd.f32 %v952, %v962
      %v973 = vadd.f32 %v953, %v962
      %v974 = vadd.f32 %v954, %v962
      %v975 = vadd.f32 %v955, %v962
      %v976 = vadd.f32 %v956, %v962
      %v977 = vadd.f32 %v957, %v962
      %v978 = vadd.f32 %v958, %v962
      %v979 = vpack.c.bf16 %v964, %v963
      %v980 = vpack.c.bf16 %v966, %v965
      %v981 = vpack.c.bf16 %v968, %v967
      %v982 = vpack.c.bf16 %v970, %v969
      %v983 = vpack.c.bf16 %v972, %v971
      %v984 = vpack.c.bf16 %v974, %v973
      %v985 = vpack.c.bf16 %v976, %v975
      %v986 = vpack.c.bf16 %v978, %v977
      %v987 = vld [vmem:[%s9] sm:$0xf]
      %v988 = vld [vmem:[%s9 + $0x4] sm:$0xf]
      %v989 = vld [vmem:[%s9 + $0x8] sm:$0xf]
      %v990 = vld [vmem:[%s9 + $0xc] sm:$0xf]
      %v995 = vunpack.c.l.b16 %v987
      %v996 = vunpack.c.l.b16 %v988
      %v997 = vunpack.c.l.b16 %v989
      %v998 = vunpack.c.l.b16 %v990
      %v999 = vpack.c.b16 %v996, %v995
      %v1000 = vpack.c.b16 %v998, %v997
      %vm1003 = vcmask 261120
      %v1005 = vsel %vm1003, %v979, 0
      %v1008 = vsel %vm1003, %v980, 0
      %v1011 = vsel %vm1003, %v981, 0
      %v1014 = vsel %vm1003, %v982, 0
      %v1017 = vsel %vm1003, %v983, 0
      %v1020 = vsel %vm1003, %v984, 0
      %v1023 = vsel %vm1003, %v985, 0
      %v1026 = vsel %vm1003, %v986, 0
      %1028 = vmatprep.subr.bf16.mxu0 0
      %1029 = vmatpush1.bf16.msra.mxu0 0
      %1030 = vmatprep.subr.bf16.mxu0 0
      %1031 = vmatpush1.bf16.msra.mxu0 0
      %1032 = vmatprep.subr.bf16.mxu0 0
      %1033 = vmatpush1.bf16.msra.mxu0 0
      %1034 = vmatprep.subr.bf16.mxu0 0
      %1035 = vmatpush1.bf16.msra.mxu0 0
      %1036 = vmatprep.subr.bf16.mxu0 0
      %1037 = vmatpush1.bf16.msra.mxu0 0
      %1038 = vmatprep.subr.bf16.mxu0 0
      %1039 = vmatpush1.bf16.msra.mxu0 0
      %1040 = vmatprep.subr.bf16.mxu0 0
      %1041 = vmatpush1.bf16.msra.mxu0 %v1000
      %1042 = vmatprep.subr.bf16.mxu0 0
      %1043 = vmatpush1.bf16.msra.mxu0 %v999
      %1044 = vmatprep.subr.bf16.mxu0 0
      %1045 = vmatpush2.bf16.msra.mxu0 0
      %1046 = vmatprep.subr.bf16.mxu0 0
      %1047 = vmatpush2.bf16.msra.mxu0 0
      %1048 = vmatprep.subr.bf16.mxu0 0
      %1049 = vmatpush2.bf16.msra.mxu0 0
      %1050 = vmatprep.subr.bf16.mxu0 0
      %1051 = vmatpush2.bf16.msra.mxu0 0
      %1052 = vmatprep.subr.bf16.mxu0 0
      %1053 = vmatpush2.bf16.msra.mxu0 0
      %1054 = vmatprep.subr.bf16.mxu0 0
      %1055 = vmatpush2.bf16.msra.mxu0 0
      %1056 = vmatprep.subr.bf16.mxu0 0
      %1057 = vmatpush2.bf16.msra.mxu0 0
      %1058 = vmatprep.subr.bf16.mxu0 0
      %1059 = vmatpush2.bf16.msra.mxu0 0
      %1060 = vmatprep.mubr.bf16.mxu0 0
      %1061 = vmatmul.mubr.bf16.gmra.mxu0 %v1005
      %v1062 = vpop.f32.mrf.mxu0
      %v1063 = vadd.f32 0.0, %v1062
      %v1064 = vpop.f32.mrf.mxu0
      %v1065 = vpop.f32.mrf.mxu0
      %v1066 = vadd.f32 0.0, %v1065
      %v1067 = vpop.f32.mrf.mxu0
      %1068 = vmatprep.mubr.bf16.mxu0 0
      %1069 = vmatmul.mubr.bf16.gmra.mxu0 %v1008
      %v1070 = vpop.f32.mrf.mxu0
      %v1071 = vadd.f32 0.0, %v1070
      %v1072 = vpop.f32.mrf.mxu0
      %v1073 = vpop.f32.mrf.mxu0
      %v1074 = vadd.f32 0.0, %v1073
      %v1075 = vpop.f32.mrf.mxu0
      %1076 = vmatprep.mubr.bf16.mxu0 0
      %1077 = vmatmul.mubr.bf16.gmra.mxu0 %v1011
      %v1078 = vpop.f32.mrf.mxu0
      %v1079 = vadd.f32 0.0, %v1078
      %v1080 = vpop.f32.mrf.mxu0
      %v1081 = vpop.f32.mrf.mxu0
      %v1082 = vadd.f32 0.0, %v1081
      %v1083 = vpop.f32.mrf.mxu0
      %1084 = vmatprep.mubr.bf16.mxu0 0
      %1085 = vmatmul.mubr.bf16.gmra.mxu0 %v1014
      %v1086 = vpop.f32.mrf.mxu0
      %v1087 = vadd.f32 0.0, %v1086
      %v1088 = vpop.f32.mrf.mxu0
      %v1089 = vpop.f32.mrf.mxu0
      %v1090 = vadd.f32 0.0, %v1089
      %v1091 = vpop.f32.mrf.mxu0
      %1092 = vmatprep.mubr.bf16.mxu0 0
      %1093 = vmatmul.mubr.bf16.gmra.mxu0 %v1017
      %v1094 = vpop.f32.mrf.mxu0
      %v1095 = vadd.f32 0.0, %v1094
      %v1096 = vpop.f32.mrf.mxu0
      %v1097 = vpop.f32.mrf.mxu0
      %v1098 = vadd.f32 0.0, %v1097
      %v1099 = vpop.f32.mrf.mxu0
      %1100 = vmatprep.mubr.bf16.mxu0 0
      %1101 = vmatmul.mubr.bf16.gmra.mxu0 %v1020
      %v1102 = vpop.f32.mrf.mxu0
      %v1103 = vadd.f32 0.0, %v1102
      %v1104 = vpop.f32.mrf.mxu0
      %v1105 = vpop.f32.mrf.mxu0
      %v1106 = vadd.f32 0.0, %v1105
      %v1107 = vpop.f32.mrf.mxu0
      %1108 = vmatprep.mubr.bf16.mxu0 0
      %1109 = vmatmul.mubr.bf16.gmra.mxu0 %v1023
      %v1110 = vpop.f32.mrf.mxu0
      %v1111 = vadd.f32 0.0, %v1110
      %v1112 = vpop.f32.mrf.mxu0
      %v1113 = vpop.f32.mrf.mxu0
      %v1114 = vadd.f32 0.0, %v1113
      %v1115 = vpop.f32.mrf.mxu0
      %1116 = vmatprep.mubr.bf16.mxu0 0
      %1117 = vmatmul.mubr.bf16.gmra.mxu0 %v1026
      %v1118 = vpop.f32.mrf.mxu0
      %v1119 = vadd.f32 0.0, %v1118
      %v1120 = vpop.f32.mrf.mxu0
      %v1121 = vpop.f32.mrf.mxu0
      %v1122 = vadd.f32 0.0, %v1121
      %v1123 = vpop.f32.mrf.mxu0
      %1124 = vdwg.mxu0
      %v1125 = vld [vmem:[#allocation7] sm:$0xff]
      %v1126 = vld [vmem:[#allocation7 + $0x8] sm:$0xff]
      %v1127 = vld [vmem:[#allocation7 + $0x10] sm:$0xff]
      %v1128 = vld [vmem:[#allocation7 + $0x18] sm:$0xff]
      %v1129 = vld [vmem:[#allocation7 + $0x20] sm:$0xff]
      %v1130 = vld [vmem:[#allocation7 + $0x28] sm:$0xff]
      %v1131 = vld [vmem:[#allocation7 + $0x30] sm:$0xff]
      %v1132 = vld [vmem:[#allocation7 + $0x38] sm:$0xff]
      %v1133 = vld [vmem:[#allocation7 + $0x40] sm:$0xff]
      %v1134 = vld [vmem:[#allocation7 + $0x48] sm:$0xff]
      %v1135 = vld [vmem:[#allocation7 + $0x50] sm:$0xff]
      %v1136 = vld [vmem:[#allocation7 + $0x58] sm:$0xff]
      %v1137 = vld [vmem:[#allocation7 + $0x60] sm:$0xff]
      %v1138 = vld [vmem:[#allocation7 + $0x68] sm:$0xff]
      %v1139 = vld [vmem:[#allocation7 + $0x70] sm:$0xff]
      %v1140 = vld [vmem:[#allocation7 + $0x78] sm:$0xff]
      %v1141 = vld [vmem:[#allocation8] sm:$0xff]
      %v1142 = vld [vmem:[#allocation8 + $0x8] sm:$0xff]
      %v1143 = vld [vmem:[#allocation8 + $0x10] sm:$0xff]
      %v1144 = vld [vmem:[#allocation8 + $0x18] sm:$0xff]
      %v1145 = vld [vmem:[#allocation8 + $0x20] sm:$0xff]
      %v1146 = vld [vmem:[#allocation8 + $0x28] sm:$0xff]
      %v1147 = vld [vmem:[#allocation8 + $0x30] sm:$0xff]
      %v1148 = vld [vmem:[#allocation8 + $0x38] sm:$0xff]
      %v1149 = vld [vmem:[#allocation8 + $0x40] sm:$0xff]
      %v1150 = vld [vmem:[#allocation8 + $0x48] sm:$0xff]
      %v1151 = vld [vmem:[#allocation8 + $0x50] sm:$0xff]
      %v1152 = vld [vmem:[#allocation8 + $0x58] sm:$0xff]
      %v1153 = vld [vmem:[#allocation8 + $0x60] sm:$0xff]
      %v1154 = vld [vmem:[#allocation8 + $0x68] sm:$0xff]
      %v1155 = vld [vmem:[#allocation8 + $0x70] sm:$0xff]
      %v1156 = vld [vmem:[#allocation8 + $0x78] sm:$0xff]
      %v1157 = vmul.f32 %v1125, %v1141
      %v1158 = vmul.f32 %v1126, %v1142
      %v1159 = vmul.f32 %v1127, %v1143
      %v1160 = vmul.f32 %v1128, %v1144
      %v1161 = vmul.f32 %v1129, %v1145
      %v1162 = vmul.f32 %v1130, %v1146
      %v1163 = vmul.f32 %v1131, %v1147
      %v1164 = vmul.f32 %v1132, %v1148
      %v1165 = vmul.f32 %v1133, %v1149
      %v1166 = vmul.f32 %v1134, %v1150
      %v1167 = vmul.f32 %v1135, %v1151
      %v1168 = vmul.f32 %v1136, %v1152
      %v1169 = vmul.f32 %v1137, %v1153
      %v1170 = vmul.f32 %v1138, %v1154
      %v1171 = vmul.f32 %v1139, %v1155
      %v1172 = vmul.f32 %v1140, %v1156
      %v1173 = vmul.f32 %v1157, 0.35355338
      %v1174 = vmul.f32 %v1158, 0.35355338
      %v1175 = vmul.f32 %v1159, 0.35355338
      %v1176 = vmul.f32 %v1160, 0.35355338
      %v1177 = vmul.f32 %v1161, 0.35355338
      %v1178 = vmul.f32 %v1162, 0.35355338
      %v1179 = vmul.f32 %v1163, 0.35355338
      %v1180 = vmul.f32 %v1164, 0.35355338
      %v1181 = vmul.f32 %v1165, 0.35355338
      %v1182 = vmul.f32 %v1166, 0.35355338
      %v1183 = vmul.f32 %v1167, 0.35355338
      %v1184 = vmul.f32 %v1168, 0.35355338
      %v1185 = vmul.f32 %v1169, 0.35355338
      %v1186 = vmul.f32 %v1170, 0.35355338
      %v1187 = vmul.f32 %v1171, 0.35355338
      %v1188 = vmul.f32 %v1172, 0.35355338
      %v1189 = vmax.f32 %v1173, -5.0
      %v1190 = vmax.f32 %v1174, -5.0
      %v1191 = vmax.f32 %v1175, -5.0
      %v1192 = vmax.f32 %v1176, -5.0
      %v1193 = vmax.f32 %v1177, -5.0
      %v1194 = vmax.f32 %v1178, -5.0
      %v1195 = vmax.f32 %v1179, -5.0
      %v1196 = vmax.f32 %v1180, -5.0
      %v1197 = vmax.f32 %v1181, -5.0
      %v1198 = vmax.f32 %v1182, -5.0
      %v1199 = vmax.f32 %v1183, -5.0
      %v1200 = vmax.f32 %v1184, -5.0
      %v1201 = vmax.f32 %v1185, -5.0
      %v1202 = vmax.f32 %v1186, -5.0
      %v1203 = vmax.f32 %v1187, -5.0
      %v1204 = vmax.f32 %v1188, -5.0
      %v1205 = vmin.f32 %v1189, 5.0
      %v1206 = vmin.f32 %v1190, 5.0
      %v1207 = vmin.f32 %v1191, 5.0
      %v1208 = vmin.f32 %v1192, 5.0
      %v1209 = vmin.f32 %v1193, 5.0
      %v1210 = vmin.f32 %v1194, 5.0
      %v1211 = vmin.f32 %v1195, 5.0
      %v1212 = vmin.f32 %v1196, 5.0
      %v1213 = vmin.f32 %v1197, 5.0
      %v1214 = vmin.f32 %v1198, 5.0
      %v1215 = vmin.f32 %v1199, 5.0
      %v1216 = vmin.f32 %v1200, 5.0
      %v1217 = vmin.f32 %v1201, 5.0
      %v1218 = vmin.f32 %v1202, 5.0
      %v1219 = vmin.f32 %v1203, 5.0
      %v1220 = vmin.f32 %v1204, 5.0
      %v1221 = vmul.f32 %v1205, %v1063
      %v1222 = vmul.f32 %v1206, %v1066
      %v1223 = vmul.f32 %v1207, %v1071
      %v1224 = vmul.f32 %v1208, %v1074
      %v1225 = vmul.f32 %v1209, %v1079
      %v1226 = vmul.f32 %v1210, %v1082
      %v1227 = vmul.f32 %v1211, %v1087
      %v1228 = vmul.f32 %v1212, %v1090
      %v1229 = vmul.f32 %v1213, %v1095
      %v1230 = vmul.f32 %v1214, %v1098
      %v1231 = vmul.f32 %v1215, %v1103
      %v1232 = vmul.f32 %v1216, %v1106
      %v1233 = vmul.f32 %v1217, %v1111
      %v1234 = vmul.f32 %v1218, %v1114
      %v1235 = vmul.f32 %v1219, %v1119
      %v1236 = vmul.f32 %v1220, %v1122
      %v1237 = vpack.c.bf16 %v1222, %v1221
      %v1238 = vpack.c.bf16 %v1224, %v1223
      %v1239 = vpack.c.bf16 %v1226, %v1225
      %v1240 = vpack.c.bf16 %v1228, %v1227
      %v1241 = vpack.c.bf16 %v1230, %v1229
      %v1242 = vpack.c.bf16 %v1232, %v1231
      %v1243 = vpack.c.bf16 %v1234, %v1233
      %v1244 = vpack.c.bf16 %v1236, %v1235
      %v1245 = vld [vmem:[%s12] sm:$0xf]
      %v1246 = vld [vmem:[%s12 + $0x4] sm:$0xf]
      %v1247 = vld [vmem:[%s12 + $0x8] sm:$0xf]
      %v1248 = vld [vmem:[%s12 + $0xc] sm:$0xf]
      %v1253 = vunpack.c.l.b16 %v1245
      %v1254 = vunpack.c.l.b16 %v1246
      %v1255 = vunpack.c.l.b16 %v1247
      %v1256 = vunpack.c.l.b16 %v1248
      %v1257 = vpack.c.b16 %v1254, %v1253
      %v1258 = vpack.c.b16 %v1256, %v1255
      %v1262 = vsel %vm1003, %v1237, 0
      %v1265 = vsel %vm1003, %v1238, 0
      %v1268 = vsel %vm1003, %v1239, 0
      %v1271 = vsel %vm1003, %v1240, 0
      %v1274 = vsel %vm1003, %v1241, 0
      %v1277 = vsel %vm1003, %v1242, 0
      %v1280 = vsel %vm1003, %v1243, 0
      %v1283 = vsel %vm1003, %v1244, 0
      %1285 = vmatprep.subr.bf16.mxu0 0
      %1286 = vmatpush1.bf16.msra.mxu0 0
      %1287 = vmatprep.subr.bf16.mxu0 0
      %1288 = vmatpush1.bf16.msra.mxu0 0
      %1289 = vmatprep.subr.bf16.mxu0 0
      %1290 = vmatpush1.bf16.msra.mxu0 0
      %1291 = vmatprep.subr.bf16.mxu0 0
      %1292 = vmatpush1.bf16.msra.mxu0 0
      %1293 = vmatprep.subr.bf16.mxu0 0
      %1294 = vmatpush1.bf16.msra.mxu0 0
      %1295 = vmatprep.subr.bf16.mxu0 0
      %1296 = vmatpush1.bf16.msra.mxu0 0
      %1297 = vmatprep.subr.bf16.mxu0 0
      %1298 = vmatpush1.bf16.msra.mxu0 %v1258
      %1299 = vmatprep.subr.bf16.mxu0 0
      %1300 = vmatpush1.bf16.msra.mxu0 %v1257
      %1301 = vmatprep.subr.bf16.mxu0 0
      %1302 = vmatpush2.bf16.msra.mxu0 0
      %1303 = vmatprep.subr.bf16.mxu0 0
      %1304 = vmatpush2.bf16.msra.mxu0 0
      %1305 = vmatprep.subr.bf16.mxu0 0
      %1306 = vmatpush2.bf16.msra.mxu0 0
      %1307 = vmatprep.subr.bf16.mxu0 0
      %1308 = vmatpush2.bf16.msra.mxu0 0
      %1309 = vmatprep.subr.bf16.mxu0 0
      %1310 = vmatpush2.bf16.msra.mxu0 0
      %1311 = vmatprep.subr.bf16.mxu0 0
      %1312 = vmatpush2.bf16.msra.mxu0 0
      %1313 = vmatprep.subr.bf16.mxu0 0
      %1314 = vmatpush2.bf16.msra.mxu0 0
      %1315 = vmatprep.subr.bf16.mxu0 0
      %1316 = vmatpush2.bf16.msra.mxu0 0
      %1317 = vmatprep.mubr.bf16.mxu0 0
      %1318 = vmatmul.mubr.bf16.gmra.mxu0 %v1262
      %v1319 = vpop.f32.mrf.mxu0
      %v1320 = vadd.f32 0.0, %v1319
      %v1321 = vpop.f32.mrf.mxu0
      %v1322 = vpop.f32.mrf.mxu0
      %v1323 = vadd.f32 0.0, %v1322
      %v1324 = vpop.f32.mrf.mxu0
      %1325 = vmatprep.mubr.bf16.mxu0 0
      %1326 = vmatmul.mubr.bf16.gmra.mxu0 %v1265
      %v1327 = vpop.f32.mrf.mxu0
      %v1328 = vadd.f32 0.0, %v1327
      %v1329 = vpop.f32.mrf.mxu0
      %v1330 = vpop.f32.mrf.mxu0
      %v1331 = vadd.f32 0.0, %v1330
      %v1332 = vpop.f32.mrf.mxu0
      %1333 = vmatprep.mubr.bf16.mxu0 0
      %1334 = vmatmul.mubr.bf16.gmra.mxu0 %v1268
      %v1335 = vpop.f32.mrf.mxu0
      %v1336 = vadd.f32 0.0, %v1335
      %v1337 = vpop.f32.mrf.mxu0
      %v1338 = vpop.f32.mrf.mxu0
      %v1339 = vadd.f32 0.0, %v1338
      %v1340 = vpop.f32.mrf.mxu0
      %1341 = vmatprep.mubr.bf16.mxu0 0
      %1342 = vmatmul.mubr.bf16.gmra.mxu0 %v1271
      %v1343 = vpop.f32.mrf.mxu0
      %v1344 = vadd.f32 0.0, %v1343
      %v1345 = vpop.f32.mrf.mxu0
      %v1346 = vpop.f32.mrf.mxu0
      %v1347 = vadd.f32 0.0, %v1346
      %v1348 = vpop.f32.mrf.mxu0
      %1349 = vmatprep.mubr.bf16.mxu0 0
      %1350 = vmatmul.mubr.bf16.gmra.mxu0 %v1274
      %v1351 = vpop.f32.mrf.mxu0
      %v1352 = vadd.f32 0.0, %v1351
      %v1353 = vpop.f32.mrf.mxu0
      %v1354 = vpop.f32.mrf.mxu0
      %v1355 = vadd.f32 0.0, %v1354
      %v1356 = vpop.f32.mrf.mxu0
      %1357 = vmatprep.mubr.bf16.mxu0 0
      %1358 = vmatmul.mubr.bf16.gmra.mxu0 %v1277
      %v1359 = vpop.f32.mrf.mxu0
      %v1360 = vadd.f32 0.0, %v1359
      %v1361 = vpop.f32.mrf.mxu0
      %v1362 = vpop.f32.mrf.mxu0
      %v1363 = vadd.f32 0.0, %v1362
      %v1364 = vpop.f32.mrf.mxu0
      %1365 = vmatprep.mubr.bf16.mxu0 0
      %1366 = vmatmul.mubr.bf16.gmra.mxu0 %v1280
      %v1367 = vpop.f32.mrf.mxu0
      %v1368 = vadd.f32 0.0, %v1367
      %v1369 = vpop.f32.mrf.mxu0
      %v1370 = vpop.f32.mrf.mxu0
      %v1371 = vadd.f32 0.0, %v1370
      %v1372 = vpop.f32.mrf.mxu0
      %1373 = vmatprep.mubr.bf16.mxu0 0
      %1374 = vmatmul.mubr.bf16.gmra.mxu0 %v1283
      %v1375 = vpop.f32.mrf.mxu0
      %v1376 = vadd.f32 0.0, %v1375
      %v1377 = vpop.f32.mrf.mxu0
      %v1378 = vpop.f32.mrf.mxu0
      %v1379 = vadd.f32 0.0, %v1378
      %v1380 = vpop.f32.mrf.mxu0
      %1381 = vdwg.mxu0
      %v1382 = vadd.f32 %v923, %v1320
      %v1383 = vadd.f32 %v924, %v1323
      %v1384 = vadd.f32 %v925, %v1328
      %v1385 = vadd.f32 %v926, %v1331
      %v1386 = vadd.f32 %v927, %v1336
      %v1387 = vadd.f32 %v928, %v1339
      %v1388 = vadd.f32 %v929, %v1344
      %v1389 = vadd.f32 %v930, %v1347
      %v1390 = vadd.f32 %v931, %v1352
      %v1391 = vadd.f32 %v932, %v1355
      %v1392 = vadd.f32 %v933, %v1360
      %v1393 = vadd.f32 %v934, %v1363
      %v1394 = vadd.f32 %v935, %v1368
      %v1395 = vadd.f32 %v936, %v1371
      %v1396 = vadd.f32 %v937, %v1376
      %v1397 = vadd.f32 %v938, %v1379
      %v1398 = vld [vmem:[%s13] sm:$0x1]
      %v1400 = vlaneseq
      %v1401 = vshrl.u32 %v1400, 7
      %v1402 = vsub.s32 0, %v1401
      %v1403 = vrot.slane %v1398, %v1402
      %v1405 = vadd.f32 %v1382, %v1403
      %v1406 = vadd.f32 %v1383, %v1403
      %v1407 = vadd.f32 %v1384, %v1403
      %v1408 = vadd.f32 %v1385, %v1403
      %v1409 = vadd.f32 %v1386, %v1403
      %v1410 = vadd.f32 %v1387, %v1403
      %v1411 = vadd.f32 %v1388, %v1403
      %v1412 = vadd.f32 %v1389, %v1403
      %v1413 = vadd.f32 %v1390, %v1403
      %v1414 = vadd.f32 %v1391, %v1403
      %v1415 = vadd.f32 %v1392, %v1403
      %v1416 = vadd.f32 %v1393, %v1403
      %v1417 = vadd.f32 %v1394, %v1403
      %v1418 = vadd.f32 %v1395, %v1403
      %v1419 = vadd.f32 %v1396, %v1403
      %v1420 = vadd.f32 %v1397, %v1403
      %v1421 = vlaneseq
      %v1422 = vshrl.u32 %v1421, 7
      %v1423 = vsub.s32 6, %v1422
      %v1424 = vrot.slane %v563, %v1423
      %v1425 = vmul.f32 %v1405, %v1424
      %v1426 = vmul.f32 %v1406, %v1424
      %v1427 = vmul.f32 %v1407, %v1424
      %v1428 = vmul.f32 %v1408, %v1424
      %v1429 = vmul.f32 %v1409, %v1424
      %v1430 = vmul.f32 %v1410, %v1424
      %v1431 = vmul.f32 %v1411, %v1424
      %v1432 = vmul.f32 %v1412, %v1424
      %v1433 = vmul.f32 %v1413, %v1424
      %v1434 = vmul.f32 %v1414, %v1424
      %v1435 = vmul.f32 %v1415, %v1424
      %v1436 = vmul.f32 %v1416, %v1424
      %v1437 = vmul.f32 %v1417, %v1424
      %v1438 = vmul.f32 %v1418, %v1424
      %v1439 = vmul.f32 %v1419, %v1424
      %v1440 = vmul.f32 %v1420, %v1424
      %v1441 = vlaneseq
      %v1442 = vshrl.u32 %v1441, 7
      %v1443 = vsub.s32 7, %v1442
      %v1444 = vrot.slane %v563, %v1443
      %v1445 = vadd.f32 %v1425, %v1444
      %v1446 = vadd.f32 %v1426, %v1444
      %v1447 = vadd.f32 %v1427, %v1444
      %v1448 = vadd.f32 %v1428, %v1444
      %v1449 = vadd.f32 %v1429, %v1444
      %v1450 = vadd.f32 %v1430, %v1444
      %v1451 = vadd.f32 %v1431, %v1444
      %v1452 = vadd.f32 %v1432, %v1444
      %v1453 = vadd.f32 %v1433, %v1444
      %v1454 = vadd.f32 %v1434, %v1444
      %v1455 = vadd.f32 %v1435, %v1444
      %v1456 = vadd.f32 %v1436, %v1444
      %v1457 = vadd.f32 %v1437, %v1444
      %v1458 = vadd.f32 %v1438, %v1444
      %v1459 = vadd.f32 %v1439, %v1444
      %v1460 = vadd.f32 %v1440, %v1444
      %v1461 = vpack.c.bf16 %v1446, %v1445
      %v1462 = vpack.c.bf16 %v1448, %v1447
      %v1463 = vpack.c.bf16 %v1450, %v1449
      %v1464 = vpack.c.bf16 %v1452, %v1451
      %v1465 = vpack.c.bf16 %v1454, %v1453
      %v1466 = vpack.c.bf16 %v1456, %v1455
      %v1467 = vpack.c.bf16 %v1458, %v1457
      %v1468 = vpack.c.bf16 %v1460, %v1459
      %v1469 = vld [vmem:[%s16] sm:$0xf]
      %v1470 = vld [vmem:[%s16 + $0x4] sm:$0xf]
      %v1471 = vld [vmem:[%s16 + $0x8] sm:$0xf]
      %v1472 = vld [vmem:[%s16 + $0xc] sm:$0xf]
      %v1477 = vunpack.c.l.b16 %v1469
      %v1478 = vunpack.c.l.b16 %v1470
      %v1479 = vunpack.c.l.b16 %v1471
      %v1480 = vunpack.c.l.b16 %v1472
      %v1481 = vpack.c.b16 %v1478, %v1477
      %v1482 = vpack.c.b16 %v1480, %v1479
      %v1486 = vsel %vm1003, %v1461, 0
      %v1489 = vsel %vm1003, %v1462, 0
      %v1492 = vsel %vm1003, %v1463, 0
      %v1495 = vsel %vm1003, %v1464, 0
      %v1498 = vsel %vm1003, %v1465, 0
      %v1501 = vsel %vm1003, %v1466, 0
      %v1504 = vsel %vm1003, %v1467, 0
      %v1507 = vsel %vm1003, %v1468, 0
      %1509 = vmatprep.subr.bf16.mxu0 0
      %1510 = vmatpush1.bf16.msra.mxu0 0
      %1511 = vmatprep.subr.bf16.mxu0 0
      %1512 = vmatpush1.bf16.msra.mxu0 0
      %1513 = vmatprep.subr.bf16.mxu0 0
      %1514 = vmatpush1.bf16.msra.mxu0 0
      %1515 = vmatprep.subr.bf16.mxu0 0
      %1516 = vmatpush1.bf16.msra.mxu0 0
      %1517 = vmatprep.subr.bf16.mxu0 0
      %1518 = vmatpush1.bf16.msra.mxu0 0
      %1519 = vmatprep.subr.bf16.mxu0 0
      %1520 = vmatpush1.bf16.msra.mxu0 0
      %1521 = vmatprep.subr.bf16.mxu0 0
      %1522 = vmatpush1.bf16.msra.mxu0 %v1482
      %1523 = vmatprep.subr.bf16.mxu0 0
      %1524 = vmatpush1.bf16.msra.mxu0 %v1481
      %1525 = vmatprep.subr.bf16.mxu0 0
      %1526 = vmatpush2.bf16.msra.mxu0 0
      %1527 = vmatprep.subr.bf16.mxu0 0
      %1528 = vmatpush2.bf16.msra.mxu0 0
      %1529 = vmatprep.subr.bf16.mxu0 0
      %1530 = vmatpush2.bf16.msra.mxu0 0
      %1531 = vmatprep.subr.bf16.mxu0 0
      %1532 = vmatpush2.bf16.msra.mxu0 0
      %1533 = vmatprep.subr.bf16.mxu0 0
      %1534 = vmatpush2.bf16.msra.mxu0 0
      %1535 = vmatprep.subr.bf16.mxu0 0
      %1536 = vmatpush2.bf16.msra.mxu0 0
      %1537 = vmatprep.subr.bf16.mxu0 0
      %1538 = vmatpush2.bf16.msra.mxu0 0
      %1539 = vmatprep.subr.bf16.mxu0 0
      %1540 = vmatpush2.bf16.msra.mxu0 0
      %1541 = vmatprep.mubr.bf16.mxu0 0
      %1542 = vmatmul.mubr.bf16.gmra.mxu0 %v1486
      %v1543 = vpop.f32.mrf.mxu0
      %v1544 = vadd.f32 0.0, %v1543
      %v1545 = vpop.f32.mrf.mxu0
      %v1546 = vpop.f32.mrf.mxu0
      %v1547 = vadd.f32 0.0, %v1546
      %v1548 = vpop.f32.mrf.mxu0
      %1549 = vmatprep.mubr.bf16.mxu0 0
      %1550 = vmatmul.mubr.bf16.gmra.mxu0 %v1489
      %v1551 = vpop.f32.mrf.mxu0
      %v1552 = vadd.f32 0.0, %v1551
      %v1553 = vpop.f32.mrf.mxu0
      %v1554 = vpop.f32.mrf.mxu0
      %v1555 = vadd.f32 0.0, %v1554
      %v1556 = vpop.f32.mrf.mxu0
      %1557 = vmatprep.mubr.bf16.mxu0 0
      %1558 = vmatmul.mubr.bf16.gmra.mxu0 %v1492
      %v1559 = vpop.f32.mrf.mxu0
      %v1560 = vadd.f32 0.0, %v1559
      %v1561 = vpop.f32.mrf.mxu0
      %v1562 = vpop.f32.mrf.mxu0
      %v1563 = vadd.f32 0.0, %v1562
      %v1564 = vpop.f32.mrf.mxu0
      %1565 = vmatprep.mubr.bf16.mxu0 0
      %1566 = vmatmul.mubr.bf16.gmra.mxu0 %v1495
      %v1567 = vpop.f32.mrf.mxu0
      %v1568 = vadd.f32 0.0, %v1567
      %v1569 = vpop.f32.mrf.mxu0
      %v1570 = vpop.f32.mrf.mxu0
      %v1571 = vadd.f32 0.0, %v1570
      %v1572 = vpop.f32.mrf.mxu0
      %1573 = vmatprep.mubr.bf16.mxu0 0
      %1574 = vmatmul.mubr.bf16.gmra.mxu0 %v1498
      %v1575 = vpop.f32.mrf.mxu0
      %v1576 = vadd.f32 0.0, %v1575
      %v1577 = vpop.f32.mrf.mxu0
      %v1578 = vpop.f32.mrf.mxu0
      %v1579 = vadd.f32 0.0, %v1578
      %v1580 = vpop.f32.mrf.mxu0
      %1581 = vmatprep.mubr.bf16.mxu0 0
      %1582 = vmatmul.mubr.bf16.gmra.mxu0 %v1501
      %v1583 = vpop.f32.mrf.mxu0
      %v1584 = vadd.f32 0.0, %v1583
      %v1585 = vpop.f32.mrf.mxu0
      %v1586 = vpop.f32.mrf.mxu0
      %v1587 = vadd.f32 0.0, %v1586
      %v1588 = vpop.f32.mrf.mxu0
      %1589 = vmatprep.mubr.bf16.mxu0 0
      %1590 = vmatmul.mubr.bf16.gmra.mxu0 %v1504
      %v1591 = vpop.f32.mrf.mxu0
      %v1592 = vadd.f32 0.0, %v1591
      %v1593 = vpop.f32.mrf.mxu0
      %v1594 = vpop.f32.mrf.mxu0
      %v1595 = vadd.f32 0.0, %v1594
      %v1596 = vpop.f32.mrf.mxu0
      %1597 = vmatprep.mubr.bf16.mxu0 0
      %1598 = vmatmul.mubr.bf16.gmra.mxu0 %v1507
      %v1599 = vpop.f32.mrf.mxu0
      %v1600 = vadd.f32 0.0, %v1599
      %v1601 = vpop.f32.mrf.mxu0
      %v1602 = vpop.f32.mrf.mxu0
      %v1603 = vadd.f32 0.0, %v1602
      %v1604 = vpop.f32.mrf.mxu0
      %1605 = vdwg.mxu0
      %v1606 = vxor.u32 %v1544, 2147483648
      %v1607 = vxor.u32 %v1547, 2147483648
      %v1608 = vxor.u32 %v1552, 2147483648
      %v1609 = vxor.u32 %v1555, 2147483648
      %v1610 = vxor.u32 %v1560, 2147483648
      %v1611 = vxor.u32 %v1563, 2147483648
      %v1612 = vxor.u32 %v1568, 2147483648
      %v1613 = vxor.u32 %v1571, 2147483648
      %v1614 = vxor.u32 %v1576, 2147483648
      %v1615 = vxor.u32 %v1579, 2147483648
      %v1616 = vxor.u32 %v1584, 2147483648
      %v1617 = vxor.u32 %v1587, 2147483648
      %v1618 = vxor.u32 %v1592, 2147483648
      %v1619 = vxor.u32 %v1595, 2147483648
      %v1620 = vxor.u32 %v1600, 2147483648
      %v1621 = vxor.u32 %v1603, 2147483648
      %v1622 = vmul.f32 %v1606, 1.442695
      %v1623 = vpow.pop %v1622
      %v1624 = vmul.f32 %v1607, 1.442695
      %v1625 = vpow.pop %v1624
      %v1626 = vmul.f32 %v1608, 1.442695
      %v1627 = vpow.pop %v1626
      %v1628 = vmul.f32 %v1609, 1.442695
      %v1629 = vpow.pop %v1628
      %v1630 = vmul.f32 %v1610, 1.442695
      %v1631 = vpow.pop %v1630
      %v1632 = vmul.f32 %v1611, 1.442695
      %v1633 = vpow.pop %v1632
      %v1634 = vmul.f32 %v1612, 1.442695
      %v1635 = vpow.pop %v1634
      %v1636 = vmul.f32 %v1613, 1.442695
      %v1637 = vpow.pop %v1636
      %v1638 = vmul.f32 %v1614, 1.442695
      %v1639 = vpow.pop %v1638
      %v1640 = vmul.f32 %v1615, 1.442695
      %v1641 = vpow.pop %v1640
      %v1642 = vmul.f32 %v1616, 1.442695
      %v1643 = vpow.pop %v1642
      %v1644 = vmul.f32 %v1617, 1.442695
      %v1645 = vpow.pop %v1644
      %v1646 = vmul.f32 %v1618, 1.442695
      %v1647 = vpow.pop %v1646
      %v1648 = vmul.f32 %v1619, 1.442695
      %v1649 = vpow.pop %v1648
      %v1650 = vmul.f32 %v1620, 1.442695
      %v1651 = vpow.pop %v1650
      %v1652 = vmul.f32 %v1621, 1.442695
      %v1653 = vpow.pop %v1652
      %v1654 = vadd.f32 %v1623, 1.0
      %v1655 = vadd.f32 %v1625, 1.0
      %v1656 = vadd.f32 %v1627, 1.0
      %v1657 = vadd.f32 %v1629, 1.0
      %v1658 = vadd.f32 %v1631, 1.0
      %v1659 = vadd.f32 %v1633, 1.0
      %v1660 = vadd.f32 %v1635, 1.0
      %v1661 = vadd.f32 %v1637, 1.0
      %v1662 = vadd.f32 %v1639, 1.0
      %v1663 = vadd.f32 %v1641, 1.0
      %v1664 = vadd.f32 %v1643, 1.0
      %v1665 = vadd.f32 %v1645, 1.0
      %v1666 = vadd.f32 %v1647, 1.0
      %v1667 = vadd.f32 %v1649, 1.0
      %v1668 = vadd.f32 %v1651, 1.0
      %v1669 = vadd.f32 %v1653, 1.0
      %v1670 = vrcp.pop %v1654
      %v1671 = vmul.f32 1.0, %v1670
      %v1672 = vrcp.pop %v1655
      %v1673 = vmul.f32 1.0, %v1672
      %v1674 = vrcp.pop %v1656
      %v1675 = vmul.f32 1.0, %v1674
      %v1676 = vrcp.pop %v1657
      %v1677 = vmul.f32 1.0, %v1676
      %v1678 = vrcp.pop %v1658
      %v1679 = vmul.f32 1.0, %v1678
      %v1680 = vrcp.pop %v1659
      %v1681 = vmul.f32 1.0, %v1680
      %v1682 = vrcp.pop %v1660
      %v1683 = vmul.f32 1.0, %v1682
      %v1684 = vrcp.pop %v1661
      %v1685 = vmul.f32 1.0, %v1684
      %v1686 = vrcp.pop %v1662
      %v1687 = vmul.f32 1.0, %v1686
      %v1688 = vrcp.pop %v1663
      %v1689 = vmul.f32 1.0, %v1688
      %v1690 = vrcp.pop %v1664
      %v1691 = vmul.f32 1.0, %v1690
      %v1692 = vrcp.pop %v1665
      %v1693 = vmul.f32 1.0, %v1692
      %v1694 = vrcp.pop %v1666
      %v1695 = vmul.f32 1.0, %v1694
      %v1696 = vrcp.pop %v1667
      %v1697 = vmul.f32 1.0, %v1696
      %v1698 = vrcp.pop %v1668
      %v1699 = vmul.f32 1.0, %v1698
      %v1700 = vrcp.pop %v1669
      %v1701 = vmul.f32 1.0, %v1700
      %v1702 = vmul.f32 %v1544, %v1671
      %v1703 = vmul.f32 %v1547, %v1673
      %v1704 = vmul.f32 %v1552, %v1675
      %v1705 = vmul.f32 %v1555, %v1677
      %v1706 = vmul.f32 %v1560, %v1679
      %v1707 = vmul.f32 %v1563, %v1681
      %v1708 = vmul.f32 %v1568, %v1683
      %v1709 = vmul.f32 %v1571, %v1685
      %v1710 = vmul.f32 %v1576, %v1687
      %v1711 = vmul.f32 %v1579, %v1689
      %v1712 = vmul.f32 %v1584, %v1691
      %v1713 = vmul.f32 %v1587, %v1693
      %v1714 = vmul.f32 %v1592, %v1695
      %v1715 = vmul.f32 %v1595, %v1697
      %v1716 = vmul.f32 %v1600, %v1699
      %v1717 = vmul.f32 %v1603, %v1701
      %v1718 = vpack.c.bf16 %v1703, %v1702
      %v1719 = vpack.c.bf16 %v1705, %v1704
      %v1720 = vpack.c.bf16 %v1707, %v1706
      %v1721 = vpack.c.bf16 %v1709, %v1708
      %v1722 = vpack.c.bf16 %v1711, %v1710
      %v1723 = vpack.c.bf16 %v1713, %v1712
      %v1724 = vpack.c.bf16 %v1715, %v1714
      %v1725 = vpack.c.bf16 %v1717, %v1716
      %v1726 = vld [vmem:[%s17] sm:$0xf]
      %v1727 = vld [vmem:[%s17 + $0x4] sm:$0xf]
      %v1728 = vld [vmem:[%s17 + $0x8] sm:$0xf]
      %v1729 = vld [vmem:[%s17 + $0xc] sm:$0xf]
      %v1730 = vld [vmem:[%s17 + $0x10] sm:$0xf]
      %v1731 = vld [vmem:[%s17 + $0x14] sm:$0xf]
      %v1732 = vld [vmem:[%s17 + $0x18] sm:$0xf]
      %v1733 = vld [vmem:[%s17 + $0x1c] sm:$0xf]
      %v1742 = vunpack.c.l.b16 %v1726
      %v1743 = vunpack.c.l.b16 %v1727
      %v1744 = vunpack.c.l.b16 %v1728
      %v1745 = vunpack.c.l.b16 %v1729
      %v1746 = vunpack.c.l.b16 %v1730
      %v1747 = vunpack.c.l.b16 %v1731
      %v1748 = vunpack.c.l.b16 %v1732
      %v1749 = vunpack.c.l.b16 %v1733
      %v1750 = vpack.c.b16 %v1743, %v1742
      %v1751 = vpack.c.b16 %v1745, %v1744
      %v1752 = vpack.c.b16 %v1747, %v1746
      %v1753 = vpack.c.b16 %v1749, %v1748
      %vm1758 = vcmask 523264
      %v1760 = vsel %vm1758, %v1718, 0
      %v1763 = vsel %vm1758, %v1719, 0
      %v1766 = vsel %vm1758, %v1720, 0
      %v1769 = vsel %vm1758, %v1721, 0
      %v1772 = vsel %vm1758, %v1722, 0
      %v1775 = vsel %vm1758, %v1723, 0
      %v1778 = vsel %vm1758, %v1724, 0
      %v1781 = vsel %vm1758, %v1725, 0
      %1783 = vmatprep.subr.bf16.mxu0 0
      %1784 = vmatpush1.bf16.msra.mxu0 0
      %1785 = vmatprep.subr.bf16.mxu0 0
      %1786 = vmatpush1.bf16.msra.mxu0 0
      %1787 = vmatprep.subr.bf16.mxu0 0
      %1788 = vmatpush1.bf16.msra.mxu0 0
      %1789 = vmatprep.subr.bf16.mxu0 0
      %1790 = vmatpush1.bf16.msra.mxu0 0
      %1791 = vmatprep.subr.bf16.mxu0 0
      %1792 = vmatpush1.bf16.msra.mxu0 %v1753
      %1793 = vmatprep.subr.bf16.mxu0 0
      %1794 = vmatpush1.bf16.msra.mxu0 %v1752
      %1795 = vmatprep.subr.bf16.mxu0 0
      %1796 = vmatpush1.bf16.msra.mxu0 %v1751
      %1797 = vmatprep.subr.bf16.mxu0 0
      %1798 = vmatpush1.bf16.msra.mxu0 %v1750
      %1799 = vmatprep.subr.bf16.mxu0 0
      %1800 = vmatpush2.bf16.msra.mxu0 0
      %1801 = vmatprep.subr.bf16.mxu0 0
      %1802 = vmatpush2.bf16.msra.mxu0 0
      %1803 = vmatprep.subr.bf16.mxu0 0
      %1804 = vmatpush2.bf16.msra.mxu0 0
      %1805 = vmatprep.subr.bf16.mxu0 0
      %1806 = vmatpush2.bf16.msra.mxu0 0
      %1807 = vmatprep.subr.bf16.mxu0 0
      %1808 = vmatpush2.bf16.msra.mxu0 0
      %1809 = vmatprep.subr.bf16.mxu0 0
      %1810 = vmatpush2.bf16.msra.mxu0 0
      %1811 = vmatprep.subr.bf16.mxu0 0
      %1812 = vmatpush2.bf16.msra.mxu0 0
      %1813 = vmatprep.subr.bf16.mxu0 0
      %1814 = vmatpush2.bf16.msra.mxu0 0
      %1815 = vmatprep.mubr.bf16.mxu0 0
      %1816 = vmatmul.mubr.bf16.gmra.mxu0 %v1760
      %v1817 = vpop.f32.mrf.mxu0
      %v1818 = vadd.f32 0.0, %v1817
      %v1819 = vpop.f32.mrf.mxu0
      %v1820 = vpop.f32.mrf.mxu0
      %v1821 = vadd.f32 0.0, %v1820
      %v1822 = vpop.f32.mrf.mxu0
      %1823 = vmatprep.mubr.bf16.mxu0 0
      %1824 = vmatmul.mubr.bf16.gmra.mxu0 %v1763
      %v1825 = vpop.f32.mrf.mxu0
      %v1826 = vadd.f32 0.0, %v1825
      %v1827 = vpop.f32.mrf.mxu0
      %v1828 = vpop.f32.mrf.mxu0
      %v1829 = vadd.f32 0.0, %v1828
      %v1830 = vpop.f32.mrf.mxu0
      %1831 = vmatprep.mubr.bf16.mxu0 0
      %1832 = vmatmul.mubr.bf16.gmra.mxu0 %v1766
      %v1833 = vpop.f32.mrf.mxu0
      %v1834 = vadd.f32 0.0, %v1833
      %v1835 = vpop.f32.mrf.mxu0
      %v1836 = vpop.f32.mrf.mxu0
      %v1837 = vadd.f32 0.0, %v1836
      %v1838 = vpop.f32.mrf.mxu0
      %1839 = vmatprep.mubr.bf16.mxu0 0
      %1840 = vmatmul.mubr.bf16.gmra.mxu0 %v1769
      %v1841 = vpop.f32.mrf.mxu0
      %v1842 = vadd.f32 0.0, %v1841
      %v1843 = vpop.f32.mrf.mxu0
      %v1844 = vpop.f32.mrf.mxu0
      %v1845 = vadd.f32 0.0, %v1844
      %v1846 = vpop.f32.mrf.mxu0
      %1847 = vmatprep.mubr.bf16.mxu0 0
      %1848 = vmatmul.mubr.bf16.gmra.mxu0 %v1772
      %v1849 = vpop.f32.mrf.mxu0
      %v1850 = vadd.f32 0.0, %v1849
      %v1851 = vpop.f32.mrf.mxu0
      %v1852 = vpop.f32.mrf.mxu0
      %v1853 = vadd.f32 0.0, %v1852
      %v1854 = vpop.f32.mrf.mxu0
      %1855 = vmatprep.mubr.bf16.mxu0 0
      %1856 = vmatmul.mubr.bf16.gmra.mxu0 %v1775
      %v1857 = vpop.f32.mrf.mxu0
      %v1858 = vadd.f32 0.0, %v1857
      %v1859 = vpop.f32.mrf.mxu0
      %v1860 = vpop.f32.mrf.mxu0
      %v1861 = vadd.f32 0.0, %v1860
      %v1862 = vpop.f32.mrf.mxu0
      %1863 = vmatprep.mubr.bf16.mxu0 0
      %1864 = vmatmul.mubr.bf16.gmra.mxu0 %v1778
      %v1865 = vpop.f32.mrf.mxu0
      %v1866 = vadd.f32 0.0, %v1865
      %v1867 = vpop.f32.mrf.mxu0
      %v1868 = vpop.f32.mrf.mxu0
      %v1869 = vadd.f32 0.0, %v1868
      %v1870 = vpop.f32.mrf.mxu0
      %1871 = vmatprep.mubr.bf16.mxu0 0
      %1872 = vmatmul.mubr.bf16.gmra.mxu0 %v1781
      %v1873 = vpop.f32.mrf.mxu0
      %v1874 = vadd.f32 0.0, %v1873
      %v1875 = vpop.f32.mrf.mxu0
      %v1876 = vpop.f32.mrf.mxu0
      %v1877 = vadd.f32 0.0, %v1876
      %v1878 = vpop.f32.mrf.mxu0
      %1879 = vdwg.mxu0
      %v1880 = vadd.f32 %v1405, %v1818
      %v1881 = vadd.f32 %v1406, %v1821
      %v1882 = vadd.f32 %v1407, %v1826
      %v1883 = vadd.f32 %v1408, %v1829
      %v1884 = vadd.f32 %v1409, %v1834
      %v1885 = vadd.f32 %v1410, %v1837
      %v1886 = vadd.f32 %v1411, %v1842
      %v1887 = vadd.f32 %v1412, %v1845
      %v1888 = vadd.f32 %v1413, %v1850
      %v1889 = vadd.f32 %v1414, %v1853
      %v1890 = vadd.f32 %v1415, %v1858
      %v1891 = vadd.f32 %v1416, %v1861
      %v1892 = vadd.f32 %v1417, %v1866
      %v1893 = vadd.f32 %v1418, %v1869
      %v1894 = vadd.f32 %v1419, %v1874
      %v1895 = vadd.f32 %v1420, %v1877
      %1896 = vst.msk [vmem:[%s560] sm:$0xff] %vm1003, %v1880
      %1897 = vst.msk [vmem:[%s560 + $0x8] sm:$0xff] %vm1003, %v1881
      %1898 = vst.msk [vmem:[%s560 + $0x10] sm:$0xff] %vm1003, %v1882
      %1899 = vst.msk [vmem:[%s560 + $0x18] sm:$0xff] %vm1003, %v1883
      %1900 = vst.msk [vmem:[%s560 + $0x20] sm:$0xff] %vm1003, %v1884
      %1901 = vst.msk [vmem:[%s560 + $0x28] sm:$0xff] %vm1003, %v1885
      %1902 = vst.msk [vmem:[%s560 + $0x30] sm:$0xff] %vm1003, %v1886
      %1903 = vst.msk [vmem:[%s560 + $0x38] sm:$0xff] %vm1003, %v1887
      %1904 = vst.msk [vmem:[%s560 + $0x40] sm:$0xff] %vm1003, %v1888
      %1905 = vst.msk [vmem:[%s560 + $0x48] sm:$0xff] %vm1003, %v1889
      %1906 = vst.msk [vmem:[%s560 + $0x50] sm:$0xff] %vm1003, %v1890
      %1907 = vst.msk [vmem:[%s560 + $0x58] sm:$0xff] %vm1003, %v1891
      %1908 = vst.msk [vmem:[%s560 + $0x60] sm:$0xff] %vm1003, %v1892
      %1909 = vst.msk [vmem:[%s560 + $0x68] sm:$0xff] %vm1003, %v1893
      %1910 = vst.msk [vmem:[%s560 + $0x70] sm:$0xff] %vm1003, %v1894
      %1911 = vst.msk [vmem:[%s560 + $0x78] sm:$0xff] %vm1003, %v1895
      %v1912 = vld [vmem:[%s5] sm:$0xff]
      %v1913 = vld [vmem:[%s5 + $0x8] sm:$0xff]
      %v1914 = vld [vmem:[%s5 + $0x10] sm:$0xff]
      %v1915 = vld [vmem:[%s5 + $0x18] sm:$0xff]
      %v1917 = vsel %vm1003, %v1221, 0
      %v1920 = vsel %vm1003, %v1222, 0
      %v1923 = vsel %vm1003, %v1223, 0
      %v1926 = vsel %vm1003, %v1224, 0
      %v1929 = vsel %vm1003, %v1225, 0
      %v1932 = vsel %vm1003, %v1226, 0
      %v1935 = vsel %vm1003, %v1227, 0
      %v1938 = vsel %vm1003, %v1228, 0
      %v1941 = vsel %vm1003, %v1229, 0
      %v1944 = vsel %vm1003, %v1230, 0
      %v1947 = vsel %vm1003, %v1231, 0
      %v1950 = vsel %vm1003, %v1232, 0
      %v1953 = vsel %vm1003, %v1233, 0
      %v1956 = vsel %vm1003, %v1234, 0
      %v1959 = vsel %vm1003, %v1235, 0
      %v1962 = vsel %vm1003, %v1236, 0
      %1964 = vmatprep.subr.mxu0 0.0
      %1965 = vmatpush1.msra.mxu0 0.0
      %1966 = vmatprep.subr.mxu0 0.0
      %1967 = vmatpush1.msra.mxu0 0.0
      %1968 = vmatprep.subr.mxu0 0.0
      %1969 = vmatpush1.msra.mxu0 0.0
      %1970 = vmatprep.subr.mxu0 0.0
      %1971 = vmatpush1.msra.mxu0 0.0
      %1972 = vmatprep.subr.mxu0 0.0
      %1973 = vmatpush1.msra.mxu0 0.0
      %1974 = vmatprep.subr.mxu0 0.0
      %1975 = vmatpush1.msra.mxu0 0.0
      %1976 = vmatprep.subr.mxu0 0.0
      %1977 = vmatpush1.msra.mxu0 0.0
      %1978 = vmatprep.subr.mxu0 0.0
      %1979 = vmatpush1.msra.mxu0 0.0
      %1980 = vmatprep.subr.mxu0 0.0
      %1981 = vmatpush1.msra.mxu0 0.0
      %1982 = vmatprep.subr.mxu0 0.0
      %1983 = vmatpush1.msra.mxu0 0.0
      %1984 = vmatprep.subr.mxu0 0.0
      %1985 = vmatpush1.msra.mxu0 0.0
      %1986 = vmatprep.subr.mxu0 0.0
      %1987 = vmatpush1.msra.mxu0 0.0
      %1988 = vmatprep.subr.mxu0 0.0
      %1989 = vmatpush1.msra.mxu0 %v1915
      %1990 = vmatprep.subr.mxu0 0.0
      %1991 = vmatpush1.msra.mxu0 %v1914
      %1992 = vmatprep.subr.mxu0 0.0
      %1993 = vmatpush1.msra.mxu0 %v1913
      %1994 = vmatprep.subr.mxu0 0.0
      %1995 = vmatpush1.msra.mxu0 %v1912
      %1996 = vmatprep.subr.mxu0 0.0
      %1997 = vmatpush2.msra.mxu0 0.0
      %1998 = vmatprep.subr.mxu0 0.0
      %1999 = vmatpush2.msra.mxu0 0.0
      %2000 = vmatprep.subr.mxu0 0.0
      %2001 = vmatpush2.msra.mxu0 0.0
      %2002 = vmatprep.subr.mxu0 0.0
      %2003 = vmatpush2.msra.mxu0 0.0
      %2004 = vmatprep.subr.mxu0 0.0
      %2005 = vmatpush2.msra.mxu0 0.0
      %2006 = vmatprep.subr.mxu0 0.0
      %2007 = vmatpush2.msra.mxu0 0.0
      %2008 = vmatprep.subr.mxu0 0.0
      %2009 = vmatpush2.msra.mxu0 0.0
      %2010 = vmatprep.subr.mxu0 0.0
      %2011 = vmatpush2.msra.mxu0 0.0
      %2012 = vmatprep.subr.mxu0 0.0
      %2013 = vmatpush2.msra.mxu0 0.0
      %2014 = vmatprep.subr.mxu0 0.0
      %2015 = vmatpush2.msra.mxu0 0.0
      %2016 = vmatprep.subr.mxu0 0.0
      %2017 = vmatpush2.msra.mxu0 0.0
      %2018 = vmatprep.subr.mxu0 0.0
      %2019 = vmatpush2.msra.mxu0 0.0
      %2020 = vmatprep.subr.mxu0 0.0
      %2021 = vmatpush2.msra.mxu0 0.0
      %2022 = vmatprep.subr.mxu0 0.0
      %2023 = vmatpush2.msra.mxu0 0.0
      %2024 = vmatprep.subr.mxu0 0.0
      %2025 = vmatpush2.msra.mxu0 0.0
      %2026 = vmatprep.subr.mxu0 0.0
      %2027 = vmatpush2.msra.mxu0 0.0
      %2028 = vmatprep.mubr.f32.mxu0 0.0
      %2029 = vmatmul.mubr.f32.gmra.mxu0 %v1917
      %v2030 = vpop.f32.mrf.mxu0
      %v2031 = vadd.f32 0.0, %v2030
      %v2032 = vpop.f32.mrf.mxu0
      %2033 = vmatprep.mubr.f32.mxu0 0.0
      %2034 = vmatmul.mubr.f32.gmra.mxu0 %v1920
      %v2035 = vpop.f32.mrf.mxu0
      %v2036 = vadd.f32 0.0, %v2035
      %v2037 = vpop.f32.mrf.mxu0
      %2038 = vmatprep.mubr.f32.mxu0 0.0
      %2039 = vmatmul.mubr.f32.gmra.mxu0 %v1923
      %v2040 = vpop.f32.mrf.mxu0
      %v2041 = vadd.f32 0.0, %v2040
      %v2042 = vpop.f32.mrf.mxu0
      %2043 = vmatprep.mubr.f32.mxu0 0.0
      %2044 = vmatmul.mubr.f32.gmra.mxu0 %v1926
      %v2045 = vpop.f32.mrf.mxu0
      %v2046 = vadd.f32 0.0, %v2045
      %v2047 = vpop.f32.mrf.mxu0
      %2048 = vmatprep.mubr.f32.mxu0 0.0
      %2049 = vmatmul.mubr.f32.gmra.mxu0 %v1929
      %v2050 = vpop.f32.mrf.mxu0
      %v2051 = vadd.f32 0.0, %v2050
      %v2052 = vpop.f32.mrf.mxu0
      %2053 = vmatprep.mubr.f32.mxu0 0.0
      %2054 = vmatmul.mubr.f32.gmra.mxu0 %v1932
      %v2055 = vpop.f32.mrf.mxu0
      %v2056 = vadd.f32 0.0, %v2055
      %v2057 = vpop.f32.mrf.mxu0
      %2058 = vmatprep.mubr.f32.mxu0 0.0
      %2059 = vmatmul.mubr.f32.gmra.mxu0 %v1935
      %v2060 = vpop.f32.mrf.mxu0
      %v2061 = vadd.f32 0.0, %v2060
      %v2062 = vpop.f32.mrf.mxu0
      %2063 = vmatprep.mubr.f32.mxu0 0.0
      %2064 = vmatmul.mubr.f32.gmra.mxu0 %v1938
      %v2065 = vpop.f32.mrf.mxu0
      %v2066 = vadd.f32 0.0, %v2065
      %v2067 = vpop.f32.mrf.mxu0
      %2068 = vmatprep.mubr.f32.mxu0 0.0
      %2069 = vmatmul.mubr.f32.gmra.mxu0 %v1941
      %v2070 = vpop.f32.mrf.mxu0
      %v2071 = vadd.f32 0.0, %v2070
      %v2072 = vpop.f32.mrf.mxu0
      %2073 = vmatprep.mubr.f32.mxu0 0.0
      %2074 = vmatmul.mubr.f32.gmra.mxu0 %v1944
      %v2075 = vpop.f32.mrf.mxu0
      %v2076 = vadd.f32 0.0, %v2075
      %v2077 = vpop.f32.mrf.mxu0
      %2078 = vmatprep.mubr.f32.mxu0 0.0
      %2079 = vmatmul.mubr.f32.gmra.mxu0 %v1947
      %v2080 = vpop.f32.mrf.mxu0
      %v2081 = vadd.f32 0.0, %v2080
      %v2082 = vpop.f32.mrf.mxu0
      %2083 = vmatprep.mubr.f32.mxu0 0.0
      %2084 = vmatmul.mubr.f32.gmra.mxu0 %v1950
      %v2085 = vpop.f32.mrf.mxu0
      %v2086 = vadd.f32 0.0, %v2085
      %v2087 = vpop.f32.mrf.mxu0
      %2088 = vmatprep.mubr.f32.mxu0 0.0
      %2089 = vmatmul.mubr.f32.gmra.mxu0 %v1953
      %v2090 = vpop.f32.mrf.mxu0
      %v2091 = vadd.f32 0.0, %v2090
      %v2092 = vpop.f32.mrf.mxu0
      %2093 = vmatprep.mubr.f32.mxu0 0.0
      %2094 = vmatmul.mubr.f32.gmra.mxu0 %v1956
      %v2095 = vpop.f32.mrf.mxu0
      %v2096 = vadd.f32 0.0, %v2095
      %v2097 = vpop.f32.mrf.mxu0
      %2098 = vmatprep.mubr.f32.mxu0 0.0
      %2099 = vmatmul.mubr.f32.gmra.mxu0 %v1959
      %v2100 = vpop.f32.mrf.mxu0
      %v2101 = vadd.f32 0.0, %v2100
      %v2102 = vpop.f32.mrf.mxu0
      %2103 = vmatprep.mubr.f32.mxu0 0.0
      %2104 = vmatmul.mubr.f32.gmra.mxu0 %v1962
      %v2105 = vpop.f32.mrf.mxu0
      %v2106 = vadd.f32 0.0, %v2105
      %v2107 = vpop.f32.mrf.mxu0
      %2108 = vdwg.mxu0
      %v2109 = vmax.f32 %v2031, -5.0
      %v2110 = vmax.f32 %v2036, -5.0
      %v2111 = vmax.f32 %v2041, -5.0
      %v2112 = vmax.f32 %v2046, -5.0
      %v2113 = vmax.f32 %v2051, -5.0
      %v2114 = vmax.f32 %v2056, -5.0
      %v2115 = vmax.f32 %v2061, -5.0
      %v2116 = vmax.f32 %v2066, -5.0
      %v2117 = vmax.f32 %v2071, -5.0
      %v2118 = vmax.f32 %v2076, -5.0
      %v2119 = vmax.f32 %v2081, -5.0
      %v2120 = vmax.f32 %v2086, -5.0
      %v2121 = vmax.f32 %v2091, -5.0
      %v2122 = vmax.f32 %v2096, -5.0
      %v2123 = vmax.f32 %v2101, -5.0
      %v2124 = vmax.f32 %v2106, -5.0
      %v2125 = vmin.f32 %v2109, 5.0
      %v2126 = vmin.f32 %v2110, 5.0
      %v2127 = vmin.f32 %v2111, 5.0
      %v2128 = vmin.f32 %v2112, 5.0
      %v2129 = vmin.f32 %v2113, 5.0
      %v2130 = vmin.f32 %v2114, 5.0
      %v2131 = vmin.f32 %v2115, 5.0
      %v2132 = vmin.f32 %v2116, 5.0
      %v2133 = vmin.f32 %v2117, 5.0
      %v2134 = vmin.f32 %v2118, 5.0
      %v2135 = vmin.f32 %v2119, 5.0
      %v2136 = vmin.f32 %v2120, 5.0
      %v2137 = vmin.f32 %v2121, 5.0
      %v2138 = vmin.f32 %v2122, 5.0
      %v2139 = vmin.f32 %v2123, 5.0
      %v2140 = vmin.f32 %v2124, 5.0
      %v2141 = vmul.f32 %v2125, 1.442695
      %v2142 = vpow.pop %v2141
      %v2143 = vmul.f32 %v2126, 1.442695
      %v2144 = vpow.pop %v2143
      %v2145 = vmul.f32 %v2127, 1.442695
      %v2146 = vpow.pop %v2145
      %v2147 = vmul.f32 %v2128, 1.442695
      %v2148 = vpow.pop %v2147
      %v2149 = vmul.f32 %v2129, 1.442695
      %v2150 = vpow.pop %v2149
      %v2151 = vmul.f32 %v2130, 1.442695
      %v2152 = vpow.pop %v2151
      %v2153 = vmul.f32 %v2131, 1.442695
      %v2154 = vpow.pop %v2153
      %v2155 = vmul.f32 %v2132, 1.442695
      %v2156 = vpow.pop %v2155
      %v2157 = vmul.f32 %v2133, 1.442695
      %v2158 = vpow.pop %v2157
      %v2159 = vmul.f32 %v2134, 1.442695
      %v2160 = vpow.pop %v2159
      %v2161 = vmul.f32 %v2135, 1.442695
      %v2162 = vpow.pop %v2161
      %v2163 = vmul.f32 %v2136, 1.442695
      %v2164 = vpow.pop %v2163
      %v2165 = vmul.f32 %v2137, 1.442695
      %v2166 = vpow.pop %v2165
      %v2167 = vmul.f32 %v2138, 1.442695
      %v2168 = vpow.pop %v2167
      %v2169 = vmul.f32 %v2139, 1.442695
      %v2170 = vpow.pop %v2169
      %v2171 = vmul.f32 %v2140, 1.442695
      %v2172 = vpow.pop %v2171
      %v2173 = vlaneseq
      %v2174 = vshrl.u32 %v2173, 7
      %v2175 = vadd.s32 %v2174, 8
      %v2176 = vadd.s32 %v2174, 16
      %v2177 = vadd.s32 %v2174, 24
      %v2178 = vadd.s32 %v2174, 32
      %v2179 = vadd.s32 %v2174, 40
      %v2180 = vadd.s32 %v2174, 48
      %v2181 = vadd.s32 %v2174, 56
      %v2182 = vadd.s32 %v2174, 64
      %v2183 = vadd.s32 %v2174, 72
      %v2184 = vadd.s32 %v2174, 80
      %v2185 = vadd.s32 %v2174, 88
      %v2186 = vadd.s32 %v2174, 96
      %v2187 = vadd.s32 %v2174, 104
      %v2188 = vadd.s32 %v2174, 112
      %v2189 = vadd.s32 %v2174, 120
      %v2190 = vstv %s900
      %v2191 = vadd.s32 %v2190, %v2174
      %v2192 = vadd.s32 %v2190, %v2175
      %v2193 = vadd.s32 %v2190, %v2176
      %v2194 = vadd.s32 %v2190, %v2177
      %v2195 = vadd.s32 %v2190, %v2178
      %v2196 = vadd.s32 %v2190, %v2179
      %v2197 = vadd.s32 %v2190, %v2180
      %v2198 = vadd.s32 %v2190, %v2181
      %v2199 = vadd.s32 %v2190, %v2182
      %v2200 = vadd.s32 %v2190, %v2183
      %v2201 = vadd.s32 %v2190, %v2184
      %v2202 = vadd.s32 %v2190, %v2185
      %v2203 = vadd.s32 %v2190, %v2186
      %v2204 = vadd.s32 %v2190, %v2187
      %v2205 = vadd.s32 %v2190, %v2188
      %v2206 = vadd.s32 %v2190, %v2189
      %vm2207 = vcmp.lt.s32.totalorder %v2191, 200
      %vm2208 = vcmp.lt.s32.totalorder %v2192, 200
      %vm2209 = vcmp.lt.s32.totalorder %v2193, 200
      %vm2210 = vcmp.lt.s32.totalorder %v2194, 200
      %vm2211 = vcmp.lt.s32.totalorder %v2195, 200
      %vm2212 = vcmp.lt.s32.totalorder %v2196, 200
      %vm2213 = vcmp.lt.s32.totalorder %v2197, 200
      %vm2214 = vcmp.lt.s32.totalorder %v2198, 200
      %vm2215 = vcmp.lt.s32.totalorder %v2199, 200
      %vm2216 = vcmp.lt.s32.totalorder %v2200, 200
      %vm2217 = vcmp.lt.s32.totalorder %v2201, 200
      %vm2218 = vcmp.lt.s32.totalorder %v2202, 200
      %vm2219 = vcmp.lt.s32.totalorder %v2203, 200
      %vm2220 = vcmp.lt.s32.totalorder %v2204, 200
      %vm2221 = vcmp.lt.s32.totalorder %v2205, 200
      %vm2222 = vcmp.lt.s32.totalorder %v2206, 200
      %v2223 = vsel %vm2207, 1, 0
      %v2224 = vsel %vm2208, 1, 0
      %v2225 = vsel %vm2209, 1, 0
      %v2226 = vsel %vm2210, 1, 0
      %v2227 = vsel %vm2211, 1, 0
      %v2228 = vsel %vm2212, 1, 0
      %v2229 = vsel %vm2213, 1, 0
      %v2230 = vsel %vm2214, 1, 0
      %v2231 = vsel %vm2215, 1, 0
      %v2232 = vsel %vm2216, 1, 0
      %v2233 = vsel %vm2217, 1, 0
      %v2234 = vsel %vm2218, 1, 0
      %v2235 = vsel %vm2219, 1, 0
      %v2236 = vsel %vm2220, 1, 0
      %v2237 = vsel %vm2221, 1, 0
      %v2238 = vsel %vm2222, 1, 0
      %v2239 = vcvt.s32.f32 %v2223
      %v2240 = vcvt.s32.f32 %v2224
      %v2241 = vcvt.s32.f32 %v2225
      %v2242 = vcvt.s32.f32 %v2226
      %v2243 = vcvt.s32.f32 %v2227
      %v2244 = vcvt.s32.f32 %v2228
      %v2245 = vcvt.s32.f32 %v2229
      %v2246 = vcvt.s32.f32 %v2230
      %v2247 = vcvt.s32.f32 %v2231
      %v2248 = vcvt.s32.f32 %v2232
      %v2249 = vcvt.s32.f32 %v2233
      %v2250 = vcvt.s32.f32 %v2234
      %v2251 = vcvt.s32.f32 %v2235
      %v2252 = vcvt.s32.f32 %v2236
      %v2253 = vcvt.s32.f32 %v2237
      %v2254 = vcvt.s32.f32 %v2238
      %v2255 = vmul.f32 %v2142, %v2239
      %v2256 = vmul.f32 %v2144, %v2240
      %v2257 = vmul.f32 %v2146, %v2241
      %v2258 = vmul.f32 %v2148, %v2242
      %v2259 = vmul.f32 %v2150, %v2243
      %v2260 = vmul.f32 %v2152, %v2244
      %v2261 = vmul.f32 %v2154, %v2245
      %v2262 = vmul.f32 %v2156, %v2246
      %v2263 = vmul.f32 %v2158, %v2247
      %v2264 = vmul.f32 %v2160, %v2248
      %v2265 = vmul.f32 %v2162, %v2249
      %v2266 = vmul.f32 %v2164, %v2250
      %v2267 = vmul.f32 %v2166, %v2251
      %v2268 = vmul.f32 %v2168, %v2252
      %v2269 = vmul.f32 %v2170, %v2253
      %v2270 = vmul.f32 %v2172, %v2254
      %v2271 = vld [vmem:[#allocation9] sm:$0xff]
      %v2272 = vld [vmem:[#allocation9 + $0x8] sm:$0xff]
      %v2273 = vld [vmem:[#allocation9 + $0x10] sm:$0xff]
      %v2274 = vld [vmem:[#allocation9 + $0x18] sm:$0xff]
      %v2275 = vld [vmem:[#allocation9 + $0x20] sm:$0xff]
      %v2276 = vld [vmem:[#allocation9 + $0x28] sm:$0xff]
      %v2277 = vld [vmem:[#allocation9 + $0x30] sm:$0xff]
      %v2278 = vld [vmem:[#allocation9 + $0x38] sm:$0xff]
      %v2279 = vld [vmem:[#allocation9 + $0x40] sm:$0xff]
      %v2280 = vld [vmem:[#allocation9 + $0x48] sm:$0xff]
      %v2281 = vld [vmem:[#allocation9 + $0x50] sm:$0xff]
      %v2282 = vld [vmem:[#allocation9 + $0x58] sm:$0xff]
      %v2283 = vld [vmem:[#allocation9 + $0x60] sm:$0xff]
      %v2284 = vld [vmem:[#allocation9 + $0x68] sm:$0xff]
      %v2285 = vld [vmem:[#allocation9 + $0x70] sm:$0xff]
      %v2286 = vld [vmem:[#allocation9 + $0x78] sm:$0xff]
      %v2287 = vmul.f32 %v2271, %v2255
      %v2288 = vmul.f32 %v2272, %v2256
      %v2289 = vmul.f32 %v2273, %v2257
      %v2290 = vmul.f32 %v2274, %v2258
      %v2291 = vmul.f32 %v2275, %v2259
      %v2292 = vmul.f32 %v2276, %v2260
      %v2293 = vmul.f32 %v2277, %v2261
      %v2294 = vmul.f32 %v2278, %v2262
      %v2295 = vmul.f32 %v2279, %v2263
      %v2296 = vmul.f32 %v2280, %v2264
      %v2297 = vmul.f32 %v2281, %v2265
      %v2298 = vmul.f32 %v2282, %v2266
      %v2299 = vmul.f32 %v2283, %v2267
      %v2300 = vmul.f32 %v2284, %v2268
      %v2301 = vmul.f32 %v2285, %v2269
      %v2302 = vmul.f32 %v2286, %v2270
      %2303 = vst.msk [vmem:[#allocation10] sm:$0xff] %vm1003, %v2287
      %2304 = vst.msk [vmem:[#allocation10 + $0x8] sm:$0xff] %vm1003, %v2288
      %2305 = vst.msk [vmem:[#allocation10 + $0x10] sm:$0xff] %vm1003, %v2289
      %2306 = vst.msk [vmem:[#allocation10 + $0x18] sm:$0xff] %vm1003, %v2290
      %2307 = vst.msk [vmem:[#allocation10 + $0x20] sm:$0xff] %vm1003, %v2291
      %2308 = vst.msk [vmem:[#allocation10 + $0x28] sm:$0xff] %vm1003, %v2292
      %2309 = vst.msk [vmem:[#allocation10 + $0x30] sm:$0xff] %vm1003, %v2293
      %2310 = vst.msk [vmem:[#allocation10 + $0x38] sm:$0xff] %vm1003, %v2294
      %2311 = vst.msk [vmem:[#allocation10 + $0x40] sm:$0xff] %vm1003, %v2295
      %2312 = vst.msk [vmem:[#allocation10 + $0x48] sm:$0xff] %vm1003, %v2296
      %2313 = vst.msk [vmem:[#allocation10 + $0x50] sm:$0xff] %vm1003, %v2297
      %2314 = vst.msk [vmem:[#allocation10 + $0x58] sm:$0xff] %vm1003, %v2298
      %2315 = vst.msk [vmem:[#allocation10 + $0x60] sm:$0xff] %vm1003, %v2299
      %2316 = vst.msk [vmem:[#allocation10 + $0x68] sm:$0xff] %vm1003, %v2300
      %2317 = vst.msk [vmem:[#allocation10 + $0x70] sm:$0xff] %vm1003, %v2301
      %2318 = vst.msk [vmem:[#allocation10 + $0x78] sm:$0xff] %vm1003, %v2302
      %2319 = vst.msk [vmem:[#allocation11] sm:$0xff] %vm1003, %v2255
      %2320 = vst.msk [vmem:[#allocation11 + $0x8] sm:$0xff] %vm1003, %v2256
      %2321 = vst.msk [vmem:[#allocation11 + $0x10] sm:$0xff] %vm1003, %v2257
      %2322 = vst.msk [vmem:[#allocation11 + $0x18] sm:$0xff] %vm1003, %v2258
      %2323 = vst.msk [vmem:[#allocation11 + $0x20] sm:$0xff] %vm1003, %v2259
      %2324 = vst.msk [vmem:[#allocation11 + $0x28] sm:$0xff] %vm1003, %v2260
      %2325 = vst.msk [vmem:[#allocation11 + $0x30] sm:$0xff] %vm1003, %v2261
      %2326 = vst.msk [vmem:[#allocation11 + $0x38] sm:$0xff] %vm1003, %v2262
      %2327 = vst.msk [vmem:[#allocation11 + $0x40] sm:$0xff] %vm1003, %v2263
      %2328 = vst.msk [vmem:[#allocation11 + $0x48] sm:$0xff] %vm1003, %v2264
      %2329 = vst.msk [vmem:[#allocation11 + $0x50] sm:$0xff] %vm1003, %v2265
      %2330 = vst.msk [vmem:[#allocation11 + $0x58] sm:$0xff] %vm1003, %v2266
      %2331 = vst.msk [vmem:[#allocation11 + $0x60] sm:$0xff] %vm1003, %v2267
      %2332 = vst.msk [vmem:[#allocation11 + $0x68] sm:$0xff] %vm1003, %v2268
      %2333 = vst.msk [vmem:[#allocation11 + $0x70] sm:$0xff] %vm1003, %v2269
      %2334 = vst.msk [vmem:[#allocation11 + $0x78] sm:$0xff] %vm1003, %v2270
      loop: start=0, step=1, limit=128
      $region96: #{tpu_custom_call.1} parent=83 // loop_pre_header
        _
      $region97: #{tpu_custom_call.1} parent=83 // loop_header
        %s2336 = sphi 0, %s2340
        %p2337 = scmp.ge.s32.totalorder %s2336, 128
      $region98: #{tpu_custom_call.1} parent=83 // loop_header_branch
        %2339 = sbr.rel (%p2337) target = $region102
      $region99: #{tpu_custom_call.1} parent=83 // loop_body
        %s2341 = sadd.s32 %s900, %s2336
        %s2342 = sld [smem:[#allocation14 + %s2341]]
        %s2343 = scalar_lea.vmem [#allocation5], %s2342
        %v2344 = vld [vmem:[%s2343] sm:$0x1]
        %s2345 = scalar_lea.vmem [#allocation10], %s2336
        %v2346 = vld [vmem:[%s2345] sm:$0x1]
        %v2347 = vadd.f32 %v2344, %v2346
        %vm2348 = vcmask 253952
        %2349 = vst.msk [vmem:[%s2343] sm:$0x1] %vm2348, %v2347
        %s2350 = scalar_lea.vmem [#allocation6], %s2342
        %v2351 = vld [vmem:[%s2350] sm:$0x1]
        %s2352 = scalar_lea.vmem [#allocation11], %s2336
        %v2353 = vld [vmem:[%s2352] sm:$0x1]
        %v2354 = vadd.f32 %v2351, %v2353
        %2355 = vst.msk [vmem:[%s2350] sm:$0x1] %vm2348, %v2354
      $region100: #{tpu_custom_call.1} parent=83 // loop_footer
        %s2340 = sadd.s32 1, %s2336
      $region101: #{tpu_custom_call.1} parent=83 // loop_footer_branch
        %2335 = sbr.rel target = $region97
      $region102: #{tpu_custom_call.1} parent=83 // loop_exit
        _
      %p2356 = scmp.eq.s32.totalorder %s41, 1
      // Predicated region
      $region103: #{tpu_custom_call.1} parent=83 // pred_check
        %p2357 = pneg %p2356
      $region104: #{tpu_custom_call.1} parent=83 // pred_check_branch
        %2359 = sbr.rel (%p2357) target = $region106
      $region105: #{tpu_custom_call.1} parent=83 // pred_region
        %v2360 = vld [vmem:[%s2] sm:$0xff]
        %v2361 = vld [vmem:[%s2 + $0x8] sm:$0xff]
        %v2362 = vld [vmem:[%s2 + $0x10] sm:$0xff]
        %v2363 = vld [vmem:[%s2 + $0x18] sm:$0xff]
        %v2364 = vld [vmem:[%s2 + $0x20] sm:$0xff]
        %v2365 = vld [vmem:[%s2 + $0x28] sm:$0xff]
        %v2366 = vld [vmem:[%s2 + $0x30] sm:$0xff]
        %v2367 = vld [vmem:[%s2 + $0x38] sm:$0xff]
        %v2368 = vld [vmem:[#allocation5] sm:$0xff]
        %v2369 = vld [vmem:[#allocation5 + $0x8] sm:$0xff]
        %v2370 = vld [vmem:[#allocation5 + $0x10] sm:$0xff]
        %v2371 = vld [vmem:[#allocation5 + $0x18] sm:$0xff]
        %v2372 = vld [vmem:[#allocation5 + $0x20] sm:$0xff]
        %v2373 = vld [vmem:[#allocation5 + $0x28] sm:$0xff]
        %v2374 = vld [vmem:[#allocation5 + $0x30] sm:$0xff]
        %v2375 = vld [vmem:[#allocation5 + $0x38] sm:$0xff]
        %v2376 = vld [vmem:[#allocation6] sm:$0xff]
        %v2377 = vld [vmem:[#allocation6 + $0x8] sm:$0xff]
        %v2378 = vld [vmem:[#allocation6 + $0x10] sm:$0xff]
        %v2379 = vld [vmem:[#allocation6 + $0x18] sm:$0xff]
        %v2380 = vld [vmem:[#allocation6 + $0x20] sm:$0xff]
        %v2381 = vld [vmem:[#allocation6 + $0x28] sm:$0xff]
        %v2382 = vld [vmem:[#allocation6 + $0x30] sm:$0xff]
        %v2383 = vld [vmem:[#allocation6 + $0x38] sm:$0xff]
        %v2384 = vadd.f32 %v2376, 1e-06
        %v2385 = vadd.f32 %v2377, 1e-06
        %v2386 = vadd.f32 %v2378, 1e-06
        %v2387 = vadd.f32 %v2379, 1e-06
        %v2388 = vadd.f32 %v2380, 1e-06
        %v2389 = vadd.f32 %v2381, 1e-06
        %v2390 = vadd.f32 %v2382, 1e-06
        %v2391 = vadd.f32 %v2383, 1e-06
        %v2392 = vrcp.pop %v2384
        %v2393 = vrcp.pop %v2385
        %v2394 = vrcp.pop %v2386
        %v2395 = vrcp.pop %v2387
        %v2396 = vrcp.pop %v2388
        %v2397 = vrcp.pop %v2389
        %v2398 = vrcp.pop %v2390
        %v2399 = vrcp.pop %v2391
        %v2400 = vmul.f32 %v2368, %v2392
        %v2401 = vmul.f32 %v2369, %v2393
        %v2402 = vmul.f32 %v2370, %v2394
        %v2403 = vmul.f32 %v2371, %v2395
        %v2404 = vmul.f32 %v2372, %v2396
        %v2405 = vmul.f32 %v2373, %v2397
        %v2406 = vmul.f32 %v2374, %v2398
        %v2407 = vmul.f32 %v2375, %v2399
        %v2408 = vpack.c.bf16 %v2401, %v2400
        %v2409 = vpack.c.bf16 %v2403, %v2402
        %v2410 = vpack.c.bf16 %v2405, %v2404
        %v2411 = vpack.c.bf16 %v2407, %v2406
        %v2412 = vld [vmem:[%s10] sm:$0xf]
        %v2413 = vld [vmem:[%s10 + $0x4] sm:$0xf]
        %v2414 = vld [vmem:[%s10 + $0x8] sm:$0xf]
        %v2415 = vld [vmem:[%s10 + $0xc] sm:$0xf]
        %v2420 = vunpack.c.l.b16 %v2412
        %v2421 = vunpack.c.l.b16 %v2413
        %v2422 = vunpack.c.l.b16 %v2414
        %v2423 = vunpack.c.l.b16 %v2415
        %v2424 = vpack.c.b16 %v2421, %v2420
        %v2425 = vpack.c.b16 %v2423, %v2422
        %v2429 = vsel %vm1003, %v2408, 0
        %v2432 = vsel %vm1003, %v2409, 0
        %v2435 = vsel %vm1003, %v2410, 0
        %v2438 = vsel %vm1003, %v2411, 0
        %2440 = vmatprep.subr.bf16.mxu0 0
        %2441 = vmatpush1.bf16.msra.mxu0 0
        %2442 = vmatprep.subr.bf16.mxu0 0
        %2443 = vmatpush1.bf16.msra.mxu0 0
        %2444 = vmatprep.subr.bf16.mxu0 0
        %2445 = vmatpush1.bf16.msra.mxu0 0
        %2446 = vmatprep.subr.bf16.mxu0 0
        %2447 = vmatpush1.bf16.msra.mxu0 0
        %2448 = vmatprep.subr.bf16.mxu0 0
        %2449 = vmatpush1.bf16.msra.mxu0 0
        %2450 = vmatprep.subr.bf16.mxu0 0
        %2451 = vmatpush1.bf16.msra.mxu0 0
        %2452 = vmatprep.subr.bf16.mxu0 0
        %2453 = vmatpush1.bf16.msra.mxu0 %v2425
        %2454 = vmatprep.subr.bf16.mxu0 0
        %2455 = vmatpush1.bf16.msra.mxu0 %v2424
        %2456 = vmatprep.subr.bf16.mxu0 0
        %2457 = vmatpush2.bf16.msra.mxu0 0
        %2458 = vmatprep.subr.bf16.mxu0 0
        %2459 = vmatpush2.bf16.msra.mxu0 0
        %2460 = vmatprep.subr.bf16.mxu0 0
        %2461 = vmatpush2.bf16.msra.mxu0 0
        %2462 = vmatprep.subr.bf16.mxu0 0
        %2463 = vmatpush2.bf16.msra.mxu0 0
        %2464 = vmatprep.subr.bf16.mxu0 0
        %2465 = vmatpush2.bf16.msra.mxu0 0
        %2466 = vmatprep.subr.bf16.mxu0 0
        %2467 = vmatpush2.bf16.msra.mxu0 0
        %2468 = vmatprep.subr.bf16.mxu0 0
        %2469 = vmatpush2.bf16.msra.mxu0 0
        %2470 = vmatprep.subr.bf16.mxu0 0
        %2471 = vmatpush2.bf16.msra.mxu0 0
        %2472 = vmatprep.mubr.bf16.mxu0 0
        %2473 = vmatmul.mubr.bf16.gmra.mxu0 %v2429
        %v2474 = vpop.f32.mrf.mxu0
        %v2475 = vadd.f32 0.0, %v2474
        %v2476 = vpop.f32.mrf.mxu0
        %v2477 = vpop.f32.mrf.mxu0
        %v2478 = vadd.f32 0.0, %v2477
        %v2479 = vpop.f32.mrf.mxu0
        %2480 = vmatprep.mubr.bf16.mxu0 0
        %2481 = vmatmul.mubr.bf16.gmra.mxu0 %v2432
        %v2482 = vpop.f32.mrf.mxu0
        %v2483 = vadd.f32 0.0, %v2482
        %v2484 = vpop.f32.mrf.mxu0
        %v2485 = vpop.f32.mrf.mxu0
        %v2486 = vadd.f32 0.0, %v2485
        %v2487 = vpop.f32.mrf.mxu0
        %2488 = vmatprep.mubr.bf16.mxu0 0
        %2489 = vmatmul.mubr.bf16.gmra.mxu0 %v2435
        %v2490 = vpop.f32.mrf.mxu0
        %v2491 = vadd.f32 0.0, %v2490
        %v2492 = vpop.f32.mrf.mxu0
        %v2493 = vpop.f32.mrf.mxu0
        %v2494 = vadd.f32 0.0, %v2493
        %v2495 = vpop.f32.mrf.mxu0
        %2496 = vmatprep.mubr.bf16.mxu0 0
        %2497 = vmatmul.mubr.bf16.gmra.mxu0 %v2438
        %v2498 = vpop.f32.mrf.mxu0
        %v2499 = vadd.f32 0.0, %v2498
        %v2500 = vpop.f32.mrf.mxu0
        %v2501 = vpop.f32.mrf.mxu0
        %v2502 = vadd.f32 0.0, %v2501
        %v2503 = vpop.f32.mrf.mxu0
        %2504 = vdwg.mxu0
        %v2505 = vadd.f32 %v2360, %v2475
        %v2506 = vadd.f32 %v2361, %v2478
        %v2507 = vadd.f32 %v2362, %v2483
        %v2508 = vadd.f32 %v2363, %v2486
        %v2509 = vadd.f32 %v2364, %v2491
        %v2510 = vadd.f32 %v2365, %v2494
        %v2511 = vadd.f32 %v2366, %v2499
        %v2512 = vadd.f32 %v2367, %v2502
        %v2513 = vld [vmem:[%s11] sm:$0x1]
        %v2515 = vlaneseq
        %v2516 = vshrl.u32 %v2515, 7
        %v2517 = vsub.s32 0, %v2516
        %v2518 = vrot.slane %v2513, %v2517
        %v2520 = vadd.f32 %v2505, %v2518
        %v2521 = vadd.f32 %v2506, %v2518
        %v2522 = vadd.f32 %v2507, %v2518
        %v2523 = vadd.f32 %v2508, %v2518
        %v2524 = vadd.f32 %v2509, %v2518
        %v2525 = vadd.f32 %v2510, %v2518
        %v2526 = vadd.f32 %v2511, %v2518
        %v2527 = vadd.f32 %v2512, %v2518
        %v2528 = vlaneseq
        %v2529 = vshrl.u32 %v2528, 7
        %v2530 = vsub.s32 4, %v2529
        %v2531 = vrot.slane %v563, %v2530
        %v2532 = vmul.f32 %v2520, %v2531
        %v2533 = vmul.f32 %v2521, %v2531
        %v2534 = vmul.f32 %v2522, %v2531
        %v2535 = vmul.f32 %v2523, %v2531
        %v2536 = vmul.f32 %v2524, %v2531
        %v2537 = vmul.f32 %v2525, %v2531
        %v2538 = vmul.f32 %v2526, %v2531
        %v2539 = vmul.f32 %v2527, %v2531
        %v2540 = vlaneseq
        %v2541 = vshrl.u32 %v2540, 7
        %v2542 = vsub.s32 5, %v2541
        %v2543 = vrot.slane %v563, %v2542
        %v2544 = vadd.f32 %v2532, %v2543
        %v2545 = vadd.f32 %v2533, %v2543
        %v2546 = vadd.f32 %v2534, %v2543
        %v2547 = vadd.f32 %v2535, %v2543
        %v2548 = vadd.f32 %v2536, %v2543
        %v2549 = vadd.f32 %v2537, %v2543
        %v2550 = vadd.f32 %v2538, %v2543
        %v2551 = vadd.f32 %v2539, %v2543
        %v2552 = vpack.c.bf16 %v2545, %v2544
        %v2553 = vpack.c.bf16 %v2547, %v2546
        %v2554 = vpack.c.bf16 %v2549, %v2548
        %v2555 = vpack.c.bf16 %v2551, %v2550
        %v2556 = vld [vmem:[%s14] sm:$0xf]
        %v2557 = vld [vmem:[%s14 + $0x4] sm:$0xf]
        %v2558 = vld [vmem:[%s14 + $0x8] sm:$0xf]
        %v2559 = vld [vmem:[%s14 + $0xc] sm:$0xf]
        %v2564 = vunpack.c.l.b16 %v2556
        %v2565 = vunpack.c.l.b16 %v2557
        %v2566 = vunpack.c.l.b16 %v2558
        %v2567 = vunpack.c.l.b16 %v2559
        %v2568 = vpack.c.b16 %v2565, %v2564
        %v2569 = vpack.c.b16 %v2567, %v2566
        %v2573 = vsel %vm1003, %v2552, 0
        %v2576 = vsel %vm1003, %v2553, 0
        %v2579 = vsel %vm1003, %v2554, 0
        %v2582 = vsel %vm1003, %v2555, 0
        %2584 = vmatprep.subr.bf16.mxu0 0
        %2585 = vmatpush1.bf16.msra.mxu0 0
        %2586 = vmatprep.subr.bf16.mxu0 0
        %2587 = vmatpush1.bf16.msra.mxu0 0
        %2588 = vmatprep.subr.bf16.mxu0 0
        %2589 = vmatpush1.bf16.msra.mxu0 0
        %2590 = vmatprep.subr.bf16.mxu0 0
        %2591 = vmatpush1.bf16.msra.mxu0 0
        %2592 = vmatprep.subr.bf16.mxu0 0
        %2593 = vmatpush1.bf16.msra.mxu0 0
        %2594 = vmatprep.subr.bf16.mxu0 0
        %2595 = vmatpush1.bf16.msra.mxu0 0
        %2596 = vmatprep.subr.bf16.mxu0 0
        %2597 = vmatpush1.bf16.msra.mxu0 %v2569
        %2598 = vmatprep.subr.bf16.mxu0 0
        %2599 = vmatpush1.bf16.msra.mxu0 %v2568
        %2600 = vmatprep.subr.bf16.mxu0 0
        %2601 = vmatpush2.bf16.msra.mxu0 0
        %2602 = vmatprep.subr.bf16.mxu0 0
        %2603 = vmatpush2.bf16.msra.mxu0 0
        %2604 = vmatprep.subr.bf16.mxu0 0
        %2605 = vmatpush2.bf16.msra.mxu0 0
        %2606 = vmatprep.subr.bf16.mxu0 0
        %2607 = vmatpush2.bf16.msra.mxu0 0
        %2608 = vmatprep.subr.bf16.mxu0 0
        %2609 = vmatpush2.bf16.msra.mxu0 0
        %2610 = vmatprep.subr.bf16.mxu0 0
        %2611 = vmatpush2.bf16.msra.mxu0 0
        %2612 = vmatprep.subr.bf16.mxu0 0
        %2613 = vmatpush2.bf16.msra.mxu0 0
        %2614 = vmatprep.subr.bf16.mxu0 0
        %2615 = vmatpush2.bf16.msra.mxu0 0
        %2616 = vmatprep.mubr.bf16.mxu0 0
        %2617 = vmatmul.mubr.bf16.gmra.mxu0 %v2573
        %v2618 = vpop.f32.mrf.mxu0
        %v2619 = vadd.f32 0.0, %v2618
        %v2620 = vpop.f32.mrf.mxu0
        %v2621 = vpop.f32.mrf.mxu0
        %v2622 = vadd.f32 0.0, %v2621
        %v2623 = vpop.f32.mrf.mxu0
        %2624 = vmatprep.mubr.bf16.mxu0 0
        %2625 = vmatmul.mubr.bf16.gmra.mxu0 %v2576
        %v2626 = vpop.f32.mrf.mxu0
        %v2627 = vadd.f32 0.0, %v2626
        %v2628 = vpop.f32.mrf.mxu0
        %v2629 = vpop.f32.mrf.mxu0
        %v2630 = vadd.f32 0.0, %v2629
        %v2631 = vpop.f32.mrf.mxu0
        %2632 = vmatprep.mubr.bf16.mxu0 0
        %2633 = vmatmul.mubr.bf16.gmra.mxu0 %v2579
        %v2634 = vpop.f32.mrf.mxu0
        %v2635 = vadd.f32 0.0, %v2634
        %v2636 = vpop.f32.mrf.mxu0
        %v2637 = vpop.f32.mrf.mxu0
        %v2638 = vadd.f32 0.0, %v2637
        %v2639 = vpop.f32.mrf.mxu0
        %2640 = vmatprep.mubr.bf16.mxu0 0
        %2641 = vmatmul.mubr.bf16.gmra.mxu0 %v2582
        %v2642 = vpop.f32.mrf.mxu0
        %v2643 = vadd.f32 0.0, %v2642
        %v2644 = vpop.f32.mrf.mxu0
        %v2645 = vpop.f32.mrf.mxu0
        %v2646 = vadd.f32 0.0, %v2645
        %v2647 = vpop.f32.mrf.mxu0
        %2648 = vdwg.mxu0
        %v2649 = vxor.u32 %v2619, 2147483648
        %v2650 = vxor.u32 %v2622, 2147483648
        %v2651 = vxor.u32 %v2627, 2147483648
        %v2652 = vxor.u32 %v2630, 2147483648
        %v2653 = vxor.u32 %v2635, 2147483648
        %v2654 = vxor.u32 %v2638, 2147483648
        %v2655 = vxor.u32 %v2643, 2147483648
        %v2656 = vxor.u32 %v2646, 2147483648
        %v2657 = vmul.f32 %v2649, 1.442695
        %v2658 = vpow.pop %v2657
        %v2659 = vmul.f32 %v2650, 1.442695
        %v2660 = vpow.pop %v2659
        %v2661 = vmul.f32 %v2651, 1.442695
        %v2662 = vpow.pop %v2661
        %v2663 = vmul.f32 %v2652, 1.442695
        %v2664 = vpow.pop %v2663
        %v2665 = vmul.f32 %v2653, 1.442695
        %v2666 = vpow.pop %v2665
        %v2667 = vmul.f32 %v2654, 1.442695
        %v2668 = vpow.pop %v2667
        %v2669 = vmul.f32 %v2655, 1.442695
        %v2670 = vpow.pop %v2669
        %v2671 = vmul.f32 %v2656, 1.442695
        %v2672 = vpow.pop %v2671
        %v2673 = vadd.f32 %v2658, 1.0
        %v2674 = vadd.f32 %v2660, 1.0
        %v2675 = vadd.f32 %v2662, 1.0
        %v2676 = vadd.f32 %v2664, 1.0
        %v2677 = vadd.f32 %v2666, 1.0
        %v2678 = vadd.f32 %v2668, 1.0
        %v2679 = vadd.f32 %v2670, 1.0
        %v2680 = vadd.f32 %v2672, 1.0
        %v2681 = vrcp.pop %v2673
        %v2682 = vmul.f32 1.0, %v2681
        %v2683 = vrcp.pop %v2674
        %v2684 = vmul.f32 1.0, %v2683
        %v2685 = vrcp.pop %v2675
        %v2686 = vmul.f32 1.0, %v2685
        %v2687 = vrcp.pop %v2676
        %v2688 = vmul.f32 1.0, %v2687
        %v2689 = vrcp.pop %v2677
        %v2690 = vmul.f32 1.0, %v2689
        %v2691 = vrcp.pop %v2678
        %v2692 = vmul.f32 1.0, %v2691
        %v2693 = vrcp.pop %v2679
        %v2694 = vmul.f32 1.0, %v2693
        %v2695 = vrcp.pop %v2680
        %v2696 = vmul.f32 1.0, %v2695
        %v2697 = vmul.f32 %v2619, %v2682
        %v2698 = vmul.f32 %v2622, %v2684
        %v2699 = vmul.f32 %v2627, %v2686
        %v2700 = vmul.f32 %v2630, %v2688
        %v2701 = vmul.f32 %v2635, %v2690
        %v2702 = vmul.f32 %v2638, %v2692
        %v2703 = vmul.f32 %v2643, %v2694
        %v2704 = vmul.f32 %v2646, %v2696
        %v2705 = vpack.c.bf16 %v2698, %v2697
        %v2706 = vpack.c.bf16 %v2700, %v2699
        %v2707 = vpack.c.bf16 %v2702, %v2701
        %v2708 = vpack.c.bf16 %v2704, %v2703
        %v2709 = vld [vmem:[%s15] sm:$0xf]
        %v2710 = vld [vmem:[%s15 + $0x4] sm:$0xf]
        %v2711 = vld [vmem:[%s15 + $0x8] sm:$0xf]
        %v2712 = vld [vmem:[%s15 + $0xc] sm:$0xf]
        %v2713 = vld [vmem:[%s15 + $0x10] sm:$0xf]
        %v2714 = vld [vmem:[%s15 + $0x14] sm:$0xf]
        %v2715 = vld [vmem:[%s15 + $0x18] sm:$0xf]
        %v2716 = vld [vmem:[%s15 + $0x1c] sm:$0xf]
        %v2725 = vunpack.c.l.b16 %v2709
        %v2726 = vunpack.c.l.b16 %v2710
        %v2727 = vunpack.c.l.b16 %v2711
        %v2728 = vunpack.c.l.b16 %v2712
        %v2729 = vunpack.c.l.b16 %v2713
        %v2730 = vunpack.c.l.b16 %v2714
        %v2731 = vunpack.c.l.b16 %v2715
        %v2732 = vunpack.c.l.b16 %v2716
        %v2733 = vpack.c.b16 %v2726, %v2725
        %v2734 = vpack.c.b16 %v2728, %v2727
        %v2735 = vpack.c.b16 %v2730, %v2729
        %v2736 = vpack.c.b16 %v2732, %v2731
        %v2742 = vsel %vm1758, %v2705, 0
        %v2745 = vsel %vm1758, %v2706, 0
        %v2748 = vsel %vm1758, %v2707, 0
        %v2751 = vsel %vm1758, %v2708, 0
        %2753 = vmatprep.subr.bf16.mxu0 0
        %2754 = vmatpush1.bf16.msra.mxu0 0
        %2755 = vmatprep.subr.bf16.mxu0 0
        %2756 = vmatpush1.bf16.msra.mxu0 0
        %2757 = vmatprep.subr.bf16.mxu0 0
        %2758 = vmatpush1.bf16.msra.mxu0 0
        %2759 = vmatprep.subr.bf16.mxu0 0
        %2760 = vmatpush1.bf16.msra.mxu0 0
        %2761 = vmatprep.subr.bf16.mxu0 0
        %2762 = vmatpush1.bf16.msra.mxu0 %v2736
        %2763 = vmatprep.subr.bf16.mxu0 0
        %2764 = vmatpush1.bf16.msra.mxu0 %v2735
        %2765 = vmatprep.subr.bf16.mxu0 0
        %2766 = vmatpush1.bf16.msra.mxu0 %v2734
        %2767 = vmatprep.subr.bf16.mxu0 0
        %2768 = vmatpush1.bf16.msra.mxu0 %v2733
        %2769 = vmatprep.subr.bf16.mxu0 0
        %2770 = vmatpush2.bf16.msra.mxu0 0
        %2771 = vmatprep.subr.bf16.mxu0 0
        %2772 = vmatpush2.bf16.msra.mxu0 0
        %2773 = vmatprep.subr.bf16.mxu0 0
        %2774 = vmatpush2.bf16.msra.mxu0 0
        %2775 = vmatprep.subr.bf16.mxu0 0
        %2776 = vmatpush2.bf16.msra.mxu0 0
        %2777 = vmatprep.subr.bf16.mxu0 0
        %2778 = vmatpush2.bf16.msra.mxu0 0
        %2779 = vmatprep.subr.bf16.mxu0 0
        %2780 = vmatpush2.bf16.msra.mxu0 0
        %2781 = vmatprep.subr.bf16.mxu0 0
        %2782 = vmatpush2.bf16.msra.mxu0 0
        %2783 = vmatprep.subr.bf16.mxu0 0
        %2784 = vmatpush2.bf16.msra.mxu0 0
        %2785 = vmatprep.mubr.bf16.mxu0 0
        %2786 = vmatmul.mubr.bf16.gmra.mxu0 %v2742
        %v2787 = vpop.f32.mrf.mxu0
        %v2788 = vadd.f32 0.0, %v2787
        %v2789 = vpop.f32.mrf.mxu0
        %v2790 = vpop.f32.mrf.mxu0
        %v2791 = vadd.f32 0.0, %v2790
        %v2792 = vpop.f32.mrf.mxu0
        %2793 = vmatprep.mubr.bf16.mxu0 0
        %2794 = vmatmul.mubr.bf16.gmra.mxu0 %v2745
        %v2795 = vpop.f32.mrf.mxu0
        %v2796 = vadd.f32 0.0, %v2795
        %v2797 = vpop.f32.mrf.mxu0
        %v2798 = vpop.f32.mrf.mxu0
        %v2799 = vadd.f32 0.0, %v2798
        %v2800 = vpop.f32.mrf.mxu0
        %2801 = vmatprep.mubr.bf16.mxu0 0
        %2802 = vmatmul.mubr.bf16.gmra.mxu0 %v2748
        %v2803 = vpop.f32.mrf.mxu0
        %v2804 = vadd.f32 0.0, %v2803
        %v2805 = vpop.f32.mrf.mxu0
        %v2806 = vpop.f32.mrf.mxu0
        %v2807 = vadd.f32 0.0, %v2806
        %v2808 = vpop.f32.mrf.mxu0
        %2809 = vmatprep.mubr.bf16.mxu0 0
        %2810 = vmatmul.mubr.bf16.gmra.mxu0 %v2751
        %v2811 = vpop.f32.mrf.mxu0
        %v2812 = vadd.f32 0.0, %v2811
        %v2813 = vpop.f32.mrf.mxu0
        %v2814 = vpop.f32.mrf.mxu0
        %v2815 = vadd.f32 0.0, %v2814
        %v2816 = vpop.f32.mrf.mxu0
        %2817 = vdwg.mxu0
        %v2818 = vadd.f32 %v2520, %v2788
        %v2819 = vadd.f32 %v2521, %v2791
        %v2820 = vadd.f32 %v2522, %v2796
        %v2821 = vadd.f32 %v2523, %v2799
        %v2822 = vadd.f32 %v2524, %v2804
        %v2823 = vadd.f32 %v2525, %v2807
        %v2824 = vadd.f32 %v2526, %v2812
        %v2825 = vadd.f32 %v2527, %v2815
        %2826 = vst.msk [vmem:[%s18] sm:$0xff] %vm1003, %v2818
        %2827 = vst.msk [vmem:[%s18 + $0x8] sm:$0xff] %vm1003, %v2819
        %2828 = vst.msk [vmem:[%s18 + $0x10] sm:$0xff] %vm1003, %v2820
        %2829 = vst.msk [vmem:[%s18 + $0x18] sm:$0xff] %vm1003, %v2821
        %2830 = vst.msk [vmem:[%s18 + $0x20] sm:$0xff] %vm1003, %v2822
        %2831 = vst.msk [vmem:[%s18 + $0x28] sm:$0xff] %vm1003, %v2823
        %2832 = vst.msk [vmem:[%s18 + $0x30] sm:$0xff] %vm1003, %v2824
        %2833 = vst.msk [vmem:[%s18 + $0x38] sm:$0xff] %vm1003, %v2825
      $region106: #{tpu_custom_call.1} parent=83 // pred_fallthru
        _
      %s2834 = smul.u32 16, %s41
      %p2835 = scmp.lt.s32.totalorder %s2834, 31
      %s2836 = scalar_select %p2835, %s2834, 31
      %s2837 = smul.addr %s2836, 8
      %s2838 = scalar_lea.vmem %s19, %s2837
      // Predicated region
      $region107: #{tpu_custom_call.1} parent=83 // pred_check
        %p2839 = pneg %p395
      $region108: #{tpu_custom_call.1} parent=83 // pred_check_branch
        %2841 = sbr.rel (%p2839) target = $region110
      $region109: #{tpu_custom_call.1} parent=83 // pred_region
        _
      $region110: #{tpu_custom_call.1} parent=83 // pred_fallthru
        _
      // Predicated region
      $region111: #{tpu_custom_call.1} parent=83 // pred_check
        %p2842 = pneg %p421
      $region112: #{tpu_custom_call.1} parent=83 // pred_check_branch
        %2844 = sbr.rel (%p2842) target = $region114
      $region113: #{tpu_custom_call.1} parent=83 // pred_region
        %s2845 = smul.u32 16, %s41
      $region114: #{tpu_custom_call.1} parent=83 // pred_fallthru
        _
      // Predicated region
      $region115: #{tpu_custom_call.1} parent=83 // pred_check
        %p2846 = pneg %p395
      $region116: #{tpu_custom_call.1} parent=83 // pred_check_branch
        %2848 = sbr.rel (%p2846) target = $region118
      $region117: #{tpu_custom_call.1} parent=83 // pred_region
        _
      $region118: #{tpu_custom_call.1} parent=83 // pred_fallthru
        _
    $region84: #{tpu_custom_call.1} parent=5 // pred_fallthru
      _
    %p2849 = scmp.le.s32.totalorder 2, %s36
    // Predicated region
    $region119: #{tpu_custom_call.1} parent=5 // pred_check
      %p2850 = pneg %p2849
    $region120: #{tpu_custom_call.1} parent=5 // pred_check_branch
      %2852 = sbr.rel (%p2850) target = $region122
    $region121: #{tpu_custom_call.1} parent=5 // pred_region
      %s2853 = ssub.s32 %s36, 2
      // Predicated region
      $region123: #{tpu_custom_call.1} parent=121 // pred_check
        %p2854 = pneg %p427
      $region124: #{tpu_custom_call.1} parent=121 // pred_check_branch
        %2856 = sbr.rel (%p2854) target = $region126
      $region125: #{tpu_custom_call.1} parent=121 // pred_region
        %s2857 = smul.u32 16, %s42
        %p2858 = scmp.lt.s32.totalorder %s2857, 31
        %s2859 = scalar_select %p2858, %s2857, 31
        %s2860 = smul.addr %s2859, 8
        %s2861 = scalar_lea.vmem %s19, %s2860
      $region126: #{tpu_custom_call.1} parent=121 // pred_fallthru
        _
    $region122: #{tpu_custom_call.1} parent=5 // pred_fallthru
      _
  $region6: #{tpu_custom_call.1} parent=0 // loop_footer
    %s40 = sadd.s32 1, %s36
  $region7: #{tpu_custom_call.1} parent=0 // loop_footer_branch
    %35 = sbr.rel target = $region3
  $region8: #{tpu_custom_call.1} parent=0 // loop_exit
    _

</llo_original>
